<compile_context>
chip_gen: v6e
topology: v6e:2x2x1
jax: 0.10.0
libtpu: 0.0.40
codegen_flags: <defaults>
</compile_context>

<pallas_src>
import math

import jax
import jax.numpy as jnp
from jax.experimental import pallas as pl
from jax.experimental.pallas import tpu as pltpu

LN_EPS = 1e-5          # nn.LayerNorm default eps
CONTRAST_EPS = 1e-4    # the "+ 0.0001" in the unit-energy normalization


# ----------------------------- shared math helpers ---------------------------
def _gelu(x):
    c = 0.7978845608028654  # sqrt(2/pi)
    return 0.5 * x * (1.0 + jnp.tanh(c * (x + 0.044715 * x * x * x)))


def _layernorm(x, gamma, beta):
    mu = jnp.mean(x, axis=-1, keepdims=True)
    xc = x - mu
    var = jnp.mean(xc * xc, axis=-1, keepdims=True)
    return xc * jax.lax.rsqrt(var + LN_EPS) * gamma + beta


def _contrast_norm(x):
    return x * jax.lax.rsqrt(jnp.sum(x * x, axis=-1, keepdims=True) + CONTRAST_EPS)


# ----------------------------- kernel ----------------------------------------
def encoder_kernel(x_ref, we_ref, be_ref, lnw_ref, lnb_ref,
                   wt1_ref, bt1_ref, wt2_ref, bt2_ref,
                   wf1_ref, bf1_ref, wf2_ref, bf2_ref,
                   hs_ref, last_ref):
    rows, _ = x_ref.shape                    # rows = samples_per_tile * num_patches
    num_layers, _, p = wt1_ref.shape         # (NL, PH, P)
    g = rows // p                            # (b, c) samples in this tile

    # ---- PatchEmbedding: Linear(patch_length -> d_model) + unit-energy normalize ----
    h = jnp.dot(x_ref[...], we_ref[...], preferred_element_type=jnp.float32)
    h = h + be_ref[...]                      # (1, D) sublane broadcast
    h = _contrast_norm(h)

    for layer in range(num_layers):          # static unroll (num_layers is small)
        ln_w = lnw_ref[layer]                # (2, D) -> row 0: patch-mix LN, row 1: feature-mix LN
        ln_b = lnb_ref[layer]
        w1 = wt1_ref[layer]                  # (PH, P)
        b1 = bt1_ref[layer]                  # (PH, 1)
        w2 = wt2_ref[layer]                  # (P, PH)
        b2 = bt2_ref[layer]                  # (P, 1)

        # ---- patch (token) mixing:  h += W2 @ gelu(W1 @ LN(h) + b1) + b2  (per sample) ----
        ln = _layernorm(h, ln_w[0:1, :], ln_b[0:1, :])
        parts = []
        for s in range(g):                   # small static unroll over samples in the tile
            ln_s = ln[s * p:(s + 1) * p, :]  # (P, D), sublane-tile aligned slice
            t = jnp.dot(w1, ln_s, preferred_element_type=jnp.float32) + b1
            t = _gelu(t)
            t = jnp.dot(w2, t, preferred_element_type=jnp.float32) + b2
            parts.append(t)
        h = h + jnp.concatenate(parts, axis=0)

        # ---- feature mixing over d_model (batched over the whole row tile) ----
        ln = _layernorm(h, ln_w[1:2, :], ln_b[1:2, :])
        f = jnp.dot(ln, wf1_ref[layer], preferred_element_type=jnp.float32) + bf1_ref[layer]
        f = _gelu(f)
        f = jnp.dot(f, wf2_ref[layer], preferred_element_type=jnp.float32) + bf2_ref[layer]
        h = h + f

        # ---- contrast normalization (PatchTSMixerContrastBlock) ----
        h = _contrast_norm(h)
        hs_ref[layer] = h

    last_ref[...] = h


# ----------------------------- host-side wrapper ------------------------------
def patch_mixer_contrast_encoder(x, params, *, bc_tile=None):
    """x: (B, C, num_patches, patch_length) -> (last_hidden (B,C,P,D), hidden_states (NL,B,C,P,D))."""
    B, C, P, Lp = x.shape
    BC = B * C
    if bc_tile is None:
        bc_tile = BC
    assert BC % bc_tile == 0, "bc_tile must divide B*C"

    D = params["w_embed"].shape[1]
    NL, PH, _ = params["w_tok1"].shape
    DH = params["w_feat1"].shape[2]

    rows_per_tile = bc_tile * P
    total_rows = BC * P
    grid = (BC // bc_tile,)

    x2 = x.reshape(total_rows, Lp).astype(jnp.float32)   # free reshape, lane-dense rows

    # advisory cost estimate for XLA's scheduler
    flops = 2 * total_rows * Lp * D + NL * 4 * total_rows * D * (PH + DH)
    transcendentals = NL * (BC * PH * D + total_rows * DH)
    param_bytes = sum(int(v.size) * 4 for v in params.values())
    bytes_accessed = total_rows * Lp * 4 + param_bytes + (NL + 1) * total_rows * D * 4

    hs_flat, last_flat = pl.pallas_call(
        encoder_kernel,
        out_shape=(jax.ShapeDtypeStruct((NL, total_rows, D), jnp.float32),
                   jax.ShapeDtypeStruct((total_rows, D), jnp.float32)),
        grid_spec=pltpu.PrefetchScalarGridSpec(
            num_scalar_prefetch=0,
            grid=grid,
            in_specs=[
                pl.BlockSpec((rows_per_tile, Lp), lambda i: (i, 0)),     # x rows
                pl.BlockSpec((Lp, D), lambda i: (0, 0)),                 # embed weight
                pl.BlockSpec((1, D), lambda i: (0, 0)),                  # embed bias
                pl.BlockSpec((NL, 2, D), lambda i: (0, 0, 0)),           # LN gammas
                pl.BlockSpec((NL, 2, D), lambda i: (0, 0, 0)),           # LN betas
                pl.BlockSpec((NL, PH, P), lambda i: (0, 0, 0)),          # patch-mix W1
                pl.BlockSpec((NL, PH, 1), lambda i: (0, 0, 0)),          # patch-mix b1 (column)
                pl.BlockSpec((NL, P, PH), lambda i: (0, 0, 0)),          # patch-mix W2
                pl.BlockSpec((NL, P, 1), lambda i: (0, 0, 0)),           # patch-mix b2 (column)
                pl.BlockSpec((NL, D, DH), lambda i: (0, 0, 0)),          # feature-mix W1
                pl.BlockSpec((NL, 1, DH), lambda i: (0, 0, 0)),          # feature-mix b1 (row)
                pl.BlockSpec((NL, DH, D), lambda i: (0, 0, 0)),          # feature-mix W2
                pl.BlockSpec((NL, 1, D), lambda i: (0, 0, 0)),           # feature-mix b2 (row)
            ],
            out_specs=(
                pl.BlockSpec((NL, rows_per_tile, D), lambda i: (0, i, 0)),
                pl.BlockSpec((rows_per_tile, D), lambda i: (i, 0)),
            ),
        ),
        compiler_params=pltpu.CompilerParams(
            dimension_semantics=("parallel",)),
        cost_estimate=pl.CostEstimate(flops=flops,
                                      transcendentals=transcendentals,
                                      bytes_accessed=bytes_accessed),
    )(x2, params["w_embed"], params["b_embed"], params["ln_w"], params["ln_b"],
      params["w_tok1"], params["b_tok1"], params["w_tok2"], params["b_tok2"],
      params["w_feat1"], params["b_feat1"], params["w_feat2"], params["b_feat2"])

    # row-major flatten means these reshapes are free (no transpose, no extra HBM pass)
    last_hidden = last_flat.reshape(B, C, P, D)
    hidden_states = hs_flat.reshape(NL, B, C, P, D)
    return last_hidden, hidden_states


# ----------------------------- parameter init & JAX reference -----------------
def init_params(key, *, patch_length, d_model, num_patches, num_layers, expansion):
    ph, dh = num_patches * expansion, d_model * expansion
    ks = jax.random.split(key, 10)

    def u(k, shape, fan_in):
        bound = 1.0 / math.sqrt(fan_in)
        return jax.random.uniform(k, shape, jnp.float32, -bound, bound)

    return dict(
        w_embed=u(ks[0], (patch_length, d_model), patch_length),
        b_embed=u(ks[1], (1, d_model), patch_length),
        ln_w=jnp.ones((num_layers, 2, d_model), jnp.float32),
        ln_b=jnp.zeros((num_layers, 2, d_model), jnp.float32),
        w_tok1=u(ks[2], (num_layers, ph, num_patches), num_patches),
        b_tok1=u(ks[3], (num_layers, ph, 1), num_patches),
        w_tok2=u(ks[4], (num_layers, num_patches, ph), ph),
        b_tok2=u(ks[5], (num_layers, num_patches, 1), ph),
        w_feat1=u(ks[6], (num_layers, d_model, dh), d_model),
        b_feat1=u(ks[7], (num_layers, 1, dh), d_model),
        w_feat2=u(ks[8], (num_layers, dh, d_model), dh),
        b_feat2=u(ks[9], (num_layers, 1, d_model), dh),
    )


def reference_forward(x, params):
    """Plain-JAX reference of the same forward pass (for correctness checking)."""
    nl = params["w_tok1"].shape[0]
    h = jnp.einsum("bcpl,ld->bcpd", x, params["w_embed"]) + params["b_embed"][0]
    h = _contrast_norm(h)
    hs = []
    for layer in range(nl):
        gamma, beta = params["ln_w"][layer], params["ln_b"][layer]
        ln = _layernorm(h, gamma[0], beta[0])
        t = jnp.einsum("hp,bcpd->bchd", params["w_tok1"][layer], ln) + params["b_tok1"][layer]
        t = _gelu(t)
        t = jnp.einsum("ph,bchd->bcpd", params["w_tok2"][layer], t) + params["b_tok2"][layer]
        h = h + t
        ln = _layernorm(h, gamma[1], beta[1])
        f = jnp.einsum("bcpd,de->bcpe", ln, params["w_feat1"][layer]) + params["b_feat1"][layer][0]
        f = _gelu(f)
        f = jnp.einsum("bcpe,ed->bcpd", f, params["w_feat2"][layer]) + params["b_feat2"][layer][0]
        h = h + f
        h = _contrast_norm(h)
        hs.append(h)
    return h, jnp.stack(hs, axis=0)


# ----------------------------- demo / self-check ------------------------------
if __name__ == "__main__":
    B, C, NUM_PATCHES, PATCH_LEN = 2, 4, 16, 16
    D_MODEL, NUM_LAYERS, EXPANSION = 32, 2, 2

    key = jax.random.PRNGKey(0)
    k_x, k_p = jax.random.split(key)
    x = jax.random.normal(k_x, (B, C, NUM_PATCHES, PATCH_LEN), dtype=jnp.float32)
    params = init_params(k_p, patch_length=PATCH_LEN, d_model=D_MODEL,
                         num_patches=NUM_PATCHES, num_layers=NUM_LAYERS,
                         expansion=EXPANSION)

    # bc_tile=4 -> grid=(2,) parallel steps (keeps both v7x TensorCores busy, large lane-dense tiles)
    last, hidden_states = patch_mixer_contrast_encoder(x, params, bc_tile=4)
    last, hidden_states = jax.block_until_ready((last, hidden_states))

    assert last.shape == (B, C, NUM_PATCHES, D_MODEL), last.shape
    assert hidden_states.shape == (NUM_LAYERS, B, C, NUM_PATCHES, D_MODEL), hidden_states.shape
    assert bool(jnp.all(jnp.isfinite(last))) and bool(jnp.all(jnp.isfinite(hidden_states)))
    assert bool(jnp.allclose(last, hidden_states[-1]))

    ref_last, ref_hs = reference_forward(x, params)
    assert bool(jnp.allclose(last, ref_last, atol=3e-2, rtol=3e-2))
    assert bool(jnp.allclose(hidden_states, ref_hs, atol=3e-2, rtol=3e-2))

    print("KERNEL_OK")
</pallas_src>

<mosaic_0001>
module attributes {stable_mosaic.version = 11 : i64} {
  func.func @encoder_kernel(%arg0: i32, %arg1: memref<64x16xf32, #tpu.memory_space<vmem>>, %arg2: memref<16x32xf32, #tpu.memory_space<vmem>>, %arg3: memref<1x32xf32, #tpu.memory_space<vmem>>, %arg4: memref<2x2x32xf32, #tpu.memory_space<vmem>>, %arg5: memref<2x2x32xf32, #tpu.memory_space<vmem>>, %arg6: memref<2x32x16xf32, #tpu.memory_space<vmem>>, %arg7: memref<2x32x1xf32, #tpu.memory_space<vmem>>, %arg8: memref<2x16x32xf32, #tpu.memory_space<vmem>>, %arg9: memref<2x16x1xf32, #tpu.memory_space<vmem>>, %arg10: memref<2x32x64xf32, #tpu.memory_space<vmem>>, %arg11: memref<2x1x64xf32, #tpu.memory_space<vmem>>, %arg12: memref<2x64x32xf32, #tpu.memory_space<vmem>>, %arg13: memref<2x1x32xf32, #tpu.memory_space<vmem>>, %arg14: memref<2x64x32xf32, #tpu.memory_space<vmem>>, %arg15: memref<64x32xf32, #tpu.memory_space<vmem>>) attributes {dimension_semantics = [#tpu.dimension_semantics<parallel>], iteration_bounds = array<i64: 2>, scalar_prefetch = 0 : i64, scratch_operands = 0 : i64, tpu.core_type = #tpu.core_type<tc>, window_params = [{transform_indices = @transform_0, window_bounds = array<i64: 64, 16>}, {pipeline_mode = #tpu.pipeline_mode<synchronous>, transform_indices = @transform_1, window_bounds = array<i64: 16, 32>}, {pipeline_mode = #tpu.pipeline_mode<synchronous>, transform_indices = @transform_2, window_bounds = array<i64: 1, 32>}, {pipeline_mode = #tpu.pipeline_mode<synchronous>, transform_indices = @transform_3, window_bounds = array<i64: 2, 2, 32>}, {pipeline_mode = #tpu.pipeline_mode<synchronous>, transform_indices = @transform_4, window_bounds = array<i64: 2, 2, 32>}, {pipeline_mode = #tpu.pipeline_mode<synchronous>, transform_indices = @transform_5, window_bounds = array<i64: 2, 32, 16>}, {pipeline_mode = #tpu.pipeline_mode<synchronous>, transform_indices = @transform_6, window_bounds = array<i64: 2, 32, 1>}, {pipeline_mode = #tpu.pipeline_mode<synchronous>, transform_indices = @transform_7, window_bounds = array<i64: 2, 16, 32>}, {pipeline_mode = #tpu.pipeline_mode<synchronous>, transform_indices = @transform_8, window_bounds = array<i64: 2, 16, 1>}, {pipeline_mode = #tpu.pipeline_mode<synchronous>, transform_indices = @transform_9, window_bounds = array<i64: 2, 32, 64>}, {pipeline_mode = #tpu.pipeline_mode<synchronous>, transform_indices = @transform_10, window_bounds = array<i64: 2, 1, 64>}, {pipeline_mode = #tpu.pipeline_mode<synchronous>, transform_indices = @transform_11, window_bounds = array<i64: 2, 64, 32>}, {pipeline_mode = #tpu.pipeline_mode<synchronous>, transform_indices = @transform_12, window_bounds = array<i64: 2, 1, 32>}, {transform_indices = @transform_13, window_bounds = array<i64: 2, 64, 32>}, {transform_indices = @transform_14, window_bounds = array<i64: 64, 32>}]} {
    %c0 = arith.constant 0 : index
    %c0_0 = arith.constant 0 : index
    %0 = vector.load %arg1[%c0, %c0_0] : memref<64x16xf32, #tpu.memory_space<vmem>>, vector<64x16xf32>
    %c0_1 = arith.constant 0 : index
    %c0_2 = arith.constant 0 : index
    %1 = vector.load %arg2[%c0_1, %c0_2] : memref<16x32xf32, #tpu.memory_space<vmem>>, vector<16x32xf32>
    %cst = arith.constant dense<0.000000e+00> : vector<64x32xf32>
    %2 = tpu.matmul %0, %1, %cst {dimension_numbers = #tpu.dot_dimension_numbers<[1], [0], [0], [1], [0, 0, 1, 1], [], []>} : vector<64x16xf32>, vector<16x32xf32>, vector<64x32xf32> -> vector<64x32xf32>
    %c0_3 = arith.constant 0 : index
    %c0_4 = arith.constant 0 : index
    %3 = vector.load %arg3[%c0_3, %c0_4] : memref<1x32xf32, #tpu.memory_space<vmem>>, vector<1x32xf32>
    %4 = vector.broadcast %3 : vector<1x32xf32> to vector<64x32xf32>
    %5 = arith.addf %2, %4 : vector<64x32xf32>
    %6 = arith.mulf %5, %5 : vector<64x32xf32>
    %cst_5 = arith.constant dense<0.000000e+00> : vector<64xf32>
    %7 = vector.multi_reduction <add>, %6, %cst_5 [1] : vector<64x32xf32> to vector<64xf32>
    %8 = vector.shape_cast %7 : vector<64xf32> to vector<64x1xf32>
    %cst_6 = arith.constant 9.99999974E-5 : f32
    %9 = vector.broadcast %cst_6 : f32 to vector<64x1xf32>
    %10 = arith.addf %8, %9 : vector<64x1xf32>
    %11 = math.rsqrt %10 : vector<64x1xf32>
    %12 = vector.broadcast %11 : vector<64x1xf32> to vector<64x32xf32>
    %13 = arith.mulf %5, %12 : vector<64x32xf32>
    %c0_7 = arith.constant 0 : index
    %c0_8 = arith.constant 0 : index
    %c0_9 = arith.constant 0 : index
    %14 = vector.load %arg4[%c0_7, %c0_8, %c0_9] : memref<2x2x32xf32, #tpu.memory_space<vmem>>, vector<1x2x32xf32>
    %15 = vector.shape_cast %14 : vector<1x2x32xf32> to vector<2x32xf32>
    %c0_10 = arith.constant 0 : index
    %c0_11 = arith.constant 0 : index
    %c0_12 = arith.constant 0 : index
    %16 = vector.load %arg5[%c0_10, %c0_11, %c0_12] : memref<2x2x32xf32, #tpu.memory_space<vmem>>, vector<1x2x32xf32>
    %17 = vector.shape_cast %16 : vector<1x2x32xf32> to vector<2x32xf32>
    %c0_13 = arith.constant 0 : index
    %c0_14 = arith.constant 0 : index
    %c0_15 = arith.constant 0 : index
    %18 = vector.load %arg6[%c0_13, %c0_14, %c0_15] : memref<2x32x16xf32, #tpu.memory_space<vmem>>, vector<1x32x16xf32>
    %19 = vector.shape_cast %18 : vector<1x32x16xf32> to vector<32x16xf32>
    %c0_16 = arith.constant 0 : index
    %c0_17 = arith.constant 0 : index
    %c0_18 = arith.constant 0 : index
    %20 = vector.load %arg7[%c0_16, %c0_17, %c0_18] : memref<2x32x1xf32, #tpu.memory_space<vmem>>, vector<1x32x1xf32>
    %21 = vector.shape_cast %20 : vector<1x32x1xf32> to vector<32x1xf32>
    %c0_19 = arith.constant 0 : index
    %c0_20 = arith.constant 0 : index
    %c0_21 = arith.constant 0 : index
    %22 = vector.load %arg8[%c0_19, %c0_20, %c0_21] : memref<2x16x32xf32, #tpu.memory_space<vmem>>, vector<1x16x32xf32>
    %23 = vector.shape_cast %22 : vector<1x16x32xf32> to vector<16x32xf32>
    %c0_22 = arith.constant 0 : index
    %c0_23 = arith.constant 0 : index
    %c0_24 = arith.constant 0 : index
    %24 = vector.load %arg9[%c0_22, %c0_23, %c0_24] : memref<2x16x1xf32, #tpu.memory_space<vmem>>, vector<1x16x1xf32>
    %25 = vector.shape_cast %24 : vector<1x16x1xf32> to vector<16x1xf32>
    %26 = vector.extract_strided_slice %15 {offsets = [0, 0], sizes = [1, 32], strides = [1, 1]} : vector<2x32xf32> to vector<1x32xf32>
    %27 = vector.extract_strided_slice %17 {offsets = [0, 0], sizes = [1, 32], strides = [1, 1]} : vector<2x32xf32> to vector<1x32xf32>
    %cst_25 = arith.constant dense<0.000000e+00> : vector<64xf32>
    %28 = vector.multi_reduction <add>, %13, %cst_25 [1] : vector<64x32xf32> to vector<64xf32>
    %29 = vector.shape_cast %28 : vector<64xf32> to vector<64x1xf32>
    %cst_26 = arith.constant 3.200000e+01 : f32
    %30 = vector.broadcast %cst_26 : f32 to vector<64x1xf32>
    %31 = arith.divf %29, %30 : vector<64x1xf32>
    %32 = vector.broadcast %31 : vector<64x1xf32> to vector<64x32xf32>
    %33 = arith.subf %13, %32 : vector<64x32xf32>
    %34 = arith.mulf %33, %33 : vector<64x32xf32>
    %cst_27 = arith.constant dense<0.000000e+00> : vector<64xf32>
    %35 = vector.multi_reduction <add>, %34, %cst_27 [1] : vector<64x32xf32> to vector<64xf32>
    %36 = vector.shape_cast %35 : vector<64xf32> to vector<64x1xf32>
    %cst_28 = arith.constant 3.200000e+01 : f32
    %37 = vector.broadcast %cst_28 : f32 to vector<64x1xf32>
    %38 = arith.divf %36, %37 : vector<64x1xf32>
    %cst_29 = arith.constant 9.99999974E-6 : f32
    %39 = vector.broadcast %cst_29 : f32 to vector<64x1xf32>
    %40 = arith.addf %38, %39 : vector<64x1xf32>
    %41 = math.rsqrt %40 : vector<64x1xf32>
    %42 = vector.broadcast %41 : vector<64x1xf32> to vector<64x32xf32>
    %43 = arith.mulf %33, %42 : vector<64x32xf32>
    %44 = vector.broadcast %26 : vector<1x32xf32> to vector<64x32xf32>
    %45 = arith.mulf %43, %44 : vector<64x32xf32>
    %46 = vector.broadcast %27 : vector<1x32xf32> to vector<64x32xf32>
    %47 = arith.addf %45, %46 : vector<64x32xf32>
    %48 = vector.extract_strided_slice %47 {offsets = [0, 0], sizes = [16, 32], strides = [1, 1]} : vector<64x32xf32> to vector<16x32xf32>
    %cst_30 = arith.constant dense<0.000000e+00> : vector<32x32xf32>
    %49 = tpu.matmul %19, %48, %cst_30 {dimension_numbers = #tpu.dot_dimension_numbers<[1], [0], [0], [1], [0, 0, 1, 1], [], []>} : vector<32x16xf32>, vector<16x32xf32>, vector<32x32xf32> -> vector<32x32xf32>
    %50 = vector.broadcast %21 : vector<32x1xf32> to vector<32x32xf32>
    %51 = arith.addf %49, %50 : vector<32x32xf32>
    %cst_31 = arith.constant 5.000000e-01 : f32
    %52 = vector.broadcast %cst_31 : f32 to vector<32x32xf32>
    %53 = arith.mulf %52, %51 : vector<32x32xf32>
    %cst_32 = arith.constant 4.471500e-02 : f32
    %54 = vector.broadcast %cst_32 : f32 to vector<32x32xf32>
    %55 = arith.mulf %54, %51 : vector<32x32xf32>
    %56 = arith.mulf %55, %51 : vector<32x32xf32>
    %57 = arith.mulf %56, %51 : vector<32x32xf32>
    %58 = arith.addf %51, %57 : vector<32x32xf32>
    %cst_33 = arith.constant 0.797884583 : f32
    %59 = vector.broadcast %cst_33 : f32 to vector<32x32xf32>
    %60 = arith.mulf %59, %58 : vector<32x32xf32>
    %61 = math.tanh %60 : vector<32x32xf32>
    %cst_34 = arith.constant 1.000000e+00 : f32
    %62 = vector.broadcast %cst_34 : f32 to vector<32x32xf32>
    %63 = arith.addf %62, %61 : vector<32x32xf32>
    %64 = arith.mulf %53, %63 : vector<32x32xf32>
    %cst_35 = arith.constant dense<0.000000e+00> : vector<16x32xf32>
    %65 = tpu.matmul %23, %64, %cst_35 {dimension_numbers = #tpu.dot_dimension_numbers<[1], [0], [0], [1], [0, 0, 1, 1], [], []>} : vector<16x32xf32>, vector<32x32xf32>, vector<16x32xf32> -> vector<16x32xf32>
    %66 = vector.broadcast %25 : vector<16x1xf32> to vector<16x32xf32>
    %67 = arith.addf %65, %66 : vector<16x32xf32>
    %68 = vector.extract_strided_slice %47 {offsets = [16, 0], sizes = [16, 32], strides = [1, 1]} : vector<64x32xf32> to vector<16x32xf32>
    %cst_36 = arith.constant dense<0.000000e+00> : vector<32x32xf32>
    %69 = tpu.matmul %19, %68, %cst_36 {dimension_numbers = #tpu.dot_dimension_numbers<[1], [0], [0], [1], [0, 0, 1, 1], [], []>} : vector<32x16xf32>, vector<16x32xf32>, vector<32x32xf32> -> vector<32x32xf32>
    %70 = vector.broadcast %21 : vector<32x1xf32> to vector<32x32xf32>
    %71 = arith.addf %69, %70 : vector<32x32xf32>
    %cst_37 = arith.constant 5.000000e-01 : f32
    %72 = vector.broadcast %cst_37 : f32 to vector<32x32xf32>
    %73 = arith.mulf %72, %71 : vector<32x32xf32>
    %cst_38 = arith.constant 4.471500e-02 : f32
    %74 = vector.broadcast %cst_38 : f32 to vector<32x32xf32>
    %75 = arith.mulf %74, %71 : vector<32x32xf32>
    %76 = arith.mulf %75, %71 : vector<32x32xf32>
    %77 = arith.mulf %76, %71 : vector<32x32xf32>
    %78 = arith.addf %71, %77 : vector<32x32xf32>
    %cst_39 = arith.constant 0.797884583 : f32
    %79 = vector.broadcast %cst_39 : f32 to vector<32x32xf32>
    %80 = arith.mulf %79, %78 : vector<32x32xf32>
    %81 = math.tanh %80 : vector<32x32xf32>
    %cst_40 = arith.constant 1.000000e+00 : f32
    %82 = vector.broadcast %cst_40 : f32 to vector<32x32xf32>
    %83 = arith.addf %82, %81 : vector<32x32xf32>
    %84 = arith.mulf %73, %83 : vector<32x32xf32>
    %cst_41 = arith.constant dense<0.000000e+00> : vector<16x32xf32>
    %85 = tpu.matmul %23, %84, %cst_41 {dimension_numbers = #tpu.dot_dimension_numbers<[1], [0], [0], [1], [0, 0, 1, 1], [], []>} : vector<16x32xf32>, vector<32x32xf32>, vector<16x32xf32> -> vector<16x32xf32>
    %86 = vector.broadcast %25 : vector<16x1xf32> to vector<16x32xf32>
    %87 = arith.addf %85, %86 : vector<16x32xf32>
    %88 = vector.extract_strided_slice %47 {offsets = [32, 0], sizes = [16, 32], strides = [1, 1]} : vector<64x32xf32> to vector<16x32xf32>
    %cst_42 = arith.constant dense<0.000000e+00> : vector<32x32xf32>
    %89 = tpu.matmul %19, %88, %cst_42 {dimension_numbers = #tpu.dot_dimension_numbers<[1], [0], [0], [1], [0, 0, 1, 1], [], []>} : vector<32x16xf32>, vector<16x32xf32>, vector<32x32xf32> -> vector<32x32xf32>
    %90 = vector.broadcast %21 : vector<32x1xf32> to vector<32x32xf32>
    %91 = arith.addf %89, %90 : vector<32x32xf32>
    %cst_43 = arith.constant 5.000000e-01 : f32
    %92 = vector.broadcast %cst_43 : f32 to vector<32x32xf32>
    %93 = arith.mulf %92, %91 : vector<32x32xf32>
    %cst_44 = arith.constant 4.471500e-02 : f32
    %94 = vector.broadcast %cst_44 : f32 to vector<32x32xf32>
    %95 = arith.mulf %94, %91 : vector<32x32xf32>
    %96 = arith.mulf %95, %91 : vector<32x32xf32>
    %97 = arith.mulf %96, %91 : vector<32x32xf32>
    %98 = arith.addf %91, %97 : vector<32x32xf32>
    %cst_45 = arith.constant 0.797884583 : f32
    %99 = vector.broadcast %cst_45 : f32 to vector<32x32xf32>
    %100 = arith.mulf %99, %98 : vector<32x32xf32>
    %101 = math.tanh %100 : vector<32x32xf32>
    %cst_46 = arith.constant 1.000000e+00 : f32
    %102 = vector.broadcast %cst_46 : f32 to vector<32x32xf32>
    %103 = arith.addf %102, %101 : vector<32x32xf32>
    %104 = arith.mulf %93, %103 : vector<32x32xf32>
    %cst_47 = arith.constant dense<0.000000e+00> : vector<16x32xf32>
    %105 = tpu.matmul %23, %104, %cst_47 {dimension_numbers = #tpu.dot_dimension_numbers<[1], [0], [0], [1], [0, 0, 1, 1], [], []>} : vector<16x32xf32>, vector<32x32xf32>, vector<16x32xf32> -> vector<16x32xf32>
    %106 = vector.broadcast %25 : vector<16x1xf32> to vector<16x32xf32>
    %107 = arith.addf %105, %106 : vector<16x32xf32>
    %108 = vector.extract_strided_slice %47 {offsets = [48, 0], sizes = [16, 32], strides = [1, 1]} : vector<64x32xf32> to vector<16x32xf32>
    %cst_48 = arith.constant dense<0.000000e+00> : vector<32x32xf32>
    %109 = tpu.matmul %19, %108, %cst_48 {dimension_numbers = #tpu.dot_dimension_numbers<[1], [0], [0], [1], [0, 0, 1, 1], [], []>} : vector<32x16xf32>, vector<16x32xf32>, vector<32x32xf32> -> vector<32x32xf32>
    %110 = vector.broadcast %21 : vector<32x1xf32> to vector<32x32xf32>
    %111 = arith.addf %109, %110 : vector<32x32xf32>
    %cst_49 = arith.constant 5.000000e-01 : f32
    %112 = vector.broadcast %cst_49 : f32 to vector<32x32xf32>
    %113 = arith.mulf %112, %111 : vector<32x32xf32>
    %cst_50 = arith.constant 4.471500e-02 : f32
    %114 = vector.broadcast %cst_50 : f32 to vector<32x32xf32>
    %115 = arith.mulf %114, %111 : vector<32x32xf32>
    %116 = arith.mulf %115, %111 : vector<32x32xf32>
    %117 = arith.mulf %116, %111 : vector<32x32xf32>
    %118 = arith.addf %111, %117 : vector<32x32xf32>
    %cst_51 = arith.constant 0.797884583 : f32
    %119 = vector.broadcast %cst_51 : f32 to vector<32x32xf32>
    %120 = arith.mulf %119, %118 : vector<32x32xf32>
    %121 = math.tanh %120 : vector<32x32xf32>
    %cst_52 = arith.constant 1.000000e+00 : f32
    %122 = vector.broadcast %cst_52 : f32 to vector<32x32xf32>
    %123 = arith.addf %122, %121 : vector<32x32xf32>
    %124 = arith.mulf %113, %123 : vector<32x32xf32>
    %cst_53 = arith.constant dense<0.000000e+00> : vector<16x32xf32>
    %125 = tpu.matmul %23, %124, %cst_53 {dimension_numbers = #tpu.dot_dimension_numbers<[1], [0], [0], [1], [0, 0, 1, 1], [], []>} : vector<16x32xf32>, vector<32x32xf32>, vector<16x32xf32> -> vector<16x32xf32>
    %126 = vector.broadcast %25 : vector<16x1xf32> to vector<16x32xf32>
    %127 = arith.addf %125, %126 : vector<16x32xf32>
    %128 = tpu.concatenate %67, %87, %107, %127 in 0 : vector<16x32xf32>, vector<16x32xf32>, vector<16x32xf32>, vector<16x32xf32> -> vector<64x32xf32>
    %129 = arith.addf %13, %128 : vector<64x32xf32>
    %130 = vector.extract_strided_slice %15 {offsets = [1, 0], sizes = [1, 32], strides = [1, 1]} : vector<2x32xf32> to vector<1x32xf32>
    %131 = vector.extract_strided_slice %17 {offsets = [1, 0], sizes = [1, 32], strides = [1, 1]} : vector<2x32xf32> to vector<1x32xf32>
    %cst_54 = arith.constant dense<0.000000e+00> : vector<64xf32>
    %132 = vector.multi_reduction <add>, %129, %cst_54 [1] : vector<64x32xf32> to vector<64xf32>
    %133 = vector.shape_cast %132 : vector<64xf32> to vector<64x1xf32>
    %cst_55 = arith.constant 3.200000e+01 : f32
    %134 = vector.broadcast %cst_55 : f32 to vector<64x1xf32>
    %135 = arith.divf %133, %134 : vector<64x1xf32>
    %136 = vector.broadcast %135 : vector<64x1xf32> to vector<64x32xf32>
    %137 = arith.subf %129, %136 : vector<64x32xf32>
    %138 = arith.mulf %137, %137 : vector<64x32xf32>
    %cst_56 = arith.constant dense<0.000000e+00> : vector<64xf32>
    %139 = vector.multi_reduction <add>, %138, %cst_56 [1] : vector<64x32xf32> to vector<64xf32>
    %140 = vector.shape_cast %139 : vector<64xf32> to vector<64x1xf32>
    %cst_57 = arith.constant 3.200000e+01 : f32
    %141 = vector.broadcast %cst_57 : f32 to vector<64x1xf32>
    %142 = arith.divf %140, %141 : vector<64x1xf32>
    %cst_58 = arith.constant 9.99999974E-6 : f32
    %143 = vector.broadcast %cst_58 : f32 to vector<64x1xf32>
    %144 = arith.addf %142, %143 : vector<64x1xf32>
    %145 = math.rsqrt %144 : vector<64x1xf32>
    %146 = vector.broadcast %145 : vector<64x1xf32> to vector<64x32xf32>
    %147 = arith.mulf %137, %146 : vector<64x32xf32>
    %148 = vector.broadcast %130 : vector<1x32xf32> to vector<64x32xf32>
    %149 = arith.mulf %147, %148 : vector<64x32xf32>
    %150 = vector.broadcast %131 : vector<1x32xf32> to vector<64x32xf32>
    %151 = arith.addf %149, %150 : vector<64x32xf32>
    %c0_59 = arith.constant 0 : index
    %c0_60 = arith.constant 0 : index
    %c0_61 = arith.constant 0 : index
    %152 = vector.load %arg10[%c0_59, %c0_60, %c0_61] : memref<2x32x64xf32, #tpu.memory_space<vmem>>, vector<1x32x64xf32>
    %153 = vector.shape_cast %152 : vector<1x32x64xf32> to vector<32x64xf32>
    %cst_62 = arith.constant dense<0.000000e+00> : vector<64x64xf32>
    %154 = tpu.matmul %151, %153, %cst_62 {dimension_numbers = #tpu.dot_dimension_numbers<[1], [0], [0], [1], [0, 0, 1, 1], [], []>} : vector<64x32xf32>, vector<32x64xf32>, vector<64x64xf32> -> vector<64x64xf32>
    %c0_63 = arith.constant 0 : index
    %c0_64 = arith.constant 0 : index
    %c0_65 = arith.constant 0 : index
    %155 = vector.load %arg11[%c0_63, %c0_64, %c0_65] : memref<2x1x64xf32, #tpu.memory_space<vmem>>, vector<1x1x64xf32>
    %156 = vector.shape_cast %155 : vector<1x1x64xf32> to vector<1x64xf32>
    %157 = vector.broadcast %156 : vector<1x64xf32> to vector<64x64xf32>
    %158 = arith.addf %154, %157 : vector<64x64xf32>
    %cst_66 = arith.constant 5.000000e-01 : f32
    %159 = vector.broadcast %cst_66 : f32 to vector<64x64xf32>
    %160 = arith.mulf %159, %158 : vector<64x64xf32>
    %cst_67 = arith.constant 4.471500e-02 : f32
    %161 = vector.broadcast %cst_67 : f32 to vector<64x64xf32>
    %162 = arith.mulf %161, %158 : vector<64x64xf32>
    %163 = arith.mulf %162, %158 : vector<64x64xf32>
    %164 = arith.mulf %163, %158 : vector<64x64xf32>
    %165 = arith.addf %158, %164 : vector<64x64xf32>
    %cst_68 = arith.constant 0.797884583 : f32
    %166 = vector.broadcast %cst_68 : f32 to vector<64x64xf32>
    %167 = arith.mulf %166, %165 : vector<64x64xf32>
    %168 = math.tanh %167 : vector<64x64xf32>
    %cst_69 = arith.constant 1.000000e+00 : f32
    %169 = vector.broadcast %cst_69 : f32 to vector<64x64xf32>
    %170 = arith.addf %169, %168 : vector<64x64xf32>
    %171 = arith.mulf %160, %170 : vector<64x64xf32>
    %c0_70 = arith.constant 0 : index
    %c0_71 = arith.constant 0 : index
    %c0_72 = arith.constant 0 : index
    %172 = vector.load %arg12[%c0_70, %c0_71, %c0_72] : memref<2x64x32xf32, #tpu.memory_space<vmem>>, vector<1x64x32xf32>
    %173 = vector.shape_cast %172 : vector<1x64x32xf32> to vector<64x32xf32>
    %cst_73 = arith.constant dense<0.000000e+00> : vector<64x32xf32>
    %174 = tpu.matmul %171, %173, %cst_73 {dimension_numbers = #tpu.dot_dimension_numbers<[1], [0], [0], [1], [0, 0, 1, 1], [], []>} : vector<64x64xf32>, vector<64x32xf32>, vector<64x32xf32> -> vector<64x32xf32>
    %c0_74 = arith.constant 0 : index
    %c0_75 = arith.constant 0 : index
    %c0_76 = arith.constant 0 : index
    %175 = vector.load %arg13[%c0_74, %c0_75, %c0_76] : memref<2x1x32xf32, #tpu.memory_space<vmem>>, vector<1x1x32xf32>
    %176 = vector.shape_cast %175 : vector<1x1x32xf32> to vector<1x32xf32>
    %177 = vector.broadcast %176 : vector<1x32xf32> to vector<64x32xf32>
    %178 = arith.addf %174, %177 : vector<64x32xf32>
    %179 = arith.addf %129, %178 : vector<64x32xf32>
    %180 = arith.mulf %179, %179 : vector<64x32xf32>
    %cst_77 = arith.constant dense<0.000000e+00> : vector<64xf32>
    %181 = vector.multi_reduction <add>, %180, %cst_77 [1] : vector<64x32xf32> to vector<64xf32>
    %182 = vector.shape_cast %181 : vector<64xf32> to vector<64x1xf32>
    %cst_78 = arith.constant 9.99999974E-5 : f32
    %183 = vector.broadcast %cst_78 : f32 to vector<64x1xf32>
    %184 = arith.addf %182, %183 : vector<64x1xf32>
    %185 = math.rsqrt %184 : vector<64x1xf32>
    %186 = vector.broadcast %185 : vector<64x1xf32> to vector<64x32xf32>
    %187 = arith.mulf %179, %186 : vector<64x32xf32>
    %c0_79 = arith.constant 0 : index
    %c0_80 = arith.constant 0 : index
    %c0_81 = arith.constant 0 : index
    %188 = vector.load %arg14[%c0_79, %c0_80, %c0_81] : memref<2x64x32xf32, #tpu.memory_space<vmem>>, vector<1x64x32xf32>
    %189 = vector.shape_cast %188 : vector<1x64x32xf32> to vector<64x32xf32>
    %190 = vector.shape_cast %187 : vector<64x32xf32> to vector<1x64x32xf32>
    tpu.vector_store %arg14[%c0_79, %c0_80, %c0_81], %190 {strides = array<i32>} : memref<2x64x32xf32, #tpu.memory_space<vmem>>, vector<1x64x32xf32>,
    %c1 = arith.constant 1 : index
    %c0_82 = arith.constant 0 : index
    %c0_83 = arith.constant 0 : index
    %191 = vector.load %arg4[%c1, %c0_82, %c0_83] : memref<2x2x32xf32, #tpu.memory_space<vmem>>, vector<1x2x32xf32>
    %192 = vector.shape_cast %191 : vector<1x2x32xf32> to vector<2x32xf32>
    %c1_84 = arith.constant 1 : index
    %c0_85 = arith.constant 0 : index
    %c0_86 = arith.constant 0 : index
    %193 = vector.load %arg5[%c1_84, %c0_85, %c0_86] : memref<2x2x32xf32, #tpu.memory_space<vmem>>, vector<1x2x32xf32>
    %194 = vector.shape_cast %193 : vector<1x2x32xf32> to vector<2x32xf32>
    %c1_87 = arith.constant 1 : index
    %c0_88 = arith.constant 0 : index
    %c0_89 = arith.constant 0 : index
    %195 = vector.load %arg6[%c1_87, %c0_88, %c0_89] : memref<2x32x16xf32, #tpu.memory_space<vmem>>, vector<1x32x16xf32>
    %196 = vector.shape_cast %195 : vector<1x32x16xf32> to vector<32x16xf32>
    %c1_90 = arith.constant 1 : index
    %c0_91 = arith.constant 0 : index
    %c0_92 = arith.constant 0 : index
    %197 = vector.load %arg7[%c1_90, %c0_91, %c0_92] : memref<2x32x1xf32, #tpu.memory_space<vmem>>, vector<1x32x1xf32>
    %198 = vector.shape_cast %197 : vector<1x32x1xf32> to vector<32x1xf32>
    %c1_93 = arith.constant 1 : index
    %c0_94 = arith.constant 0 : index
    %c0_95 = arith.constant 0 : index
    %199 = vector.load %arg8[%c1_93, %c0_94, %c0_95] : memref<2x16x32xf32, #tpu.memory_space<vmem>>, vector<1x16x32xf32>
    %200 = vector.shape_cast %199 : vector<1x16x32xf32> to vector<16x32xf32>
    %c1_96 = arith.constant 1 : index
    %c0_97 = arith.constant 0 : index
    %c0_98 = arith.constant 0 : index
    %201 = vector.load %arg9[%c1_96, %c0_97, %c0_98] : memref<2x16x1xf32, #tpu.memory_space<vmem>>, vector<1x16x1xf32>
    %202 = vector.shape_cast %201 : vector<1x16x1xf32> to vector<16x1xf32>
    %203 = vector.extract_strided_slice %192 {offsets = [0, 0], sizes = [1, 32], strides = [1, 1]} : vector<2x32xf32> to vector<1x32xf32>
    %204 = vector.extract_strided_slice %194 {offsets = [0, 0], sizes = [1, 32], strides = [1, 1]} : vector<2x32xf32> to vector<1x32xf32>
    %cst_99 = arith.constant dense<0.000000e+00> : vector<64xf32>
    %205 = vector.multi_reduction <add>, %187, %cst_99 [1] : vector<64x32xf32> to vector<64xf32>
    %206 = vector.shape_cast %205 : vector<64xf32> to vector<64x1xf32>
    %cst_100 = arith.constant 3.200000e+01 : f32
    %207 = vector.broadcast %cst_100 : f32 to vector<64x1xf32>
    %208 = arith.divf %206, %207 : vector<64x1xf32>
    %209 = vector.broadcast %208 : vector<64x1xf32> to vector<64x32xf32>
    %210 = arith.subf %187, %209 : vector<64x32xf32>
    %211 = arith.mulf %210, %210 : vector<64x32xf32>
    %cst_101 = arith.constant dense<0.000000e+00> : vector<64xf32>
    %212 = vector.multi_reduction <add>, %211, %cst_101 [1] : vector<64x32xf32> to vector<64xf32>
    %213 = vector.shape_cast %212 : vector<64xf32> to vector<64x1xf32>
    %cst_102 = arith.constant 3.200000e+01 : f32
    %214 = vector.broadcast %cst_102 : f32 to vector<64x1xf32>
    %215 = arith.divf %213, %214 : vector<64x1xf32>
    %cst_103 = arith.constant 9.99999974E-6 : f32
    %216 = vector.broadcast %cst_103 : f32 to vector<64x1xf32>
    %217 = arith.addf %215, %216 : vector<64x1xf32>
    %218 = math.rsqrt %217 : vector<64x1xf32>
    %219 = vector.broadcast %218 : vector<64x1xf32> to vector<64x32xf32>
    %220 = arith.mulf %210, %219 : vector<64x32xf32>
    %221 = vector.broadcast %203 : vector<1x32xf32> to vector<64x32xf32>
    %222 = arith.mulf %220, %221 : vector<64x32xf32>
    %223 = vector.broadcast %204 : vector<1x32xf32> to vector<64x32xf32>
    %224 = arith.addf %222, %223 : vector<64x32xf32>
    %225 = vector.extract_strided_slice %224 {offsets = [0, 0], sizes = [16, 32], strides = [1, 1]} : vector<64x32xf32> to vector<16x32xf32>
    %cst_104 = arith.constant dense<0.000000e+00> : vector<32x32xf32>
    %226 = tpu.matmul %196, %225, %cst_104 {dimension_numbers = #tpu.dot_dimension_numbers<[1], [0], [0], [1], [0, 0, 1, 1], [], []>} : vector<32x16xf32>, vector<16x32xf32>, vector<32x32xf32> -> vector<32x32xf32>
    %227 = vector.broadcast %198 : vector<32x1xf32> to vector<32x32xf32>
    %228 = arith.addf %226, %227 : vector<32x32xf32>
    %cst_105 = arith.constant 5.000000e-01 : f32
    %229 = vector.broadcast %cst_105 : f32 to vector<32x32xf32>
    %230 = arith.mulf %229, %228 : vector<32x32xf32>
    %cst_106 = arith.constant 4.471500e-02 : f32
    %231 = vector.broadcast %cst_106 : f32 to vector<32x32xf32>
    %232 = arith.mulf %231, %228 : vector<32x32xf32>
    %233 = arith.mulf %232, %228 : vector<32x32xf32>
    %234 = arith.mulf %233, %228 : vector<32x32xf32>
    %235 = arith.addf %228, %234 : vector<32x32xf32>
    %cst_107 = arith.constant 0.797884583 : f32
    %236 = vector.broadcast %cst_107 : f32 to vector<32x32xf32>
    %237 = arith.mulf %236, %235 : vector<32x32xf32>
    %238 = math.tanh %237 : vector<32x32xf32>
    %cst_108 = arith.constant 1.000000e+00 : f32
    %239 = vector.broadcast %cst_108 : f32 to vector<32x32xf32>
    %240 = arith.addf %239, %238 : vector<32x32xf32>
    %241 = arith.mulf %230, %240 : vector<32x32xf32>
    %cst_109 = arith.constant dense<0.000000e+00> : vector<16x32xf32>
    %242 = tpu.matmul %200, %241, %cst_109 {dimension_numbers = #tpu.dot_dimension_numbers<[1], [0], [0], [1], [0, 0, 1, 1], [], []>} : vector<16x32xf32>, vector<32x32xf32>, vector<16x32xf32> -> vector<16x32xf32>
    %243 = vector.broadcast %202 : vector<16x1xf32> to vector<16x32xf32>
    %244 = arith.addf %242, %243 : vector<16x32xf32>
    %245 = vector.extract_strided_slice %224 {offsets = [16, 0], sizes = [16, 32], strides = [1, 1]} : vector<64x32xf32> to vector<16x32xf32>
    %cst_110 = arith.constant dense<0.000000e+00> : vector<32x32xf32>
    %246 = tpu.matmul %196, %245, %cst_110 {dimension_numbers = #tpu.dot_dimension_numbers<[1], [0], [0], [1], [0, 0, 1, 1], [], []>} : vector<32x16xf32>, vector<16x32xf32>, vector<32x32xf32> -> vector<32x32xf32>
    %247 = vector.broadcast %198 : vector<32x1xf32> to vector<32x32xf32>
    %248 = arith.addf %246, %247 : vector<32x32xf32>
    %cst_111 = arith.constant 5.000000e-01 : f32
    %249 = vector.broadcast %cst_111 : f32 to vector<32x32xf32>
    %250 = arith.mulf %249, %248 : vector<32x32xf32>
    %cst_112 = arith.constant 4.471500e-02 : f32
    %251 = vector.broadcast %cst_112 : f32 to vector<32x32xf32>
    %252 = arith.mulf %251, %248 : vector<32x32xf32>
    %253 = arith.mulf %252, %248 : vector<32x32xf32>
    %254 = arith.mulf %253, %248 : vector<32x32xf32>
    %255 = arith.addf %248, %254 : vector<32x32xf32>
    %cst_113 = arith.constant 0.797884583 : f32
    %256 = vector.broadcast %cst_113 : f32 to vector<32x32xf32>
    %257 = arith.mulf %256, %255 : vector<32x32xf32>
    %258 = math.tanh %257 : vector<32x32xf32>
    %cst_114 = arith.constant 1.000000e+00 : f32
    %259 = vector.broadcast %cst_114 : f32 to vector<32x32xf32>
    %260 = arith.addf %259, %258 : vector<32x32xf32>
    %261 = arith.mulf %250, %260 : vector<32x32xf32>
    %cst_115 = arith.constant dense<0.000000e+00> : vector<16x32xf32>
    %262 = tpu.matmul %200, %261, %cst_115 {dimension_numbers = #tpu.dot_dimension_numbers<[1], [0], [0], [1], [0, 0, 1, 1], [], []>} : vector<16x32xf32>, vector<32x32xf32>, vector<16x32xf32> -> vector<16x32xf32>
    %263 = vector.broadcast %202 : vector<16x1xf32> to vector<16x32xf32>
    %264 = arith.addf %262, %263 : vector<16x32xf32>
    %265 = vector.extract_strided_slice %224 {offsets = [32, 0], sizes = [16, 32], strides = [1, 1]} : vector<64x32xf32> to vector<16x32xf32>
    %cst_116 = arith.constant dense<0.000000e+00> : vector<32x32xf32>
    %266 = tpu.matmul %196, %265, %cst_116 {dimension_numbers = #tpu.dot_dimension_numbers<[1], [0], [0], [1], [0, 0, 1, 1], [], []>} : vector<32x16xf32>, vector<16x32xf32>, vector<32x32xf32> -> vector<32x32xf32>
    %267 = vector.broadcast %198 : vector<32x1xf32> to vector<32x32xf32>
    %268 = arith.addf %266, %267 : vector<32x32xf32>
    %cst_117 = arith.constant 5.000000e-01 : f32
    %269 = vector.broadcast %cst_117 : f32 to vector<32x32xf32>
    %270 = arith.mulf %269, %268 : vector<32x32xf32>
    %cst_118 = arith.constant 4.471500e-02 : f32
    %271 = vector.broadcast %cst_118 : f32 to vector<32x32xf32>
    %272 = arith.mulf %271, %268 : vector<32x32xf32>
    %273 = arith.mulf %272, %268 : vector<32x32xf32>
    %274 = arith.mulf %273, %268 : vector<32x32xf32>
    %275 = arith.addf %268, %274 : vector<32x32xf32>
    %cst_119 = arith.constant 0.797884583 : f32
    %276 = vector.broadcast %cst_119 : f32 to vector<32x32xf32>
    %277 = arith.mulf %276, %275 : vector<32x32xf32>
    %278 = math.tanh %277 : vector<32x32xf32>
    %cst_120 = arith.constant 1.000000e+00 : f32
    %279 = vector.broadcast %cst_120 : f32 to vector<32x32xf32>
    %280 = arith.addf %279, %278 : vector<32x32xf32>
    %281 = arith.mulf %270, %280 : vector<32x32xf32>
    %cst_121 = arith.constant dense<0.000000e+00> : vector<16x32xf32>
    %282 = tpu.matmul %200, %281, %cst_121 {dimension_numbers = #tpu.dot_dimension_numbers<[1], [0], [0], [1], [0, 0, 1, 1], [], []>} : vector<16x32xf32>, vector<32x32xf32>, vector<16x32xf32> -> vector<16x32xf32>
    %283 = vector.broadcast %202 : vector<16x1xf32> to vector<16x32xf32>
    %284 = arith.addf %282, %283 : vector<16x32xf32>
    %285 = vector.extract_strided_slice %224 {offsets = [48, 0], sizes = [16, 32], strides = [1, 1]} : vector<64x32xf32> to vector<16x32xf32>
    %cst_122 = arith.constant dense<0.000000e+00> : vector<32x32xf32>
    %286 = tpu.matmul %196, %285, %cst_122 {dimension_numbers = #tpu.dot_dimension_numbers<[1], [0], [0], [1], [0, 0, 1, 1], [], []>} : vector<32x16xf32>, vector<16x32xf32>, vector<32x32xf32> -> vector<32x32xf32>
    %287 = vector.broadcast %198 : vector<32x1xf32> to vector<32x32xf32>
    %288 = arith.addf %286, %287 : vector<32x32xf32>
    %cst_123 = arith.constant 5.000000e-01 : f32
    %289 = vector.broadcast %cst_123 : f32 to vector<32x32xf32>
    %290 = arith.mulf %289, %288 : vector<32x32xf32>
    %cst_124 = arith.constant 4.471500e-02 : f32
    %291 = vector.broadcast %cst_124 : f32 to vector<32x32xf32>
    %292 = arith.mulf %291, %288 : vector<32x32xf32>
    %293 = arith.mulf %292, %288 : vector<32x32xf32>
    %294 = arith.mulf %293, %288 : vector<32x32xf32>
    %295 = arith.addf %288, %294 : vector<32x32xf32>
    %cst_125 = arith.constant 0.797884583 : f32
    %296 = vector.broadcast %cst_125 : f32 to vector<32x32xf32>
    %297 = arith.mulf %296, %295 : vector<32x32xf32>
    %298 = math.tanh %297 : vector<32x32xf32>
    %cst_126 = arith.constant 1.000000e+00 : f32
    %299 = vector.broadcast %cst_126 : f32 to vector<32x32xf32>
    %300 = arith.addf %299, %298 : vector<32x32xf32>
    %301 = arith.mulf %290, %300 : vector<32x32xf32>
    %cst_127 = arith.constant dense<0.000000e+00> : vector<16x32xf32>
    %302 = tpu.matmul %200, %301, %cst_127 {dimension_numbers = #tpu.dot_dimension_numbers<[1], [0], [0], [1], [0, 0, 1, 1], [], []>} : vector<16x32xf32>, vector<32x32xf32>, vector<16x32xf32> -> vector<16x32xf32>
    %303 = vector.broadcast %202 : vector<16x1xf32> to vector<16x32xf32>
    %304 = arith.addf %302, %303 : vector<16x32xf32>
    %305 = tpu.concatenate %244, %264, %284, %304 in 0 : vector<16x32xf32>, vector<16x32xf32>, vector<16x32xf32>, vector<16x32xf32> -> vector<64x32xf32>
    %306 = arith.addf %187, %305 : vector<64x32xf32>
    %307 = vector.extract_strided_slice %192 {offsets = [1, 0], sizes = [1, 32], strides = [1, 1]} : vector<2x32xf32> to vector<1x32xf32>
    %308 = vector.extract_strided_slice %194 {offsets = [1, 0], sizes = [1, 32], strides = [1, 1]} : vector<2x32xf32> to vector<1x32xf32>
    %cst_128 = arith.constant dense<0.000000e+00> : vector<64xf32>
    %309 = vector.multi_reduction <add>, %306, %cst_128 [1] : vector<64x32xf32> to vector<64xf32>
    %310 = vector.shape_cast %309 : vector<64xf32> to vector<64x1xf32>
    %cst_129 = arith.constant 3.200000e+01 : f32
    %311 = vector.broadcast %cst_129 : f32 to vector<64x1xf32>
    %312 = arith.divf %310, %311 : vector<64x1xf32>
    %313 = vector.broadcast %312 : vector<64x1xf32> to vector<64x32xf32>
    %314 = arith.subf %306, %313 : vector<64x32xf32>
    %315 = arith.mulf %314, %314 : vector<64x32xf32>
    %cst_130 = arith.constant dense<0.000000e+00> : vector<64xf32>
    %316 = vector.multi_reduction <add>, %315, %cst_130 [1] : vector<64x32xf32> to vector<64xf32>
    %317 = vector.shape_cast %316 : vector<64xf32> to vector<64x1xf32>
    %cst_131 = arith.constant 3.200000e+01 : f32
    %318 = vector.broadcast %cst_131 : f32 to vector<64x1xf32>
    %319 = arith.divf %317, %318 : vector<64x1xf32>
    %cst_132 = arith.constant 9.99999974E-6 : f32
    %320 = vector.broadcast %cst_132 : f32 to vector<64x1xf32>
    %321 = arith.addf %319, %320 : vector<64x1xf32>
    %322 = math.rsqrt %321 : vector<64x1xf32>
    %323 = vector.broadcast %322 : vector<64x1xf32> to vector<64x32xf32>
    %324 = arith.mulf %314, %323 : vector<64x32xf32>
    %325 = vector.broadcast %307 : vector<1x32xf32> to vector<64x32xf32>
    %326 = arith.mulf %324, %325 : vector<64x32xf32>
    %327 = vector.broadcast %308 : vector<1x32xf32> to vector<64x32xf32>
    %328 = arith.addf %326, %327 : vector<64x32xf32>
    %c1_133 = arith.constant 1 : index
    %c0_134 = arith.constant 0 : index
    %c0_135 = arith.constant 0 : index
    %329 = vector.load %arg10[%c1_133, %c0_134, %c0_135] : memref<2x32x64xf32, #tpu.memory_space<vmem>>, vector<1x32x64xf32>
    %330 = vector.shape_cast %329 : vector<1x32x64xf32> to vector<32x64xf32>
    %cst_136 = arith.constant dense<0.000000e+00> : vector<64x64xf32>
    %331 = tpu.matmul %328, %330, %cst_136 {dimension_numbers = #tpu.dot_dimension_numbers<[1], [0], [0], [1], [0, 0, 1, 1], [], []>} : vector<64x32xf32>, vector<32x64xf32>, vector<64x64xf32> -> vector<64x64xf32>
    %c1_137 = arith.constant 1 : index
    %c0_138 = arith.constant 0 : index
    %c0_139 = arith.constant 0 : index
    %332 = vector.load %arg11[%c1_137, %c0_138, %c0_139] : memref<2x1x64xf32, #tpu.memory_space<vmem>>, vector<1x1x64xf32>
    %333 = vector.shape_cast %332 : vector<1x1x64xf32> to vector<1x64xf32>
    %334 = vector.broadcast %333 : vector<1x64xf32> to vector<64x64xf32>
    %335 = arith.addf %331, %334 : vector<64x64xf32>
    %cst_140 = arith.constant 5.000000e-01 : f32
    %336 = vector.broadcast %cst_140 : f32 to vector<64x64xf32>
    %337 = arith.mulf %336, %335 : vector<64x64xf32>
    %cst_141 = arith.constant 4.471500e-02 : f32
    %338 = vector.broadcast %cst_141 : f32 to vector<64x64xf32>
    %339 = arith.mulf %338, %335 : vector<64x64xf32>
    %340 = arith.mulf %339, %335 : vector<64x64xf32>
    %341 = arith.mulf %340, %335 : vector<64x64xf32>
    %342 = arith.addf %335, %341 : vector<64x64xf32>
    %cst_142 = arith.constant 0.797884583 : f32
    %343 = vector.broadcast %cst_142 : f32 to vector<64x64xf32>
    %344 = arith.mulf %343, %342 : vector<64x64xf32>
    %345 = math.tanh %344 : vector<64x64xf32>
    %cst_143 = arith.constant 1.000000e+00 : f32
    %346 = vector.broadcast %cst_143 : f32 to vector<64x64xf32>
    %347 = arith.addf %346, %345 : vector<64x64xf32>
    %348 = arith.mulf %337, %347 : vector<64x64xf32>
    %c1_144 = arith.constant 1 : index
    %c0_145 = arith.constant 0 : index
    %c0_146 = arith.constant 0 : index
    %349 = vector.load %arg12[%c1_144, %c0_145, %c0_146] : memref<2x64x32xf32, #tpu.memory_space<vmem>>, vector<1x64x32xf32>
    %350 = vector.shape_cast %349 : vector<1x64x32xf32> to vector<64x32xf32>
    %cst_147 = arith.constant dense<0.000000e+00> : vector<64x32xf32>
    %351 = tpu.matmul %348, %350, %cst_147 {dimension_numbers = #tpu.dot_dimension_numbers<[1], [0], [0], [1], [0, 0, 1, 1], [], []>} : vector<64x64xf32>, vector<64x32xf32>, vector<64x32xf32> -> vector<64x32xf32>
    %c1_148 = arith.constant 1 : index
    %c0_149 = arith.constant 0 : index
    %c0_150 = arith.constant 0 : index
    %352 = vector.load %arg13[%c1_148, %c0_149, %c0_150] : memref<2x1x32xf32, #tpu.memory_space<vmem>>, vector<1x1x32xf32>
    %353 = vector.shape_cast %352 : vector<1x1x32xf32> to vector<1x32xf32>
    %354 = vector.broadcast %353 : vector<1x32xf32> to vector<64x32xf32>
    %355 = arith.addf %351, %354 : vector<64x32xf32>
    %356 = arith.addf %306, %355 : vector<64x32xf32>
    %357 = arith.mulf %356, %356 : vector<64x32xf32>
    %cst_151 = arith.constant dense<0.000000e+00> : vector<64xf32>
    %358 = vector.multi_reduction <add>, %357, %cst_151 [1] : vector<64x32xf32> to vector<64xf32>
    %359 = vector.shape_cast %358 : vector<64xf32> to vector<64x1xf32>
    %cst_152 = arith.constant 9.99999974E-5 : f32
    %360 = vector.broadcast %cst_152 : f32 to vector<64x1xf32>
    %361 = arith.addf %359, %360 : vector<64x1xf32>
    %362 = math.rsqrt %361 : vector<64x1xf32>
    %363 = vector.broadcast %362 : vector<64x1xf32> to vector<64x32xf32>
    %364 = arith.mulf %356, %363 : vector<64x32xf32>
    %c1_153 = arith.constant 1 : index
    %c0_154 = arith.constant 0 : index
    %c0_155 = arith.constant 0 : index
    %365 = vector.load %arg14[%c1_153, %c0_154, %c0_155] : memref<2x64x32xf32, #tpu.memory_space<vmem>>, vector<1x64x32xf32>
    %366 = vector.shape_cast %365 : vector<1x64x32xf32> to vector<64x32xf32>
    %367 = vector.shape_cast %364 : vector<64x32xf32> to vector<1x64x32xf32>
    tpu.vector_store %arg14[%c1_153, %c0_154, %c0_155], %367 {strides = array<i32>} : memref<2x64x32xf32, #tpu.memory_space<vmem>>, vector<1x64x32xf32>,
    %c0_156 = arith.constant 0 : index
    %c0_157 = arith.constant 0 : index
    %368 = vector.load %arg15[%c0_156, %c0_157] : memref<64x32xf32, #tpu.memory_space<vmem>>, vector<64x32xf32>
    tpu.vector_store %arg15[%c0_156, %c0_157], %364 {strides = array<i32>} : memref<64x32xf32, #tpu.memory_space<vmem>>, vector<64x32xf32>,
    return
  }
  func.func @transform_0(%arg0: i32) -> (i32, i32) {
    %c0_i32 = arith.constant 0 : i32
    %c0_i32_0 = arith.constant 0 : i32
    return %arg0, %c0_i32 : i32, i32
  }
  func.func @transform_1(%arg0: i32) -> (i32, i32) {
    %c0_i32 = arith.constant 0 : i32
    %c0_i32_0 = arith.constant 0 : i32
    %c0_i32_1 = arith.constant 0 : i32
    return %c0_i32, %c0_i32_0 : i32, i32
  }
  func.func @transform_2(%arg0: i32) -> (i32, i32) {
    %c0_i32 = arith.constant 0 : i32
    %c0_i32_0 = arith.constant 0 : i32
    %c0_i32_1 = arith.constant 0 : i32
    return %c0_i32, %c0_i32_0 : i32, i32
  }
  func.func @transform_3(%arg0: i32) -> (i32, i32, i32) {
    %c0_i32 = arith.constant 0 : i32
    %c0_i32_0 = arith.constant 0 : i32
    %c0_i32_1 = arith.constant 0 : i32
    %c0_i32_2 = arith.constant 0 : i32
    return %c0_i32, %c0_i32_0, %c0_i32_1 : i32, i32, i32
  }
  func.func @transform_4(%arg0: i32) -> (i32, i32, i32) {
    %c0_i32 = arith.constant 0 : i32
    %c0_i32_0 = arith.constant 0 : i32
    %c0_i32_1 = arith.constant 0 : i32
    %c0_i32_2 = arith.constant 0 : i32
    return %c0_i32, %c0_i32_0, %c0_i32_1 : i32, i32, i32
  }
  func.func @transform_5(%arg0: i32) -> (i32, i32, i32) {
    %c0_i32 = arith.constant 0 : i32
    %c0_i32_0 = arith.constant 0 : i32
    %c0_i32_1 = arith.constant 0 : i32
    %c0_i32_2 = arith.constant 0 : i32
    return %c0_i32, %c0_i32_0, %c0_i32_1 : i32, i32, i32
  }
  func.func @transform_6(%arg0: i32) -> (i32, i32, i32) {
    %c0_i32 = arith.constant 0 : i32
    %c0_i32_0 = arith.constant 0 : i32
    %c0_i32_1 = arith.constant 0 : i32
    %c0_i32_2 = arith.constant 0 : i32
    return %c0_i32, %c0_i32_0, %c0_i32_1 : i32, i32, i32
  }
  func.func @transform_7(%arg0: i32) -> (i32, i32, i32) {
    %c0_i32 = arith.constant 0 : i32
    %c0_i32_0 = arith.constant 0 : i32
    %c0_i32_1 = arith.constant 0 : i32
    %c0_i32_2 = arith.constant 0 : i32
    return %c0_i32, %c0_i32_0, %c0_i32_1 : i32, i32, i32
  }
  func.func @transform_8(%arg0: i32) -> (i32, i32, i32) {
    %c0_i32 = arith.constant 0 : i32
    %c0_i32_0 = arith.constant 0 : i32
    %c0_i32_1 = arith.constant 0 : i32
    %c0_i32_2 = arith.constant 0 : i32
    return %c0_i32, %c0_i32_0, %c0_i32_1 : i32, i32, i32
  }
  func.func @transform_9(%arg0: i32) -> (i32, i32, i32) {
    %c0_i32 = arith.constant 0 : i32
    %c0_i32_0 = arith.constant 0 : i32
    %c0_i32_1 = arith.constant 0 : i32
    %c0_i32_2 = arith.constant 0 : i32
    return %c0_i32, %c0_i32_0, %c0_i32_1 : i32, i32, i32
  }
  func.func @transform_10(%arg0: i32) -> (i32, i32, i32) {
    %c0_i32 = arith.constant 0 : i32
    %c0_i32_0 = arith.constant 0 : i32
    %c0_i32_1 = arith.constant 0 : i32
    %c0_i32_2 = arith.constant 0 : i32
    return %c0_i32, %c0_i32_0, %c0_i32_1 : i32, i32, i32
  }
  func.func @transform_11(%arg0: i32) -> (i32, i32, i32) {
    %c0_i32 = arith.constant 0 : i32
    %c0_i32_0 = arith.constant 0 : i32
    %c0_i32_1 = arith.constant 0 : i32
    %c0_i32_2 = arith.constant 0 : i32
    return %c0_i32, %c0_i32_0, %c0_i32_1 : i32, i32, i32
  }
  func.func @transform_12(%arg0: i32) -> (i32, i32, i32) {
    %c0_i32 = arith.constant 0 : i32
    %c0_i32_0 = arith.constant 0 : i32
    %c0_i32_1 = arith.constant 0 : i32
    %c0_i32_2 = arith.constant 0 : i32
    return %c0_i32, %c0_i32_0, %c0_i32_1 : i32, i32, i32
  }
  func.func @transform_13(%arg0: i32) -> (i32, i32, i32) {
    %c0_i32 = arith.constant 0 : i32
    %c0_i32_0 = arith.constant 0 : i32
    %c0_i32_1 = arith.constant 0 : i32
    return %c0_i32, %arg0, %c0_i32_0 : i32, i32, i32
  }
  func.func @transform_14(%arg0: i32) -> (i32, i32) {
    %c0_i32 = arith.constant 0 : i32
    %c0_i32_0 = arith.constant 0 : i32
    return %arg0, %c0_i32 : i32, i32
  }
}

</mosaic_0001>

<llo_original>
// kernel: tpu_custom_call.1
$region0: #{tpu_custom_call.1}
  #allocation0 [shape = 'u32[]', space=smem, size = 0x4, offset = 0x4, fixed_abs, tag = 'smem constant byte address 0x4 - core index']
  #allocation1 [shape = 'u32[144,128]{1,0:T(1,128)}', space=vmem, size = 0x12000, scoped, tag = 'internal scratch']
  %s0 = inlined_call_operand.vmem [shape: f32[128,16], index: 0, kind: input, shape index: {}]
  %s1 = inlined_call_operand.vmem [shape: f32[16,32], index: 1, kind: input, shape index: {}]
  %s2 = inlined_call_operand.vmem [shape: f32[1,32], index: 2, kind: input, shape index: {}]
  %s3 = inlined_call_operand.vmem [shape: f32[2,2,32], index: 3, kind: input, shape index: {}]
  %s4 = inlined_call_operand.vmem [shape: f32[2,2,32], index: 4, kind: input, shape index: {}]
  %s5 = inlined_call_operand.vmem [shape: f32[2,32,16], index: 5, kind: input, shape index: {}]
  %s6 = inlined_call_operand.vmem [shape: f32[2,32,1], index: 6, kind: input, shape index: {}]
  %s7 = inlined_call_operand.vmem [shape: f32[2,16,32], index: 7, kind: input, shape index: {}]
  %s8 = inlined_call_operand.vmem [shape: f32[2,16,1], index: 8, kind: input, shape index: {}]
  %s9 = inlined_call_operand.vmem [shape: f32[2,32,64], index: 9, kind: input, shape index: {}]
  %s10 = inlined_call_operand.vmem [shape: f32[2,1,64], index: 10, kind: input, shape index: {}]
  %s11 = inlined_call_operand.vmem [shape: f32[2,64,32], index: 11, kind: input, shape index: {}]
  %s12 = inlined_call_operand.vmem [shape: f32[2,1,32], index: 12, kind: input, shape index: {}]
  %s13 = inlined_call_operand.vmem [shape: f32[2,128,32], index: 13, kind: output, shape index: {0}]
  %s14 = inlined_call_operand.vmem [shape: f32[128,32], index: 14, kind: output, shape index: {1}]
  %15 = xla_tuple %s13, %s14
  %s16 = sld [smem:[#allocation0]]
  $region127: #{tpu_custom_call.1} parent=0
    _
  %s18 = ssub.s32 1, %s16
  %s19 = scalar_select 0, %s18, %s16
  $region1: #{tpu_custom_call.1} parent=0
    #allocation2 [shape = 'u8[131072]{0}', space=vmem, size = 0x20000, scoped, tag = 'output window, operand 0']
    loop: start=0, step=1, limit=4
    $region2: #{tpu_custom_call.1} parent=1 // loop_pre_header
      _
    $region3: #{tpu_custom_call.1} parent=1 // loop_header
      %s21 = sphi 0, %s25
      %p22 = scmp.ge.s32.totalorder %s21, 4
      %s31 = sphi 0, %s33
      %s34 = sphi 0, %s31
      %s35 = sphi 0, %s34
      %s51 = sphi 0, %s35
      %s55 = sphi 0, %s55
      %s57 = sphi 0, %s55
      %s58 = sphi 0, %s57
      %s72 = sphi 0, %s58
      %s76 = sphi 0, %s76
      %s78 = sphi 0, %s76
      %s79 = sphi 0, %s78
      %s93 = sphi 0, %s79
      %s97 = sphi 0, %s97
      %s99 = sphi 0, %s97
      %s100 = sphi 0, %s99
      %s114 = sphi 0, %s100
      %s118 = sphi 0, %s118
      %s120 = sphi 0, %s118
      %s121 = sphi 0, %s120
      %s135 = sphi 0, %s121
      %s139 = sphi 0, %s139
      %s141 = sphi 0, %s139
      %s142 = sphi 0, %s141
      %s156 = sphi 0, %s142
      %s160 = sphi 0, %s160
      %s162 = sphi 0, %s160
      %s163 = sphi 0, %s162
      %s177 = sphi 0, %s163
      %s181 = sphi 0, %s181
      %s183 = sphi 0, %s181
      %s184 = sphi 0, %s183
      %s198 = sphi 0, %s184
      %s202 = sphi 0, %s202
      %s204 = sphi 0, %s202
      %s205 = sphi 0, %s204
      %s219 = sphi 0, %s205
      %s223 = sphi 0, %s223
      %s225 = sphi 0, %s223
      %s226 = sphi 0, %s225
      %s240 = sphi 0, %s226
      %s244 = sphi 0, %s244
      %s246 = sphi 0, %s244
      %s247 = sphi 0, %s246
      %s261 = sphi 0, %s247
      %s265 = sphi 0, %s265
      %s267 = sphi 0, %s265
      %s268 = sphi 0, %s267
      %s282 = sphi 0, %s268
      %s286 = sphi 0, %s286
      %s288 = sphi 0, %s286
      %s289 = sphi 0, %s288
      %s303 = sphi 0, %s289
      %s309 = sphi 0, %s311
      %s312 = sphi 0, %s309
      %s313 = sphi 0, %s312
      %s329 = sphi 0, %s313
      %s335 = sphi 0, %s337
      %s338 = sphi 0, %s335
      %s339 = sphi 0, %s338
      %s355 = sphi 0, %s339
    $region4: #{tpu_custom_call.1} parent=1 // loop_header_branch
      %24 = sbr.rel (%p22) target = $region8
    $region5: #{tpu_custom_call.1} parent=1 // loop_body
      %s26 = ssub.s32 %s21, 1
      %s27 = ssub.s32 %s21, 2
      %s28 = sadd.s32 %s21, 1
      %s29 = ssub.s32 %s21, %s28
      %p30 = scmp.eq.s32.totalorder %s29, 0
      %s32 = sadd.s32 %s31, 1
      %s33 = scalar_select %p30, %s31, %s32
      %p36 = pneg %p30
      %p37 = scmp.eq.s32.totalorder %s21, 1
      %p38 = por %p36, %p37
      %p39 = scmp.ne.s32.totalorder %s31, %s34
      %p40 = scmp.eq.s32.totalorder %s21, 0
      %p41 = por %p39, %p40
      %p42 = scmp.ne.s32.totalorder %s31, %s34
      %p43 = scmp.eq.s32.totalorder %s26, 1
      %p44 = por %p42, %p43
      %p45 = scmp.ne.s32.totalorder %s34, %s35
      %p46 = scmp.eq.s32.totalorder %s26, 0
      %p47 = por %p45, %p46
      %p48 = scmp.ne.s32.totalorder %s34, %s35
      %p49 = scmp.eq.s32.totalorder %s27, 1
      %p50 = por %p48, %p49
      %p52 = scmp.ne.s32.totalorder %s35, %s51
      %p53 = scmp.eq.s32.totalorder %s27, 0
      %p54 = por %p52, %p53
      %s56 = sadd.s32 %s55, 1
      %p59 = scmp.eq.s32.totalorder %s21, 1
      %p60 = scmp.ne.s32.totalorder %s55, %s57
      %p61 = scmp.eq.s32.totalorder %s21, 0
      %p62 = por %p60, %p61
      %p63 = scmp.ne.s32.totalorder %s55, %s57
      %p64 = scmp.eq.s32.totalorder %s26, 1
      %p65 = por %p63, %p64
      %p66 = scmp.ne.s32.totalorder %s57, %s58
      %p67 = scmp.eq.s32.totalorder %s26, 0
      %p68 = por %p66, %p67
      %p69 = scmp.ne.s32.totalorder %s57, %s58
      %p70 = scmp.eq.s32.totalorder %s27, 1
      %p71 = por %p69, %p70
      %p73 = scmp.ne.s32.totalorder %s58, %s72
      %p74 = scmp.eq.s32.totalorder %s27, 0
      %p75 = por %p73, %p74
      %s77 = sadd.s32 %s76, 1
      %p80 = scmp.eq.s32.totalorder %s21, 1
      %p81 = scmp.ne.s32.totalorder %s76, %s78
      %p82 = scmp.eq.s32.totalorder %s21, 0
      %p83 = por %p81, %p82
      %p84 = scmp.ne.s32.totalorder %s76, %s78
      %p85 = scmp.eq.s32.totalorder %s26, 1
      %p86 = por %p84, %p85
      %p87 = scmp.ne.s32.totalorder %s78, %s79
      %p88 = scmp.eq.s32.totalorder %s26, 0
      %p89 = por %p87, %p88
      %p90 = scmp.ne.s32.totalorder %s78, %s79
      %p91 = scmp.eq.s32.totalorder %s27, 1
      %p92 = por %p90, %p91
      %p94 = scmp.ne.s32.totalorder %s79, %s93
      %p95 = scmp.eq.s32.totalorder %s27, 0
      %p96 = por %p94, %p95
      %s98 = sadd.s32 %s97, 1
      %p101 = scmp.eq.s32.totalorder %s21, 1
      %p102 = scmp.ne.s32.totalorder %s97, %s99
      %p103 = scmp.eq.s32.totalorder %s21, 0
      %p104 = por %p102, %p103
      %p105 = scmp.ne.s32.totalorder %s97, %s99
      %p106 = scmp.eq.s32.totalorder %s26, 1
      %p107 = por %p105, %p106
      %p108 = scmp.ne.s32.totalorder %s99, %s100
      %p109 = scmp.eq.s32.totalorder %s26, 0
      %p110 = por %p108, %p109
      %p111 = scmp.ne.s32.totalorder %s99, %s100
      %p112 = scmp.eq.s32.totalorder %s27, 1
      %p113 = por %p111, %p112
      %p115 = scmp.ne.s32.totalorder %s100, %s114
      %p116 = scmp.eq.s32.totalorder %s27, 0
      %p117 = por %p115, %p116
      %s119 = sadd.s32 %s118, 1
      %p122 = scmp.eq.s32.totalorder %s21, 1
      %p123 = scmp.ne.s32.totalorder %s118, %s120
      %p124 = scmp.eq.s32.totalorder %s21, 0
      %p125 = por %p123, %p124
      %p126 = scmp.ne.s32.totalorder %s118, %s120
      %p127 = scmp.eq.s32.totalorder %s26, 1
      %p128 = por %p126, %p127
      %p129 = scmp.ne.s32.totalorder %s120, %s121
      %p130 = scmp.eq.s32.totalorder %s26, 0
      %p131 = por %p129, %p130
      %p132 = scmp.ne.s32.totalorder %s120, %s121
      %p133 = scmp.eq.s32.totalorder %s27, 1
      %p134 = por %p132, %p133
      %p136 = scmp.ne.s32.totalorder %s121, %s135
      %p137 = scmp.eq.s32.totalorder %s27, 0
      %p138 = por %p136, %p137
      %s140 = sadd.s32 %s139, 1
      %p143 = scmp.eq.s32.totalorder %s21, 1
      %p144 = scmp.ne.s32.totalorder %s139, %s141
      %p145 = scmp.eq.s32.totalorder %s21, 0
      %p146 = por %p144, %p145
      %p147 = scmp.ne.s32.totalorder %s139, %s141
      %p148 = scmp.eq.s32.totalorder %s26, 1
      %p149 = por %p147, %p148
      %p150 = scmp.ne.s32.totalorder %s141, %s142
      %p151 = scmp.eq.s32.totalorder %s26, 0
      %p152 = por %p150, %p151
      %p153 = scmp.ne.s32.totalorder %s141, %s142
      %p154 = scmp.eq.s32.totalorder %s27, 1
      %p155 = por %p153, %p154
      %p157 = scmp.ne.s32.totalorder %s142, %s156
      %p158 = scmp.eq.s32.totalorder %s27, 0
      %p159 = por %p157, %p158
      %s161 = sadd.s32 %s160, 1
      %p164 = scmp.eq.s32.totalorder %s21, 1
      %p165 = scmp.ne.s32.totalorder %s160, %s162
      %p166 = scmp.eq.s32.totalorder %s21, 0
      %p167 = por %p165, %p166
      %p168 = scmp.ne.s32.totalorder %s160, %s162
      %p169 = scmp.eq.s32.totalorder %s26, 1
      %p170 = por %p168, %p169
      %p171 = scmp.ne.s32.totalorder %s162, %s163
      %p172 = scmp.eq.s32.totalorder %s26, 0
      %p173 = por %p171, %p172
      %p174 = scmp.ne.s32.totalorder %s162, %s163
      %p175 = scmp.eq.s32.totalorder %s27, 1
      %p176 = por %p174, %p175
      %p178 = scmp.ne.s32.totalorder %s163, %s177
      %p179 = scmp.eq.s32.totalorder %s27, 0
      %p180 = por %p178, %p179
      %s182 = sadd.s32 %s181, 1
      %p185 = scmp.eq.s32.totalorder %s21, 1
      %p186 = scmp.ne.s32.totalorder %s181, %s183
      %p187 = scmp.eq.s32.totalorder %s21, 0
      %p188 = por %p186, %p187
      %p189 = scmp.ne.s32.totalorder %s181, %s183
      %p190 = scmp.eq.s32.totalorder %s26, 1
      %p191 = por %p189, %p190
      %p192 = scmp.ne.s32.totalorder %s183, %s184
      %p193 = scmp.eq.s32.totalorder %s26, 0
      %p194 = por %p192, %p193
      %p195 = scmp.ne.s32.totalorder %s183, %s184
      %p196 = scmp.eq.s32.totalorder %s27, 1
      %p197 = por %p195, %p196
      %p199 = scmp.ne.s32.totalorder %s184, %s198
      %p200 = scmp.eq.s32.totalorder %s27, 0
      %p201 = por %p199, %p200
      %s203 = sadd.s32 %s202, 1
      %p206 = scmp.eq.s32.totalorder %s21, 1
      %p207 = scmp.ne.s32.totalorder %s202, %s204
      %p208 = scmp.eq.s32.totalorder %s21, 0
      %p209 = por %p207, %p208
      %p210 = scmp.ne.s32.totalorder %s202, %s204
      %p211 = scmp.eq.s32.totalorder %s26, 1
      %p212 = por %p210, %p211
      %p213 = scmp.ne.s32.totalorder %s204, %s205
      %p214 = scmp.eq.s32.totalorder %s26, 0
      %p215 = por %p213, %p214
      %p216 = scmp.ne.s32.totalorder %s204, %s205
      %p217 = scmp.eq.s32.totalorder %s27, 1
      %p218 = por %p216, %p217
      %p220 = scmp.ne.s32.totalorder %s205, %s219
      %p221 = scmp.eq.s32.totalorder %s27, 0
      %p222 = por %p220, %p221
      %s224 = sadd.s32 %s223, 1
      %p227 = scmp.eq.s32.totalorder %s21, 1
      %p228 = scmp.ne.s32.totalorder %s223, %s225
      %p229 = scmp.eq.s32.totalorder %s21, 0
      %p230 = por %p228, %p229
      %p231 = scmp.ne.s32.totalorder %s223, %s225
      %p232 = scmp.eq.s32.totalorder %s26, 1
      %p233 = por %p231, %p232
      %p234 = scmp.ne.s32.totalorder %s225, %s226
      %p235 = scmp.eq.s32.totalorder %s26, 0
      %p236 = por %p234, %p235
      %p237 = scmp.ne.s32.totalorder %s225, %s226
      %p238 = scmp.eq.s32.totalorder %s27, 1
      %p239 = por %p237, %p238
      %p241 = scmp.ne.s32.totalorder %s226, %s240
      %p242 = scmp.eq.s32.totalorder %s27, 0
      %p243 = por %p241, %p242
      %s245 = sadd.s32 %s244, 1
      %p248 = scmp.eq.s32.totalorder %s21, 1
      %p249 = scmp.ne.s32.totalorder %s244, %s246
      %p250 = scmp.eq.s32.totalorder %s21, 0
      %p251 = por %p249, %p250
      %p252 = scmp.ne.s32.totalorder %s244, %s246
      %p253 = scmp.eq.s32.totalorder %s26, 1
      %p254 = por %p252, %p253
      %p255 = scmp.ne.s32.totalorder %s246, %s247
      %p256 = scmp.eq.s32.totalorder %s26, 0
      %p257 = por %p255, %p256
      %p258 = scmp.ne.s32.totalorder %s246, %s247
      %p259 = scmp.eq.s32.totalorder %s27, 1
      %p260 = por %p258, %p259
      %p262 = scmp.ne.s32.totalorder %s247, %s261
      %p263 = scmp.eq.s32.totalorder %s27, 0
      %p264 = por %p262, %p263
      %s266 = sadd.s32 %s265, 1
      %p269 = scmp.eq.s32.totalorder %s21, 1
      %p270 = scmp.ne.s32.totalorder %s265, %s267
      %p271 = scmp.eq.s32.totalorder %s21, 0
      %p272 = por %p270, %p271
      %p273 = scmp.ne.s32.totalorder %s265, %s267
      %p274 = scmp.eq.s32.totalorder %s26, 1
      %p275 = por %p273, %p274
      %p276 = scmp.ne.s32.totalorder %s267, %s268
      %p277 = scmp.eq.s32.totalorder %s26, 0
      %p278 = por %p276, %p277
      %p279 = scmp.ne.s32.totalorder %s267, %s268
      %p280 = scmp.eq.s32.totalorder %s27, 1
      %p281 = por %p279, %p280
      %p283 = scmp.ne.s32.totalorder %s268, %s282
      %p284 = scmp.eq.s32.totalorder %s27, 0
      %p285 = por %p283, %p284
      %s287 = sadd.s32 %s286, 1
      %p290 = scmp.eq.s32.totalorder %s21, 1
      %p291 = scmp.ne.s32.totalorder %s286, %s288
      %p292 = scmp.eq.s32.totalorder %s21, 0
      %p293 = por %p291, %p292
      %p294 = scmp.ne.s32.totalorder %s286, %s288
      %p295 = scmp.eq.s32.totalorder %s26, 1
      %p296 = por %p294, %p295
      %p297 = scmp.ne.s32.totalorder %s288, %s289
      %p298 = scmp.eq.s32.totalorder %s26, 0
      %p299 = por %p297, %p298
      %p300 = scmp.ne.s32.totalorder %s288, %s289
      %p301 = scmp.eq.s32.totalorder %s27, 1
      %p302 = por %p300, %p301
      %p304 = scmp.ne.s32.totalorder %s289, %s303
      %p305 = scmp.eq.s32.totalorder %s27, 0
      %p306 = por %p304, %p305
      %s307 = ssub.s32 %s21, %s28
      %p308 = scmp.eq.s32.totalorder %s307, 0
      %s310 = sadd.s32 %s309, 1
      %s311 = scalar_select %p308, %s309, %s310
      %p314 = pneg %p308
      %p315 = scmp.eq.s32.totalorder %s21, 1
      %p316 = por %p314, %p315
      %p317 = scmp.ne.s32.totalorder %s309, %s312
      %p318 = scmp.eq.s32.totalorder %s21, 0
      %p319 = por %p317, %p318
      %p320 = scmp.ne.s32.totalorder %s309, %s312
      %p321 = scmp.eq.s32.totalorder %s26, 1
      %p322 = por %p320, %p321
      %p323 = scmp.ne.s32.totalorder %s312, %s313
      %p324 = scmp.eq.s32.totalorder %s26, 0
      %p325 = por %p323, %p324
      %p326 = scmp.ne.s32.totalorder %s312, %s313
      %p327 = scmp.eq.s32.totalorder %s27, 1
      %p328 = por %p326, %p327
      %p330 = scmp.ne.s32.totalorder %s313, %s329
      %p331 = scmp.eq.s32.totalorder %s27, 0
      %p332 = por %p330, %p331
      %s333 = ssub.s32 %s21, %s28
      %p334 = scmp.eq.s32.totalorder %s333, 0
      %s336 = sadd.s32 %s335, 1
      %s337 = scalar_select %p334, %s335, %s336
      %p340 = pneg %p334
      %p341 = scmp.eq.s32.totalorder %s21, 1
      %p342 = por %p340, %p341
      %p343 = scmp.ne.s32.totalorder %s335, %s338
      %p344 = scmp.eq.s32.totalorder %s21, 0
      %p345 = por %p343, %p344
      %p346 = scmp.ne.s32.totalorder %s335, %s338
      %p347 = scmp.eq.s32.totalorder %s26, 1
      %p348 = por %p346, %p347
      %p349 = scmp.ne.s32.totalorder %s338, %s339
      %p350 = scmp.eq.s32.totalorder %s26, 0
      %p351 = por %p349, %p350
      %p352 = scmp.ne.s32.totalorder %s338, %s339
      %p353 = scmp.eq.s32.totalorder %s27, 1
      %p354 = por %p352, %p353
      %p356 = scmp.ne.s32.totalorder %s339, %s355
      %p357 = scmp.eq.s32.totalorder %s27, 0
      %p358 = por %p356, %p357
      %p359 = scmp.le.s32.totalorder 1, %s21
      %p360 = scmp.lt.s32.totalorder %s21, 3
      %p361 = pnand %p359, %p360
      %p362 = pneg %p361
      // Predicated region
      $region9: #{tpu_custom_call.1} parent=5 // pred_check
        _
      $region10: #{tpu_custom_call.1} parent=5 // pred_check_branch
        %364 = sbr.rel (%p361) target = $region12
      $region11: #{tpu_custom_call.1} parent=5 // pred_region
        %s365 = ssub.s32 %s21, 1
        // Predicated region
        $region13: #{tpu_custom_call.1} parent=11 // pred_check
          %p366 = pneg %p68
        $region14: #{tpu_custom_call.1} parent=11 // pred_check_branch
          %368 = sbr.rel (%p366) target = $region16
        $region15: #{tpu_custom_call.1} parent=11 // pred_region
          _
        $region16: #{tpu_custom_call.1} parent=11 // pred_fallthru
          _
        // Predicated region
        $region17: #{tpu_custom_call.1} parent=11 // pred_check
          %p369 = pneg %p89
        $region18: #{tpu_custom_call.1} parent=11 // pred_check_branch
          %371 = sbr.rel (%p369) target = $region20
        $region19: #{tpu_custom_call.1} parent=11 // pred_region
          _
        $region20: #{tpu_custom_call.1} parent=11 // pred_fallthru
          _
        // Predicated region
        $region21: #{tpu_custom_call.1} parent=11 // pred_check
          %p372 = pneg %p110
        $region22: #{tpu_custom_call.1} parent=11 // pred_check_branch
          %374 = sbr.rel (%p372) target = $region24
        $region23: #{tpu_custom_call.1} parent=11 // pred_region
          _
        $region24: #{tpu_custom_call.1} parent=11 // pred_fallthru
          _
        // Predicated region
        $region25: #{tpu_custom_call.1} parent=11 // pred_check
          %p375 = pneg %p131
        $region26: #{tpu_custom_call.1} parent=11 // pred_check_branch
          %377 = sbr.rel (%p375) target = $region28
        $region27: #{tpu_custom_call.1} parent=11 // pred_region
          _
        $region28: #{tpu_custom_call.1} parent=11 // pred_fallthru
          _
        // Predicated region
        $region29: #{tpu_custom_call.1} parent=11 // pred_check
          %p378 = pneg %p152
        $region30: #{tpu_custom_call.1} parent=11 // pred_check_branch
          %380 = sbr.rel (%p378) target = $region32
        $region31: #{tpu_custom_call.1} parent=11 // pred_region
          _
        $region32: #{tpu_custom_call.1} parent=11 // pred_fallthru
          _
        // Predicated region
        $region33: #{tpu_custom_call.1} parent=11 // pred_check
          %p381 = pneg %p173
        $region34: #{tpu_custom_call.1} parent=11 // pred_check_branch
          %383 = sbr.rel (%p381) target = $region36
        $region35: #{tpu_custom_call.1} parent=11 // pred_region
          _
        $region36: #{tpu_custom_call.1} parent=11 // pred_fallthru
          _
        // Predicated region
        $region37: #{tpu_custom_call.1} parent=11 // pred_check
          %p384 = pneg %p194
        $region38: #{tpu_custom_call.1} parent=11 // pred_check_branch
          %386 = sbr.rel (%p384) target = $region40
        $region39: #{tpu_custom_call.1} parent=11 // pred_region
          _
        $region40: #{tpu_custom_call.1} parent=11 // pred_fallthru
          _
        // Predicated region
        $region41: #{tpu_custom_call.1} parent=11 // pred_check
          %p387 = pneg %p215
        $region42: #{tpu_custom_call.1} parent=11 // pred_check_branch
          %389 = sbr.rel (%p387) target = $region44
        $region43: #{tpu_custom_call.1} parent=11 // pred_region
          _
        $region44: #{tpu_custom_call.1} parent=11 // pred_fallthru
          _
        // Predicated region
        $region45: #{tpu_custom_call.1} parent=11 // pred_check
          %p390 = pneg %p236
        $region46: #{tpu_custom_call.1} parent=11 // pred_check_branch
          %392 = sbr.rel (%p390) target = $region48
        $region47: #{tpu_custom_call.1} parent=11 // pred_region
          _
        $region48: #{tpu_custom_call.1} parent=11 // pred_fallthru
          _
        // Predicated region
        $region49: #{tpu_custom_call.1} parent=11 // pred_check
          %p393 = pneg %p257
        $region50: #{tpu_custom_call.1} parent=11 // pred_check_branch
          %395 = sbr.rel (%p393) target = $region52
        $region51: #{tpu_custom_call.1} parent=11 // pred_region
          _
        $region52: #{tpu_custom_call.1} parent=11 // pred_fallthru
          _
        // Predicated region
        $region53: #{tpu_custom_call.1} parent=11 // pred_check
          %p396 = pneg %p278
        $region54: #{tpu_custom_call.1} parent=11 // pred_check_branch
          %398 = sbr.rel (%p396) target = $region56
        $region55: #{tpu_custom_call.1} parent=11 // pred_region
          _
        $region56: #{tpu_custom_call.1} parent=11 // pred_fallthru
          _
        // Predicated region
        $region57: #{tpu_custom_call.1} parent=11 // pred_check
          %p399 = pneg %p299
        $region58: #{tpu_custom_call.1} parent=11 // pred_check_branch
          %401 = sbr.rel (%p399) target = $region60
        $region59: #{tpu_custom_call.1} parent=11 // pred_region
          _
        $region60: #{tpu_custom_call.1} parent=11 // pred_fallthru
          _
      $region12: #{tpu_custom_call.1} parent=5 // pred_fallthru
        _
      %p402 = scmp.lt.s32.totalorder %s21, 2
      // Predicated region
      $region61: #{tpu_custom_call.1} parent=5 // pred_check
        %p403 = pneg %p402
      $region62: #{tpu_custom_call.1} parent=5 // pred_check_branch
        %405 = sbr.rel (%p403) target = $region64
      $region63: #{tpu_custom_call.1} parent=5 // pred_region
        // Predicated region
        $region65: #{tpu_custom_call.1} parent=63 // pred_check
          %p406 = pneg %p41
        $region66: #{tpu_custom_call.1} parent=63 // pred_check_branch
          %408 = sbr.rel (%p406) target = $region68
        $region67: #{tpu_custom_call.1} parent=63 // pred_region
          %s409 = smul.u32 8, %s21
          %p410 = scmp.lt.s32.totalorder %s409, 15
          %s411 = scalar_select %p410, %s409, 15
          %s412 = smul.addr %s411, 8
          %s413 = scalar_lea.vmem %s0, %s412
          %s414 = smul.u32 8, %s21
        $region68: #{tpu_custom_call.1} parent=63 // pred_fallthru
          _
      $region64: #{tpu_custom_call.1} parent=5 // pred_fallthru
        _
      %p415 = scmp.le.s32.totalorder 1, %s21
      %p416 = scmp.lt.s32.totalorder %s21, 3
      %p417 = pnand %p415, %p416
      %p418 = pneg %p417
      // Predicated region
      $region69: #{tpu_custom_call.1} parent=5 // pred_check
        _
      $region70: #{tpu_custom_call.1} parent=5 // pred_check_branch
        %420 = sbr.rel (%p417) target = $region72
      $region71: #{tpu_custom_call.1} parent=5 // pred_region
        %s421 = ssub.s32 %s21, 1
        %s422 = smul.u32 8, %s26
        %p423 = scmp.lt.s32.totalorder %s422, 15
        %s424 = scalar_select %p423, %s422, 15
        %s425 = smul.addr %s424, 8
        %s426 = scalar_lea.vmem %s0, %s425
        %p427 = pneg %p47
        %p428 = pneg %p44
        %p429 = pneg %p68
        %p430 = pneg %p65
        %p431 = pneg %p89
        %p432 = pneg %p86
        %p433 = pneg %p110
        %p434 = pneg %p107
        %p435 = pneg %p131
        %p436 = pneg %p128
        %p437 = pneg %p152
        %p438 = pneg %p149
        %p439 = pneg %p173
        %p440 = pneg %p170
        %p441 = pneg %p194
        %p442 = pneg %p191
        %p443 = pneg %p215
        %p444 = pneg %p212
        %p445 = pneg %p236
        %p446 = pneg %p233
        %p447 = pneg %p257
        %p448 = pneg %p254
        %p449 = pneg %p278
        %p450 = pneg %p275
        %p451 = pneg %p299
        %p452 = pneg %p296
        %p453 = pneg %p325
        %p454 = pneg %p322
        %s455 = sand.u32 %s312, 1
        %s456 = sand.u32 %s312, 1
        %s457 = smul.addr %s456, 128
        %s458 = scalar_lea.vmem [#allocation2], %s457
        %p459 = pneg %p351
        %p460 = pneg %p348
        %s461 = smul.u32 8, %s26
        %p462 = scmp.lt.s32.totalorder %s461, 15
        %s463 = scalar_select %p462, %s461, 15
        %s464 = smul.addr %s463, 8
        %s465 = scalar_lea.vmem %s14, %s464
        %s466 = smul.u32 8, %s26
        %p467 = scmp.lt.s32.totalorder %s466, 15
        %s468 = scalar_select %p467, %s466, 15
        %s469 = smul.addr %s468, 8
        %s470 = scalar_lea.vmem %s0, %s469
        %s471 = smul.u32 8, %s26
        %s472 = smul.u32 8, %s26
        %s473 = smul.u32 8, %s26
        %p474 = scmp.lt.s32.totalorder %s473, 15
        %s475 = scalar_select %p474, %s473, 15
        %s476 = smul.addr %s475, 8
        %s477 = scalar_lea.vmem %s14, %s476
        %s478 = smul.u32 8, %s26
        %v479 = vld [vmem:[%s470] sm:$0xff]
        %v480 = vld [vmem:[%s470 + $0x8] sm:$0xff]
        %v481 = vld [vmem:[%s470 + $0x10] sm:$0xff]
        %v482 = vld [vmem:[%s470 + $0x18] sm:$0xff]
        %v483 = vld [vmem:[%s470 + $0x20] sm:$0xff]
        %v484 = vld [vmem:[%s470 + $0x28] sm:$0xff]
        %v485 = vld [vmem:[%s470 + $0x30] sm:$0xff]
        %v486 = vld [vmem:[%s470 + $0x38] sm:$0xff]
        %v487 = vld [vmem:[%s1] sm:$0xff]
        %v488 = vld [vmem:[%s1 + $0x8] sm:$0xff]
        %v489 = vld [vmem:[%s2] sm:$0x1]
        %v491 = vlaneseq
        %v492 = vshrl.u32 %v491, 7
        %v493 = vsub.s32 0, %v492
        %v494 = vrot.slane %v489, %v493
        %vm496 = vcmask 130048
        %v498 = vsel %vm496, %v479, 0
        %v501 = vsel %vm496, %v480, 0
        %v504 = vsel %vm496, %v481, 0
        %v507 = vsel %vm496, %v482, 0
        %v510 = vsel %vm496, %v483, 0
        %v513 = vsel %vm496, %v484, 0
        %v516 = vsel %vm496, %v485, 0
        %v519 = vsel %vm496, %v486, 0
        %521 = vmatprep.subr.mxu0 0.0
        %522 = vmatpush1.msra.mxu0 0.0
        %523 = vmatprep.subr.mxu0 0.0
        %524 = vmatpush1.msra.mxu0 0.0
        %525 = vmatprep.subr.mxu0 0.0
        %526 = vmatpush1.msra.mxu0 0.0
        %527 = vmatprep.subr.mxu0 0.0
        %528 = vmatpush1.msra.mxu0 0.0
        %529 = vmatprep.subr.mxu0 0.0
        %530 = vmatpush1.msra.mxu0 0.0
        %531 = vmatprep.subr.mxu0 0.0
        %532 = vmatpush1.msra.mxu0 0.0
        %533 = vmatprep.subr.mxu0 0.0
        %534 = vmatpush1.msra.mxu0 0.0
        %535 = vmatprep.subr.mxu0 0.0
        %536 = vmatpush1.msra.mxu0 0.0
        %537 = vmatprep.subr.mxu0 0.0
        %538 = vmatpush1.msra.mxu0 0.0
        %539 = vmatprep.subr.mxu0 0.0
        %540 = vmatpush1.msra.mxu0 0.0
        %541 = vmatprep.subr.mxu0 0.0
        %542 = vmatpush1.msra.mxu0 0.0
        %543 = vmatprep.subr.mxu0 0.0
        %544 = vmatpush1.msra.mxu0 0.0
        %545 = vmatprep.subr.mxu0 0.0
        %546 = vmatpush1.msra.mxu0 0.0
        %547 = vmatprep.subr.mxu0 0.0
        %548 = vmatpush1.msra.mxu0 0.0
        %549 = vmatprep.subr.mxu0 0.0
        %550 = vmatpush1.msra.mxu0 %v488
        %551 = vmatprep.subr.mxu0 0.0
        %552 = vmatpush1.msra.mxu0 %v487
        %553 = vmatprep.subr.mxu0 0.0
        %554 = vmatpush2.msra.mxu0 0.0
        %555 = vmatprep.subr.mxu0 0.0
        %556 = vmatpush2.msra.mxu0 0.0
        %557 = vmatprep.subr.mxu0 0.0
        %558 = vmatpush2.msra.mxu0 0.0
        %559 = vmatprep.subr.mxu0 0.0
        %560 = vmatpush2.msra.mxu0 0.0
        %561 = vmatprep.subr.mxu0 0.0
        %562 = vmatpush2.msra.mxu0 0.0
        %563 = vmatprep.subr.mxu0 0.0
        %564 = vmatpush2.msra.mxu0 0.0
        %565 = vmatprep.subr.mxu0 0.0
        %566 = vmatpush2.msra.mxu0 0.0
        %567 = vmatprep.subr.mxu0 0.0
        %568 = vmatpush2.msra.mxu0 0.0
        %569 = vmatprep.subr.mxu0 0.0
        %570 = vmatpush2.msra.mxu0 0.0
        %571 = vmatprep.subr.mxu0 0.0
        %572 = vmatpush2.msra.mxu0 0.0
        %573 = vmatprep.subr.mxu0 0.0
        %574 = vmatpush2.msra.mxu0 0.0
        %575 = vmatprep.subr.mxu0 0.0
        %576 = vmatpush2.msra.mxu0 0.0
        %577 = vmatprep.subr.mxu0 0.0
        %578 = vmatpush2.msra.mxu0 0.0
        %579 = vmatprep.subr.mxu0 0.0
        %580 = vmatpush2.msra.mxu0 0.0
        %581 = vmatprep.subr.mxu0 0.0
        %582 = vmatpush2.msra.mxu0 0.0
        %583 = vmatprep.subr.mxu0 0.0
        %584 = vmatpush2.msra.mxu0 0.0
        %585 = vmatprep.mubr.f32.mxu0 0.0
        %586 = vmatmul.mubr.f32.gmra.mxu0 %v498
        %v587 = vpop.f32.mrf.mxu0
        %v588 = vadd.f32 %v494, %v587
        %v589 = vpop.f32.mrf.mxu0
        %590 = vmatprep.mubr.f32.mxu0 0.0
        %591 = vmatmul.mubr.f32.gmra.mxu0 %v501
        %v592 = vpop.f32.mrf.mxu0
        %v593 = vadd.f32 %v494, %v592
        %v594 = vpop.f32.mrf.mxu0
        %595 = vmatprep.mubr.f32.mxu0 0.0
        %596 = vmatmul.mubr.f32.gmra.mxu0 %v504
        %v597 = vpop.f32.mrf.mxu0
        %v598 = vadd.f32 %v494, %v597
        %v599 = vpop.f32.mrf.mxu0
        %600 = vmatprep.mubr.f32.mxu0 0.0
        %601 = vmatmul.mubr.f32.gmra.mxu0 %v507
        %v602 = vpop.f32.mrf.mxu0
        %v603 = vadd.f32 %v494, %v602
        %v604 = vpop.f32.mrf.mxu0
        %605 = vmatprep.mubr.f32.mxu0 0.0
        %606 = vmatmul.mubr.f32.gmra.mxu0 %v510
        %v607 = vpop.f32.mrf.mxu0
        %v608 = vadd.f32 %v494, %v607
        %v609 = vpop.f32.mrf.mxu0
        %610 = vmatprep.mubr.f32.mxu0 0.0
        %611 = vmatmul.mubr.f32.gmra.mxu0 %v513
        %v612 = vpop.f32.mrf.mxu0
        %v613 = vadd.f32 %v494, %v612
        %v614 = vpop.f32.mrf.mxu0
        %615 = vmatprep.mubr.f32.mxu0 0.0
        %616 = vmatmul.mubr.f32.gmra.mxu0 %v516
        %v617 = vpop.f32.mrf.mxu0
        %v618 = vadd.f32 %v494, %v617
        %v619 = vpop.f32.mrf.mxu0
        %620 = vmatprep.mubr.f32.mxu0 0.0
        %621 = vmatmul.mubr.f32.gmra.mxu0 %v519
        %v622 = vpop.f32.mrf.mxu0
        %v623 = vadd.f32 %v494, %v622
        %v624 = vpop.f32.mrf.mxu0
        %625 = vdwg.mxu0
        %v626 = vmul.f32 %v588, %v588
        %v627 = vmul.f32 %v593, %v593
        %v628 = vmul.f32 %v598, %v598
        %v629 = vmul.f32 %v603, %v603
        %v630 = vmul.f32 %v608, %v608
        %v631 = vmul.f32 %v613, %v613
        %v632 = vmul.f32 %v618, %v618
        %v633 = vmul.f32 %v623, %v623
        %vm634 = vcmask 261120
        %v635 = vsel %vm634, %v626, 0.0
        %636 = vadd.xlane.f32.xlu0 %v635
        %v637 = vpop.xlane.xlu0 %636
        %v638 = vsel %vm634, %v627, 0.0
        %639 = vadd.xlane.f32.xlu0 %v638
        %v640 = vpop.xlane.xlu0 %639
        %v641 = vsel %vm634, %v628, 0.0
        %642 = vadd.xlane.f32.xlu0 %v641
        %v643 = vpop.xlane.xlu0 %642
        %v644 = vsel %vm634, %v629, 0.0
        %645 = vadd.xlane.f32.xlu0 %v644
        %v646 = vpop.xlane.xlu0 %645
        %v647 = vsel %vm634, %v630, 0.0
        %648 = vadd.xlane.f32.xlu0 %v647
        %v649 = vpop.xlane.xlu0 %648
        %v650 = vsel %vm634, %v631, 0.0
        %651 = vadd.xlane.f32.xlu0 %v650
        %v652 = vpop.xlane.xlu0 %651
        %v653 = vsel %vm634, %v632, 0.0
        %654 = vadd.xlane.f32.xlu0 %v653
        %v655 = vpop.xlane.xlu0 %654
        %v656 = vsel %vm634, %v633, 0.0
        %657 = vadd.xlane.f32.xlu0 %v656
        %v658 = vpop.xlane.xlu0 %657
        %v659 = vadd.f32 %v637, 0.0001
        %v660 = vadd.f32 %v640, 0.0001
        %v661 = vadd.f32 %v643, 0.0001
        %v662 = vadd.f32 %v646, 0.0001
        %v663 = vadd.f32 %v649, 0.0001
        %v664 = vadd.f32 %v652, 0.0001
        %v665 = vadd.f32 %v655, 0.0001
        %v666 = vadd.f32 %v658, 0.0001
        %v667 = vrsqrt.pop %v659
        %v668 = vrsqrt.pop %v660
        %v669 = vrsqrt.pop %v661
        %v670 = vrsqrt.pop %v662
        %v671 = vrsqrt.pop %v663
        %v672 = vrsqrt.pop %v664
        %v673 = vrsqrt.pop %v665
        %v674 = vrsqrt.pop %v666
        %v675 = vmul.f32 %v588, %v667
        %v676 = vmul.f32 %v593, %v668
        %v677 = vmul.f32 %v598, %v669
        %v678 = vmul.f32 %v603, %v670
        %v679 = vmul.f32 %v608, %v671
        %v680 = vmul.f32 %v613, %v672
        %v681 = vmul.f32 %v618, %v673
        %v682 = vmul.f32 %v623, %v674
        %v683 = vld [vmem:[%s3] sm:$0x3]
        %v684 = vld [vmem:[%s4] sm:$0x3]
        %v685 = vld [vmem:[%s5] sm:$0xff]
        %v686 = vld [vmem:[%s5 + $0x8] sm:$0xff]
        %v687 = vld [vmem:[%s5 + $0x10] sm:$0xff]
        %v688 = vld [vmem:[%s5 + $0x18] sm:$0xff]
        %v689 = vld [vmem:[%s6] sm:$0xff]
        %v690 = vld [vmem:[%s6 + $0x8] sm:$0xff]
        %v691 = vld [vmem:[%s6 + $0x10] sm:$0xff]
        %v692 = vld [vmem:[%s6 + $0x18] sm:$0xff]
        %v693 = vld [vmem:[%s7] sm:$0xff]
        %v694 = vld [vmem:[%s7 + $0x8] sm:$0xff]
        %v695 = vld [vmem:[%s8] sm:$0xff]
        %v696 = vld [vmem:[%s8 + $0x8] sm:$0xff]
        %v697 = vsel %vm634, %v675, 0.0
        %698 = vadd.xlane.f32.xlu0 %v697
        %v699 = vpop.xlane.xlu0 %698
        %v700 = vsel %vm634, %v676, 0.0
        %701 = vadd.xlane.f32.xlu0 %v700
        %v702 = vpop.xlane.xlu0 %701
        %v703 = vsel %vm634, %v677, 0.0
        %704 = vadd.xlane.f32.xlu0 %v703
        %v705 = vpop.xlane.xlu0 %704
        %v706 = vsel %vm634, %v678, 0.0
        %707 = vadd.xlane.f32.xlu0 %v706
        %v708 = vpop.xlane.xlu0 %707
        %v709 = vsel %vm634, %v679, 0.0
        %710 = vadd.xlane.f32.xlu0 %v709
        %v711 = vpop.xlane.xlu0 %710
        %v712 = vsel %vm634, %v680, 0.0
        %713 = vadd.xlane.f32.xlu0 %v712
        %v714 = vpop.xlane.xlu0 %713
        %v715 = vsel %vm634, %v681, 0.0
        %716 = vadd.xlane.f32.xlu0 %v715
        %v717 = vpop.xlane.xlu0 %716
        %v718 = vsel %vm634, %v682, 0.0
        %719 = vadd.xlane.f32.xlu0 %v718
        %v720 = vpop.xlane.xlu0 %719
        %v721 = vrcp.pop 32.0
        %v722 = vmul.f32 %v699, %v721
        %v723 = vmul.f32 %v702, %v721
        %v724 = vmul.f32 %v705, %v721
        %v725 = vmul.f32 %v708, %v721
        %v726 = vmul.f32 %v711, %v721
        %v727 = vmul.f32 %v714, %v721
        %v728 = vmul.f32 %v717, %v721
        %v729 = vmul.f32 %v720, %v721
        %v730 = vsub.f32 %v675, %v722
        %v731 = vsub.f32 %v676, %v723
        %v732 = vsub.f32 %v677, %v724
        %v733 = vsub.f32 %v678, %v725
        %v734 = vsub.f32 %v679, %v726
        %v735 = vsub.f32 %v680, %v727
        %v736 = vsub.f32 %v681, %v728
        %v737 = vsub.f32 %v682, %v729
        %v738 = vmul.f32 %v730, %v730
        %v739 = vmul.f32 %v731, %v731
        %v740 = vmul.f32 %v732, %v732
        %v741 = vmul.f32 %v733, %v733
        %v742 = vmul.f32 %v734, %v734
        %v743 = vmul.f32 %v735, %v735
        %v744 = vmul.f32 %v736, %v736
        %v745 = vmul.f32 %v737, %v737
        %v746 = vsel %vm634, %v738, 0.0
        %747 = vadd.xlane.f32.xlu0 %v746
        %v748 = vpop.xlane.xlu0 %747
        %v749 = vsel %vm634, %v739, 0.0
        %750 = vadd.xlane.f32.xlu0 %v749
        %v751 = vpop.xlane.xlu0 %750
        %v752 = vsel %vm634, %v740, 0.0
        %753 = vadd.xlane.f32.xlu0 %v752
        %v754 = vpop.xlane.xlu0 %753
        %v755 = vsel %vm634, %v741, 0.0
        %756 = vadd.xlane.f32.xlu0 %v755
        %v757 = vpop.xlane.xlu0 %756
        %v758 = vsel %vm634, %v742, 0.0
        %759 = vadd.xlane.f32.xlu0 %v758
        %v760 = vpop.xlane.xlu0 %759
        %v761 = vsel %vm634, %v743, 0.0
        %762 = vadd.xlane.f32.xlu0 %v761
        %v763 = vpop.xlane.xlu0 %762
        %v764 = vsel %vm634, %v744, 0.0
        %765 = vadd.xlane.f32.xlu0 %v764
        %v766 = vpop.xlane.xlu0 %765
        %v767 = vsel %vm634, %v745, 0.0
        %768 = vadd.xlane.f32.xlu0 %v767
        %v769 = vpop.xlane.xlu0 %768
        %v770 = vmul.f32 %v748, %v721
        %v771 = vmul.f32 %v751, %v721
        %v772 = vmul.f32 %v754, %v721
        %v773 = vmul.f32 %v757, %v721
        %v774 = vmul.f32 %v760, %v721
        %v775 = vmul.f32 %v763, %v721
        %v776 = vmul.f32 %v766, %v721
        %v777 = vmul.f32 %v769, %v721
        %v778 = vadd.f32 %v770, 1e-05
        %v779 = vadd.f32 %v771, 1e-05
        %v780 = vadd.f32 %v772, 1e-05
        %v781 = vadd.f32 %v773, 1e-05
        %v782 = vadd.f32 %v774, 1e-05
        %v783 = vadd.f32 %v775, 1e-05
        %v784 = vadd.f32 %v776, 1e-05
        %v785 = vadd.f32 %v777, 1e-05
        %v786 = vrsqrt.pop %v778
        %v787 = vrsqrt.pop %v779
        %v788 = vrsqrt.pop %v780
        %v789 = vrsqrt.pop %v781
        %v790 = vrsqrt.pop %v782
        %v791 = vrsqrt.pop %v783
        %v792 = vrsqrt.pop %v784
        %v793 = vrsqrt.pop %v785
        %v794 = vmul.f32 %v730, %v786
        %v795 = vmul.f32 %v731, %v787
        %v796 = vmul.f32 %v732, %v788
        %v797 = vmul.f32 %v733, %v789
        %v798 = vmul.f32 %v734, %v790
        %v799 = vmul.f32 %v735, %v791
        %v800 = vmul.f32 %v736, %v792
        %v801 = vmul.f32 %v737, %v793
        %v802 = vlaneseq
        %v803 = vshrl.u32 %v802, 7
        %v804 = vsub.s32 0, %v803
        %v805 = vrot.slane %v683, %v804
        %v806 = vmul.f32 %v794, %v805
        %v807 = vmul.f32 %v795, %v805
        %v808 = vmul.f32 %v796, %v805
        %v809 = vmul.f32 %v797, %v805
        %v810 = vmul.f32 %v798, %v805
        %v811 = vmul.f32 %v799, %v805
        %v812 = vmul.f32 %v800, %v805
        %v813 = vmul.f32 %v801, %v805
        %v814 = vlaneseq
        %v815 = vshrl.u32 %v814, 7
        %v816 = vsub.s32 0, %v815
        %v817 = vrot.slane %v684, %v816
        %v818 = vadd.f32 %v806, %v817
        %v819 = vadd.f32 %v807, %v817
        %v820 = vadd.f32 %v808, %v817
        %v821 = vadd.f32 %v809, %v817
        %v822 = vadd.f32 %v810, %v817
        %v823 = vadd.f32 %v811, %v817
        %v824 = vadd.f32 %v812, %v817
        %v825 = vadd.f32 %v813, %v817
        %827 = vset.pattern.permute.xlu0 0
        %828 = vperm.xlu0 %827, %v689
        %v829 = vpop.permute.xlu0 %828
        %832 = vset.pattern.permute.xlu0 0
        %833 = vperm.xlu0 %832, %v690
        %v834 = vpop.permute.xlu0 %833
        %837 = vset.pattern.permute.xlu0 0
        %838 = vperm.xlu0 %837, %v691
        %v839 = vpop.permute.xlu0 %838
        %842 = vset.pattern.permute.xlu0 0
        %843 = vperm.xlu0 %842, %v692
        %v844 = vpop.permute.xlu0 %843
        %v847 = vsel %vm496, %v685, 0
        %v850 = vsel %vm496, %v686, 0
        %v853 = vsel %vm496, %v687, 0
        %v856 = vsel %vm496, %v688, 0
        %858 = vmatprep.subr.mxu0 0.0
        %859 = vmatpush1.msra.mxu0 0.0
        %860 = vmatprep.subr.mxu0 0.0
        %861 = vmatpush1.msra.mxu0 0.0
        %862 = vmatprep.subr.mxu0 0.0
        %863 = vmatpush1.msra.mxu0 0.0
        %864 = vmatprep.subr.mxu0 0.0
        %865 = vmatpush1.msra.mxu0 0.0
        %866 = vmatprep.subr.mxu0 0.0
        %867 = vmatpush1.msra.mxu0 0.0
        %868 = vmatprep.subr.mxu0 0.0
        %869 = vmatpush1.msra.mxu0 0.0
        %870 = vmatprep.subr.mxu0 0.0
        %871 = vmatpush1.msra.mxu0 0.0
        %872 = vmatprep.subr.mxu0 0.0
        %873 = vmatpush1.msra.mxu0 0.0
        %874 = vmatprep.subr.mxu0 0.0
        %875 = vmatpush1.msra.mxu0 0.0
        %876 = vmatprep.subr.mxu0 0.0
        %877 = vmatpush1.msra.mxu0 0.0
        %878 = vmatprep.subr.mxu0 0.0
        %879 = vmatpush1.msra.mxu0 0.0
        %880 = vmatprep.subr.mxu0 0.0
        %881 = vmatpush1.msra.mxu0 0.0
        %882 = vmatprep.subr.mxu0 0.0
        %883 = vmatpush1.msra.mxu0 0.0
        %884 = vmatprep.subr.mxu0 0.0
        %885 = vmatpush1.msra.mxu0 0.0
        %886 = vmatprep.subr.mxu0 0.0
        %887 = vmatpush1.msra.mxu0 %v819
        %888 = vmatprep.subr.mxu0 0.0
        %889 = vmatpush1.msra.mxu0 %v818
        %890 = vmatprep.subr.mxu0 0.0
        %891 = vmatpush2.msra.mxu0 0.0
        %892 = vmatprep.subr.mxu0 0.0
        %893 = vmatpush2.msra.mxu0 0.0
        %894 = vmatprep.subr.mxu0 0.0
        %895 = vmatpush2.msra.mxu0 0.0
        %896 = vmatprep.subr.mxu0 0.0
        %897 = vmatpush2.msra.mxu0 0.0
        %898 = vmatprep.subr.mxu0 0.0
        %899 = vmatpush2.msra.mxu0 0.0
        %900 = vmatprep.subr.mxu0 0.0
        %901 = vmatpush2.msra.mxu0 0.0
        %902 = vmatprep.subr.mxu0 0.0
        %903 = vmatpush2.msra.mxu0 0.0
        %904 = vmatprep.subr.mxu0 0.0
        %905 = vmatpush2.msra.mxu0 0.0
        %906 = vmatprep.subr.mxu0 0.0
        %907 = vmatpush2.msra.mxu0 0.0
        %908 = vmatprep.subr.mxu0 0.0
        %909 = vmatpush2.msra.mxu0 0.0
        %910 = vmatprep.subr.mxu0 0.0
        %911 = vmatpush2.msra.mxu0 0.0
        %912 = vmatprep.subr.mxu0 0.0
        %913 = vmatpush2.msra.mxu0 0.0
        %914 = vmatprep.subr.mxu0 0.0
        %915 = vmatpush2.msra.mxu0 0.0
        %916 = vmatprep.subr.mxu0 0.0
        %917 = vmatpush2.msra.mxu0 0.0
        %918 = vmatprep.subr.mxu0 0.0
        %919 = vmatpush2.msra.mxu0 0.0
        %920 = vmatprep.subr.mxu0 0.0
        %921 = vmatpush2.msra.mxu0 0.0
        %922 = vmatprep.mubr.f32.mxu0 0.0
        %923 = vmatmul.mubr.f32.gmra.mxu0 %v847
        %v924 = vpop.f32.mrf.mxu0
        %v925 = vadd.f32 %v829, %v924
        %v926 = vpop.f32.mrf.mxu0
        %927 = vmatprep.mubr.f32.mxu0 0.0
        %928 = vmatmul.mubr.f32.gmra.mxu0 %v850
        %v929 = vpop.f32.mrf.mxu0
        %v930 = vadd.f32 %v834, %v929
        %v931 = vpop.f32.mrf.mxu0
        %932 = vmatprep.mubr.f32.mxu0 0.0
        %933 = vmatmul.mubr.f32.gmra.mxu0 %v853
        %v934 = vpop.f32.mrf.mxu0
        %v935 = vadd.f32 %v839, %v934
        %v936 = vpop.f32.mrf.mxu0
        %937 = vmatprep.mubr.f32.mxu0 0.0
        %938 = vmatmul.mubr.f32.gmra.mxu0 %v856
        %v939 = vpop.f32.mrf.mxu0
        %v940 = vadd.f32 %v844, %v939
        %v941 = vpop.f32.mrf.mxu0
        %942 = vdwg.mxu0
        %v943 = vmul.f32 %v925, 0.5
        %v944 = vmul.f32 %v930, 0.5
        %v945 = vmul.f32 %v935, 0.5
        %v946 = vmul.f32 %v940, 0.5
        %v947 = vmul.f32 %v925, 0.044715
        %v948 = vmul.f32 %v930, 0.044715
        %v949 = vmul.f32 %v935, 0.044715
        %v950 = vmul.f32 %v940, 0.044715
        %v951 = vmul.f32 %v947, %v925
        %v952 = vmul.f32 %v948, %v930
        %v953 = vmul.f32 %v949, %v935
        %v954 = vmul.f32 %v950, %v940
        %v955 = vmul.f32 %v951, %v925
        %v956 = vmul.f32 %v952, %v930
        %v957 = vmul.f32 %v953, %v935
        %v958 = vmul.f32 %v954, %v940
        %v959 = vadd.f32 %v925, %v955
        %v960 = vadd.f32 %v930, %v956
        %v961 = vadd.f32 %v935, %v957
        %v962 = vadd.f32 %v940, %v958
        %v963 = vmul.f32 %v959, 0.7978846
        %v964 = vmul.f32 %v960, 0.7978846
        %v965 = vmul.f32 %v961, 0.7978846
        %v966 = vmul.f32 %v962, 0.7978846
        %v967 = vtanh.pop %v963
        %v968 = vtanh.pop %v964
        %v969 = vtanh.pop %v965
        %v970 = vtanh.pop %v966
        %v971 = vadd.f32 %v967, 1.0
        %v972 = vadd.f32 %v968, 1.0
        %v973 = vadd.f32 %v969, 1.0
        %v974 = vadd.f32 %v970, 1.0
        %v975 = vmul.f32 %v943, %v971
        %v976 = vmul.f32 %v944, %v972
        %v977 = vmul.f32 %v945, %v973
        %v978 = vmul.f32 %v946, %v974
        %980 = vset.pattern.permute.xlu0 0
        %981 = vperm.xlu0 %980, %v695
        %v982 = vpop.permute.xlu0 %981
        %985 = vset.pattern.permute.xlu0 0
        %986 = vperm.xlu0 %985, %v696
        %v987 = vpop.permute.xlu0 %986
        %v990 = vsel %vm634, %v693, 0
        %v993 = vsel %vm634, %v694, 0
        %995 = vmatprep.subr.mxu0 0.0
        %996 = vmatpush1.msra.mxu0 0.0
        %997 = vmatprep.subr.mxu0 0.0
        %998 = vmatpush1.msra.mxu0 0.0
        %999 = vmatprep.subr.mxu0 0.0
        %1000 = vmatpush1.msra.mxu0 0.0
        %1001 = vmatprep.subr.mxu0 0.0
        %1002 = vmatpush1.msra.mxu0 0.0
        %1003 = vmatprep.subr.mxu0 0.0
        %1004 = vmatpush1.msra.mxu0 0.0
        %1005 = vmatprep.subr.mxu0 0.0
        %1006 = vmatpush1.msra.mxu0 0.0
        %1007 = vmatprep.subr.mxu0 0.0
        %1008 = vmatpush1.msra.mxu0 0.0
        %1009 = vmatprep.subr.mxu0 0.0
        %1010 = vmatpush1.msra.mxu0 0.0
        %1011 = vmatprep.subr.mxu0 0.0
        %1012 = vmatpush1.msra.mxu0 0.0
        %1013 = vmatprep.subr.mxu0 0.0
        %1014 = vmatpush1.msra.mxu0 0.0
        %1015 = vmatprep.subr.mxu0 0.0
        %1016 = vmatpush1.msra.mxu0 0.0
        %1017 = vmatprep.subr.mxu0 0.0
        %1018 = vmatpush1.msra.mxu0 0.0
        %1019 = vmatprep.subr.mxu0 0.0
        %1020 = vmatpush1.msra.mxu0 %v978
        %1021 = vmatprep.subr.mxu0 0.0
        %1022 = vmatpush1.msra.mxu0 %v977
        %1023 = vmatprep.subr.mxu0 0.0
        %1024 = vmatpush1.msra.mxu0 %v976
        %1025 = vmatprep.subr.mxu0 0.0
        %1026 = vmatpush1.msra.mxu0 %v975
        %1027 = vmatprep.subr.mxu0 0.0
        %1028 = vmatpush2.msra.mxu0 0.0
        %1029 = vmatprep.subr.mxu0 0.0
        %1030 = vmatpush2.msra.mxu0 0.0
        %1031 = vmatprep.subr.mxu0 0.0
        %1032 = vmatpush2.msra.mxu0 0.0
        %1033 = vmatprep.subr.mxu0 0.0
        %1034 = vmatpush2.msra.mxu0 0.0
        %1035 = vmatprep.subr.mxu0 0.0
        %1036 = vmatpush2.msra.mxu0 0.0
        %1037 = vmatprep.subr.mxu0 0.0
        %1038 = vmatpush2.msra.mxu0 0.0
        %1039 = vmatprep.subr.mxu0 0.0
        %1040 = vmatpush2.msra.mxu0 0.0
        %1041 = vmatprep.subr.mxu0 0.0
        %1042 = vmatpush2.msra.mxu0 0.0
        %1043 = vmatprep.subr.mxu0 0.0
        %1044 = vmatpush2.msra.mxu0 0.0
        %1045 = vmatprep.subr.mxu0 0.0
        %1046 = vmatpush2.msra.mxu0 0.0
        %1047 = vmatprep.subr.mxu0 0.0
        %1048 = vmatpush2.msra.mxu0 0.0
        %1049 = vmatprep.subr.mxu0 0.0
        %1050 = vmatpush2.msra.mxu0 0.0
        %1051 = vmatprep.subr.mxu0 0.0
        %1052 = vmatpush2.msra.mxu0 0.0
        %1053 = vmatprep.subr.mxu0 0.0
        %1054 = vmatpush2.msra.mxu0 0.0
        %1055 = vmatprep.subr.mxu0 0.0
        %1056 = vmatpush2.msra.mxu0 0.0
        %1057 = vmatprep.subr.mxu0 0.0
        %1058 = vmatpush2.msra.mxu0 0.0
        %1059 = vmatprep.mubr.f32.mxu0 0.0
        %1060 = vmatmul.mubr.f32.gmra.mxu0 %v990
        %v1061 = vpop.f32.mrf.mxu0
        %v1062 = vadd.f32 %v982, %v1061
        %v1063 = vpop.f32.mrf.mxu0
        %1064 = vmatprep.mubr.f32.mxu0 0.0
        %1065 = vmatmul.mubr.f32.gmra.mxu0 %v993
        %v1066 = vpop.f32.mrf.mxu0
        %v1067 = vadd.f32 %v987, %v1066
        %v1068 = vpop.f32.mrf.mxu0
        %1069 = vdwg.mxu0
        %1070 = vmatprep.subr.mxu0 0.0
        %1071 = vmatpush1.msra.mxu0 0.0
        %1072 = vmatprep.subr.mxu0 0.0
        %1073 = vmatpush1.msra.mxu0 0.0
        %1074 = vmatprep.subr.mxu0 0.0
        %1075 = vmatpush1.msra.mxu0 0.0
        %1076 = vmatprep.subr.mxu0 0.0
        %1077 = vmatpush1.msra.mxu0 0.0
        %1078 = vmatprep.subr.mxu0 0.0
        %1079 = vmatpush1.msra.mxu0 0.0
        %1080 = vmatprep.subr.mxu0 0.0
        %1081 = vmatpush1.msra.mxu0 0.0
        %1082 = vmatprep.subr.mxu0 0.0
        %1083 = vmatpush1.msra.mxu0 0.0
        %1084 = vmatprep.subr.mxu0 0.0
        %1085 = vmatpush1.msra.mxu0 0.0
        %1086 = vmatprep.subr.mxu0 0.0
        %1087 = vmatpush1.msra.mxu0 0.0
        %1088 = vmatprep.subr.mxu0 0.0
        %1089 = vmatpush1.msra.mxu0 0.0
        %1090 = vmatprep.subr.mxu0 0.0
        %1091 = vmatpush1.msra.mxu0 0.0
        %1092 = vmatprep.subr.mxu0 0.0
        %1093 = vmatpush1.msra.mxu0 0.0
        %1094 = vmatprep.subr.mxu0 0.0
        %1095 = vmatpush1.msra.mxu0 0.0
        %1096 = vmatprep.subr.mxu0 0.0
        %1097 = vmatpush1.msra.mxu0 0.0
        %1098 = vmatprep.subr.mxu0 0.0
        %1099 = vmatpush1.msra.mxu0 %v821
        %1100 = vmatprep.subr.mxu0 0.0
        %1101 = vmatpush1.msra.mxu0 %v820
        %1102 = vmatprep.subr.mxu0 0.0
        %1103 = vmatpush2.msra.mxu0 0.0
        %1104 = vmatprep.subr.mxu0 0.0
        %1105 = vmatpush2.msra.mxu0 0.0
        %1106 = vmatprep.subr.mxu0 0.0
        %1107 = vmatpush2.msra.mxu0 0.0
        %1108 = vmatprep.subr.mxu0 0.0
        %1109 = vmatpush2.msra.mxu0 0.0
        %1110 = vmatprep.subr.mxu0 0.0
        %1111 = vmatpush2.msra.mxu0 0.0
        %1112 = vmatprep.subr.mxu0 0.0
        %1113 = vmatpush2.msra.mxu0 0.0
        %1114 = vmatprep.subr.mxu0 0.0
        %1115 = vmatpush2.msra.mxu0 0.0
        %1116 = vmatprep.subr.mxu0 0.0
        %1117 = vmatpush2.msra.mxu0 0.0
        %1118 = vmatprep.subr.mxu0 0.0
        %1119 = vmatpush2.msra.mxu0 0.0
        %1120 = vmatprep.subr.mxu0 0.0
        %1121 = vmatpush2.msra.mxu0 0.0
        %1122 = vmatprep.subr.mxu0 0.0
        %1123 = vmatpush2.msra.mxu0 0.0
        %1124 = vmatprep.subr.mxu0 0.0
        %1125 = vmatpush2.msra.mxu0 0.0
        %1126 = vmatprep.subr.mxu0 0.0
        %1127 = vmatpush2.msra.mxu0 0.0
        %1128 = vmatprep.subr.mxu0 0.0
        %1129 = vmatpush2.msra.mxu0 0.0
        %1130 = vmatprep.subr.mxu0 0.0
        %1131 = vmatpush2.msra.mxu0 0.0
        %1132 = vmatprep.subr.mxu0 0.0
        %1133 = vmatpush2.msra.mxu0 0.0
        %1134 = vmatprep.mubr.f32.mxu0 0.0
        %1135 = vmatmul.mubr.f32.gmra.mxu0 %v847
        %v1136 = vpop.f32.mrf.mxu0
        %v1137 = vadd.f32 %v829, %v1136
        %v1138 = vpop.f32.mrf.mxu0
        %1139 = vmatprep.mubr.f32.mxu0 0.0
        %1140 = vmatmul.mubr.f32.gmra.mxu0 %v850
        %v1141 = vpop.f32.mrf.mxu0
        %v1142 = vadd.f32 %v834, %v1141
        %v1143 = vpop.f32.mrf.mxu0
        %1144 = vmatprep.mubr.f32.mxu0 0.0
        %1145 = vmatmul.mubr.f32.gmra.mxu0 %v853
        %v1146 = vpop.f32.mrf.mxu0
        %v1147 = vadd.f32 %v839, %v1146
        %v1148 = vpop.f32.mrf.mxu0
        %1149 = vmatprep.mubr.f32.mxu0 0.0
        %1150 = vmatmul.mubr.f32.gmra.mxu0 %v856
        %v1151 = vpop.f32.mrf.mxu0
        %v1152 = vadd.f32 %v844, %v1151
        %v1153 = vpop.f32.mrf.mxu0
        %1154 = vdwg.mxu0
        %v1155 = vmul.f32 %v1137, 0.5
        %v1156 = vmul.f32 %v1142, 0.5
        %v1157 = vmul.f32 %v1147, 0.5
        %v1158 = vmul.f32 %v1152, 0.5
        %v1159 = vmul.f32 %v1137, 0.044715
        %v1160 = vmul.f32 %v1142, 0.044715
        %v1161 = vmul.f32 %v1147, 0.044715
        %v1162 = vmul.f32 %v1152, 0.044715
        %v1163 = vmul.f32 %v1159, %v1137
        %v1164 = vmul.f32 %v1160, %v1142
        %v1165 = vmul.f32 %v1161, %v1147
        %v1166 = vmul.f32 %v1162, %v1152
        %v1167 = vmul.f32 %v1163, %v1137
        %v1168 = vmul.f32 %v1164, %v1142
        %v1169 = vmul.f32 %v1165, %v1147
        %v1170 = vmul.f32 %v1166, %v1152
        %v1171 = vadd.f32 %v1137, %v1167
        %v1172 = vadd.f32 %v1142, %v1168
        %v1173 = vadd.f32 %v1147, %v1169
        %v1174 = vadd.f32 %v1152, %v1170
        %v1175 = vmul.f32 %v1171, 0.7978846
        %v1176 = vmul.f32 %v1172, 0.7978846
        %v1177 = vmul.f32 %v1173, 0.7978846
        %v1178 = vmul.f32 %v1174, 0.7978846
        %v1179 = vtanh.pop %v1175
        %v1180 = vtanh.pop %v1176
        %v1181 = vtanh.pop %v1177
        %v1182 = vtanh.pop %v1178
        %v1183 = vadd.f32 %v1179, 1.0
        %v1184 = vadd.f32 %v1180, 1.0
        %v1185 = vadd.f32 %v1181, 1.0
        %v1186 = vadd.f32 %v1182, 1.0
        %v1187 = vmul.f32 %v1155, %v1183
        %v1188 = vmul.f32 %v1156, %v1184
        %v1189 = vmul.f32 %v1157, %v1185
        %v1190 = vmul.f32 %v1158, %v1186
        %1191 = vmatprep.subr.mxu0 0.0
        %1192 = vmatpush1.msra.mxu0 0.0
        %1193 = vmatprep.subr.mxu0 0.0
        %1194 = vmatpush1.msra.mxu0 0.0
        %1195 = vmatprep.subr.mxu0 0.0
        %1196 = vmatpush1.msra.mxu0 0.0
        %1197 = vmatprep.subr.mxu0 0.0
        %1198 = vmatpush1.msra.mxu0 0.0
        %1199 = vmatprep.subr.mxu0 0.0
        %1200 = vmatpush1.msra.mxu0 0.0
        %1201 = vmatprep.subr.mxu0 0.0
        %1202 = vmatpush1.msra.mxu0 0.0
        %1203 = vmatprep.subr.mxu0 0.0
        %1204 = vmatpush1.msra.mxu0 0.0
        %1205 = vmatprep.subr.mxu0 0.0
        %1206 = vmatpush1.msra.mxu0 0.0
        %1207 = vmatprep.subr.mxu0 0.0
        %1208 = vmatpush1.msra.mxu0 0.0
        %1209 = vmatprep.subr.mxu0 0.0
        %1210 = vmatpush1.msra.mxu0 0.0
        %1211 = vmatprep.subr.mxu0 0.0
        %1212 = vmatpush1.msra.mxu0 0.0
        %1213 = vmatprep.subr.mxu0 0.0
        %1214 = vmatpush1.msra.mxu0 0.0
        %1215 = vmatprep.subr.mxu0 0.0
        %1216 = vmatpush1.msra.mxu0 %v1190
        %1217 = vmatprep.subr.mxu0 0.0
        %1218 = vmatpush1.msra.mxu0 %v1189
        %1219 = vmatprep.subr.mxu0 0.0
        %1220 = vmatpush1.msra.mxu0 %v1188
        %1221 = vmatprep.subr.mxu0 0.0
        %1222 = vmatpush1.msra.mxu0 %v1187
        %1223 = vmatprep.subr.mxu0 0.0
        %1224 = vmatpush2.msra.mxu0 0.0
        %1225 = vmatprep.subr.mxu0 0.0
        %1226 = vmatpush2.msra.mxu0 0.0
        %1227 = vmatprep.subr.mxu0 0.0
        %1228 = vmatpush2.msra.mxu0 0.0
        %1229 = vmatprep.subr.mxu0 0.0
        %1230 = vmatpush2.msra.mxu0 0.0
        %1231 = vmatprep.subr.mxu0 0.0
        %1232 = vmatpush2.msra.mxu0 0.0
        %1233 = vmatprep.subr.mxu0 0.0
        %1234 = vmatpush2.msra.mxu0 0.0
        %1235 = vmatprep.subr.mxu0 0.0
        %1236 = vmatpush2.msra.mxu0 0.0
        %1237 = vmatprep.subr.mxu0 0.0
        %1238 = vmatpush2.msra.mxu0 0.0
        %1239 = vmatprep.subr.mxu0 0.0
        %1240 = vmatpush2.msra.mxu0 0.0
        %1241 = vmatprep.subr.mxu0 0.0
        %1242 = vmatpush2.msra.mxu0 0.0
        %1243 = vmatprep.subr.mxu0 0.0
        %1244 = vmatpush2.msra.mxu0 0.0
        %1245 = vmatprep.subr.mxu0 0.0
        %1246 = vmatpush2.msra.mxu0 0.0
        %1247 = vmatprep.subr.mxu0 0.0
        %1248 = vmatpush2.msra.mxu0 0.0
        %1249 = vmatprep.subr.mxu0 0.0
        %1250 = vmatpush2.msra.mxu0 0.0
        %1251 = vmatprep.subr.mxu0 0.0
        %1252 = vmatpush2.msra.mxu0 0.0
        %1253 = vmatprep.subr.mxu0 0.0
        %1254 = vmatpush2.msra.mxu0 0.0
        %1255 = vmatprep.mubr.f32.mxu0 0.0
        %1256 = vmatmul.mubr.f32.gmra.mxu0 %v990
        %v1257 = vpop.f32.mrf.mxu0
        %v1258 = vadd.f32 %v982, %v1257
        %v1259 = vpop.f32.mrf.mxu0
        %1260 = vmatprep.mubr.f32.mxu0 0.0
        %1261 = vmatmul.mubr.f32.gmra.mxu0 %v993
        %v1262 = vpop.f32.mrf.mxu0
        %v1263 = vadd.f32 %v987, %v1262
        %v1264 = vpop.f32.mrf.mxu0
        %1265 = vdwg.mxu0
        %1266 = vmatprep.subr.mxu0 0.0
        %1267 = vmatpush1.msra.mxu0 0.0
        %1268 = vmatprep.subr.mxu0 0.0
        %1269 = vmatpush1.msra.mxu0 0.0
        %1270 = vmatprep.subr.mxu0 0.0
        %1271 = vmatpush1.msra.mxu0 0.0
        %1272 = vmatprep.subr.mxu0 0.0
        %1273 = vmatpush1.msra.mxu0 0.0
        %1274 = vmatprep.subr.mxu0 0.0
        %1275 = vmatpush1.msra.mxu0 0.0
        %1276 = vmatprep.subr.mxu0 0.0
        %1277 = vmatpush1.msra.mxu0 0.0
        %1278 = vmatprep.subr.mxu0 0.0
        %1279 = vmatpush1.msra.mxu0 0.0
        %1280 = vmatprep.subr.mxu0 0.0
        %1281 = vmatpush1.msra.mxu0 0.0
        %1282 = vmatprep.subr.mxu0 0.0
        %1283 = vmatpush1.msra.mxu0 0.0
        %1284 = vmatprep.subr.mxu0 0.0
        %1285 = vmatpush1.msra.mxu0 0.0
        %1286 = vmatprep.subr.mxu0 0.0
        %1287 = vmatpush1.msra.mxu0 0.0
        %1288 = vmatprep.subr.mxu0 0.0
        %1289 = vmatpush1.msra.mxu0 0.0
        %1290 = vmatprep.subr.mxu0 0.0
        %1291 = vmatpush1.msra.mxu0 0.0
        %1292 = vmatprep.subr.mxu0 0.0
        %1293 = vmatpush1.msra.mxu0 0.0
        %1294 = vmatprep.subr.mxu0 0.0
        %1295 = vmatpush1.msra.mxu0 %v823
        %1296 = vmatprep.subr.mxu0 0.0
        %1297 = vmatpush1.msra.mxu0 %v822
        %1298 = vmatprep.subr.mxu0 0.0
        %1299 = vmatpush2.msra.mxu0 0.0
        %1300 = vmatprep.subr.mxu0 0.0
        %1301 = vmatpush2.msra.mxu0 0.0
        %1302 = vmatprep.subr.mxu0 0.0
        %1303 = vmatpush2.msra.mxu0 0.0
        %1304 = vmatprep.subr.mxu0 0.0
        %1305 = vmatpush2.msra.mxu0 0.0
        %1306 = vmatprep.subr.mxu0 0.0
        %1307 = vmatpush2.msra.mxu0 0.0
        %1308 = vmatprep.subr.mxu0 0.0
        %1309 = vmatpush2.msra.mxu0 0.0
        %1310 = vmatprep.subr.mxu0 0.0
        %1311 = vmatpush2.msra.mxu0 0.0
        %1312 = vmatprep.subr.mxu0 0.0
        %1313 = vmatpush2.msra.mxu0 0.0
        %1314 = vmatprep.subr.mxu0 0.0
        %1315 = vmatpush2.msra.mxu0 0.0
        %1316 = vmatprep.subr.mxu0 0.0
        %1317 = vmatpush2.msra.mxu0 0.0
        %1318 = vmatprep.subr.mxu0 0.0
        %1319 = vmatpush2.msra.mxu0 0.0
        %1320 = vmatprep.subr.mxu0 0.0
        %1321 = vmatpush2.msra.mxu0 0.0
        %1322 = vmatprep.subr.mxu0 0.0
        %1323 = vmatpush2.msra.mxu0 0.0
        %1324 = vmatprep.subr.mxu0 0.0
        %1325 = vmatpush2.msra.mxu0 0.0
        %1326 = vmatprep.subr.mxu0 0.0
        %1327 = vmatpush2.msra.mxu0 0.0
        %1328 = vmatprep.subr.mxu0 0.0
        %1329 = vmatpush2.msra.mxu0 0.0
        %1330 = vmatprep.mubr.f32.mxu0 0.0
        %1331 = vmatmul.mubr.f32.gmra.mxu0 %v847
        %v1332 = vpop.f32.mrf.mxu0
        %v1333 = vadd.f32 %v829, %v1332
        %v1334 = vpop.f32.mrf.mxu0
        %1335 = vmatprep.mubr.f32.mxu0 0.0
        %1336 = vmatmul.mubr.f32.gmra.mxu0 %v850
        %v1337 = vpop.f32.mrf.mxu0
        %v1338 = vadd.f32 %v834, %v1337
        %v1339 = vpop.f32.mrf.mxu0
        %1340 = vmatprep.mubr.f32.mxu0 0.0
        %1341 = vmatmul.mubr.f32.gmra.mxu0 %v853
        %v1342 = vpop.f32.mrf.mxu0
        %v1343 = vadd.f32 %v839, %v1342
        %v1344 = vpop.f32.mrf.mxu0
        %1345 = vmatprep.mubr.f32.mxu0 0.0
        %1346 = vmatmul.mubr.f32.gmra.mxu0 %v856
        %v1347 = vpop.f32.mrf.mxu0
        %v1348 = vadd.f32 %v844, %v1347
        %v1349 = vpop.f32.mrf.mxu0
        %1350 = vdwg.mxu0
        %v1351 = vmul.f32 %v1333, 0.5
        %v1352 = vmul.f32 %v1338, 0.5
        %v1353 = vmul.f32 %v1343, 0.5
        %v1354 = vmul.f32 %v1348, 0.5
        %v1355 = vmul.f32 %v1333, 0.044715
        %v1356 = vmul.f32 %v1338, 0.044715
        %v1357 = vmul.f32 %v1343, 0.044715
        %v1358 = vmul.f32 %v1348, 0.044715
        %v1359 = vmul.f32 %v1355, %v1333
        %v1360 = vmul.f32 %v1356, %v1338
        %v1361 = vmul.f32 %v1357, %v1343
        %v1362 = vmul.f32 %v1358, %v1348
        %v1363 = vmul.f32 %v1359, %v1333
        %v1364 = vmul.f32 %v1360, %v1338
        %v1365 = vmul.f32 %v1361, %v1343
        %v1366 = vmul.f32 %v1362, %v1348
        %v1367 = vadd.f32 %v1333, %v1363
        %v1368 = vadd.f32 %v1338, %v1364
        %v1369 = vadd.f32 %v1343, %v1365
        %v1370 = vadd.f32 %v1348, %v1366
        %v1371 = vmul.f32 %v1367, 0.7978846
        %v1372 = vmul.f32 %v1368, 0.7978846
        %v1373 = vmul.f32 %v1369, 0.7978846
        %v1374 = vmul.f32 %v1370, 0.7978846
        %v1375 = vtanh.pop %v1371
        %v1376 = vtanh.pop %v1372
        %v1377 = vtanh.pop %v1373
        %v1378 = vtanh.pop %v1374
        %v1379 = vadd.f32 %v1375, 1.0
        %v1380 = vadd.f32 %v1376, 1.0
        %v1381 = vadd.f32 %v1377, 1.0
        %v1382 = vadd.f32 %v1378, 1.0
        %v1383 = vmul.f32 %v1351, %v1379
        %v1384 = vmul.f32 %v1352, %v1380
        %v1385 = vmul.f32 %v1353, %v1381
        %v1386 = vmul.f32 %v1354, %v1382
        %1387 = vmatprep.subr.mxu0 0.0
        %1388 = vmatpush1.msra.mxu0 0.0
        %1389 = vmatprep.subr.mxu0 0.0
        %1390 = vmatpush1.msra.mxu0 0.0
        %1391 = vmatprep.subr.mxu0 0.0
        %1392 = vmatpush1.msra.mxu0 0.0
        %1393 = vmatprep.subr.mxu0 0.0
        %1394 = vmatpush1.msra.mxu0 0.0
        %1395 = vmatprep.subr.mxu0 0.0
        %1396 = vmatpush1.msra.mxu0 0.0
        %1397 = vmatprep.subr.mxu0 0.0
        %1398 = vmatpush1.msra.mxu0 0.0
        %1399 = vmatprep.subr.mxu0 0.0
        %1400 = vmatpush1.msra.mxu0 0.0
        %1401 = vmatprep.subr.mxu0 0.0
        %1402 = vmatpush1.msra.mxu0 0.0
        %1403 = vmatprep.subr.mxu0 0.0
        %1404 = vmatpush1.msra.mxu0 0.0
        %1405 = vmatprep.subr.mxu0 0.0
        %1406 = vmatpush1.msra.mxu0 0.0
        %1407 = vmatprep.subr.mxu0 0.0
        %1408 = vmatpush1.msra.mxu0 0.0
        %1409 = vmatprep.subr.mxu0 0.0
        %1410 = vmatpush1.msra.mxu0 0.0
        %1411 = vmatprep.subr.mxu0 0.0
        %1412 = vmatpush1.msra.mxu0 %v1386
        %1413 = vmatprep.subr.mxu0 0.0
        %1414 = vmatpush1.msra.mxu0 %v1385
        %1415 = vmatprep.subr.mxu0 0.0
        %1416 = vmatpush1.msra.mxu0 %v1384
        %1417 = vmatprep.subr.mxu0 0.0
        %1418 = vmatpush1.msra.mxu0 %v1383
        %1419 = vmatprep.subr.mxu0 0.0
        %1420 = vmatpush2.msra.mxu0 0.0
        %1421 = vmatprep.subr.mxu0 0.0
        %1422 = vmatpush2.msra.mxu0 0.0
        %1423 = vmatprep.subr.mxu0 0.0
        %1424 = vmatpush2.msra.mxu0 0.0
        %1425 = vmatprep.subr.mxu0 0.0
        %1426 = vmatpush2.msra.mxu0 0.0
        %1427 = vmatprep.subr.mxu0 0.0
        %1428 = vmatpush2.msra.mxu0 0.0
        %1429 = vmatprep.subr.mxu0 0.0
        %1430 = vmatpush2.msra.mxu0 0.0
        %1431 = vmatprep.subr.mxu0 0.0
        %1432 = vmatpush2.msra.mxu0 0.0
        %1433 = vmatprep.subr.mxu0 0.0
        %1434 = vmatpush2.msra.mxu0 0.0
        %1435 = vmatprep.subr.mxu0 0.0
        %1436 = vmatpush2.msra.mxu0 0.0
        %1437 = vmatprep.subr.mxu0 0.0
        %1438 = vmatpush2.msra.mxu0 0.0
        %1439 = vmatprep.subr.mxu0 0.0
        %1440 = vmatpush2.msra.mxu0 0.0
        %1441 = vmatprep.subr.mxu0 0.0
        %1442 = vmatpush2.msra.mxu0 0.0
        %1443 = vmatprep.subr.mxu0 0.0
        %1444 = vmatpush2.msra.mxu0 0.0
        %1445 = vmatprep.subr.mxu0 0.0
        %1446 = vmatpush2.msra.mxu0 0.0
        %1447 = vmatprep.subr.mxu0 0.0
        %1448 = vmatpush2.msra.mxu0 0.0
        %1449 = vmatprep.subr.mxu0 0.0
        %1450 = vmatpush2.msra.mxu0 0.0
        %1451 = vmatprep.mubr.f32.mxu0 0.0
        %1452 = vmatmul.mubr.f32.gmra.mxu0 %v990
        %v1453 = vpop.f32.mrf.mxu0
        %v1454 = vadd.f32 %v982, %v1453
        %v1455 = vpop.f32.mrf.mxu0
        %1456 = vmatprep.mubr.f32.mxu0 0.0
        %1457 = vmatmul.mubr.f32.gmra.mxu0 %v993
        %v1458 = vpop.f32.mrf.mxu0
        %v1459 = vadd.f32 %v987, %v1458
        %v1460 = vpop.f32.mrf.mxu0
        %1461 = vdwg.mxu0
        %1462 = vmatprep.subr.mxu0 0.0
        %1463 = vmatpush1.msra.mxu0 0.0
        %1464 = vmatprep.subr.mxu0 0.0
        %1465 = vmatpush1.msra.mxu0 0.0
        %1466 = vmatprep.subr.mxu0 0.0
        %1467 = vmatpush1.msra.mxu0 0.0
        %1468 = vmatprep.subr.mxu0 0.0
        %1469 = vmatpush1.msra.mxu0 0.0
        %1470 = vmatprep.subr.mxu0 0.0
        %1471 = vmatpush1.msra.mxu0 0.0
        %1472 = vmatprep.subr.mxu0 0.0
        %1473 = vmatpush1.msra.mxu0 0.0
        %1474 = vmatprep.subr.mxu0 0.0
        %1475 = vmatpush1.msra.mxu0 0.0
        %1476 = vmatprep.subr.mxu0 0.0
        %1477 = vmatpush1.msra.mxu0 0.0
        %1478 = vmatprep.subr.mxu0 0.0
        %1479 = vmatpush1.msra.mxu0 0.0
        %1480 = vmatprep.subr.mxu0 0.0
        %1481 = vmatpush1.msra.mxu0 0.0
        %1482 = vmatprep.subr.mxu0 0.0
        %1483 = vmatpush1.msra.mxu0 0.0
        %1484 = vmatprep.subr.mxu0 0.0
        %1485 = vmatpush1.msra.mxu0 0.0
        %1486 = vmatprep.subr.mxu0 0.0
        %1487 = vmatpush1.msra.mxu0 0.0
        %1488 = vmatprep.subr.mxu0 0.0
        %1489 = vmatpush1.msra.mxu0 0.0
        %1490 = vmatprep.subr.mxu0 0.0
        %1491 = vmatpush1.msra.mxu0 %v825
        %1492 = vmatprep.subr.mxu0 0.0
        %1493 = vmatpush1.msra.mxu0 %v824
        %1494 = vmatprep.subr.mxu0 0.0
        %1495 = vmatpush2.msra.mxu0 0.0
        %1496 = vmatprep.subr.mxu0 0.0
        %1497 = vmatpush2.msra.mxu0 0.0
        %1498 = vmatprep.subr.mxu0 0.0
        %1499 = vmatpush2.msra.mxu0 0.0
        %1500 = vmatprep.subr.mxu0 0.0
        %1501 = vmatpush2.msra.mxu0 0.0
        %1502 = vmatprep.subr.mxu0 0.0
        %1503 = vmatpush2.msra.mxu0 0.0
        %1504 = vmatprep.subr.mxu0 0.0
        %1505 = vmatpush2.msra.mxu0 0.0
        %1506 = vmatprep.subr.mxu0 0.0
        %1507 = vmatpush2.msra.mxu0 0.0
        %1508 = vmatprep.subr.mxu0 0.0
        %1509 = vmatpush2.msra.mxu0 0.0
        %1510 = vmatprep.subr.mxu0 0.0
        %1511 = vmatpush2.msra.mxu0 0.0
        %1512 = vmatprep.subr.mxu0 0.0
        %1513 = vmatpush2.msra.mxu0 0.0
        %1514 = vmatprep.subr.mxu0 0.0
        %1515 = vmatpush2.msra.mxu0 0.0
        %1516 = vmatprep.subr.mxu0 0.0
        %1517 = vmatpush2.msra.mxu0 0.0
        %1518 = vmatprep.subr.mxu0 0.0
        %1519 = vmatpush2.msra.mxu0 0.0
        %1520 = vmatprep.subr.mxu0 0.0
        %1521 = vmatpush2.msra.mxu0 0.0
        %1522 = vmatprep.subr.mxu0 0.0
        %1523 = vmatpush2.msra.mxu0 0.0
        %1524 = vmatprep.subr.mxu0 0.0
        %1525 = vmatpush2.msra.mxu0 0.0
        %1526 = vmatprep.mubr.f32.mxu0 0.0
        %1527 = vmatmul.mubr.f32.gmra.mxu0 %v847
        %v1528 = vpop.f32.mrf.mxu0
        %v1529 = vadd.f32 %v829, %v1528
        %v1530 = vpop.f32.mrf.mxu0
        %1531 = vmatprep.mubr.f32.mxu0 0.0
        %1532 = vmatmul.mubr.f32.gmra.mxu0 %v850
        %v1533 = vpop.f32.mrf.mxu0
        %v1534 = vadd.f32 %v834, %v1533
        %v1535 = vpop.f32.mrf.mxu0
        %1536 = vmatprep.mubr.f32.mxu0 0.0
        %1537 = vmatmul.mubr.f32.gmra.mxu0 %v853
        %v1538 = vpop.f32.mrf.mxu0
        %v1539 = vadd.f32 %v839, %v1538
        %v1540 = vpop.f32.mrf.mxu0
        %1541 = vmatprep.mubr.f32.mxu0 0.0
        %1542 = vmatmul.mubr.f32.gmra.mxu0 %v856
        %v1543 = vpop.f32.mrf.mxu0
        %v1544 = vadd.f32 %v844, %v1543
        %v1545 = vpop.f32.mrf.mxu0
        %1546 = vdwg.mxu0
        %v1547 = vmul.f32 %v1529, 0.5
        %v1548 = vmul.f32 %v1534, 0.5
        %v1549 = vmul.f32 %v1539, 0.5
        %v1550 = vmul.f32 %v1544, 0.5
        %v1551 = vmul.f32 %v1529, 0.044715
        %v1552 = vmul.f32 %v1534, 0.044715
        %v1553 = vmul.f32 %v1539, 0.044715
        %v1554 = vmul.f32 %v1544, 0.044715
        %v1555 = vmul.f32 %v1551, %v1529
        %v1556 = vmul.f32 %v1552, %v1534
        %v1557 = vmul.f32 %v1553, %v1539
        %v1558 = vmul.f32 %v1554, %v1544
        %v1559 = vmul.f32 %v1555, %v1529
        %v1560 = vmul.f32 %v1556, %v1534
        %v1561 = vmul.f32 %v1557, %v1539
        %v1562 = vmul.f32 %v1558, %v1544
        %v1563 = vadd.f32 %v1529, %v1559
        %v1564 = vadd.f32 %v1534, %v1560
        %v1565 = vadd.f32 %v1539, %v1561
        %v1566 = vadd.f32 %v1544, %v1562
        %v1567 = vmul.f32 %v1563, 0.7978846
        %v1568 = vmul.f32 %v1564, 0.7978846
        %v1569 = vmul.f32 %v1565, 0.7978846
        %v1570 = vmul.f32 %v1566, 0.7978846
        %v1571 = vtanh.pop %v1567
        %v1572 = vtanh.pop %v1568
        %v1573 = vtanh.pop %v1569
        %v1574 = vtanh.pop %v1570
        %v1575 = vadd.f32 %v1571, 1.0
        %v1576 = vadd.f32 %v1572, 1.0
        %v1577 = vadd.f32 %v1573, 1.0
        %v1578 = vadd.f32 %v1574, 1.0
        %v1579 = vmul.f32 %v1547, %v1575
        %v1580 = vmul.f32 %v1548, %v1576
        %v1581 = vmul.f32 %v1549, %v1577
        %v1582 = vmul.f32 %v1550, %v1578
        %1583 = vmatprep.subr.mxu0 0.0
        %1584 = vmatpush1.msra.mxu0 0.0
        %1585 = vmatprep.subr.mxu0 0.0
        %1586 = vmatpush1.msra.mxu0 0.0
        %1587 = vmatprep.subr.mxu0 0.0
        %1588 = vmatpush1.msra.mxu0 0.0
        %1589 = vmatprep.subr.mxu0 0.0
        %1590 = vmatpush1.msra.mxu0 0.0
        %1591 = vmatprep.subr.mxu0 0.0
        %1592 = vmatpush1.msra.mxu0 0.0
        %1593 = vmatprep.subr.mxu0 0.0
        %1594 = vmatpush1.msra.mxu0 0.0
        %1595 = vmatprep.subr.mxu0 0.0
        %1596 = vmatpush1.msra.mxu0 0.0
        %1597 = vmatprep.subr.mxu0 0.0
        %1598 = vmatpush1.msra.mxu0 0.0
        %1599 = vmatprep.subr.mxu0 0.0
        %1600 = vmatpush1.msra.mxu0 0.0
        %1601 = vmatprep.subr.mxu0 0.0
        %1602 = vmatpush1.msra.mxu0 0.0
        %1603 = vmatprep.subr.mxu0 0.0
        %1604 = vmatpush1.msra.mxu0 0.0
        %1605 = vmatprep.subr.mxu0 0.0
        %1606 = vmatpush1.msra.mxu0 0.0
        %1607 = vmatprep.subr.mxu0 0.0
        %1608 = vmatpush1.msra.mxu0 %v1582
        %1609 = vmatprep.subr.mxu0 0.0
        %1610 = vmatpush1.msra.mxu0 %v1581
        %1611 = vmatprep.subr.mxu0 0.0
        %1612 = vmatpush1.msra.mxu0 %v1580
        %1613 = vmatprep.subr.mxu0 0.0
        %1614 = vmatpush1.msra.mxu0 %v1579
        %1615 = vmatprep.subr.mxu0 0.0
        %1616 = vmatpush2.msra.mxu0 0.0
        %1617 = vmatprep.subr.mxu0 0.0
        %1618 = vmatpush2.msra.mxu0 0.0
        %1619 = vmatprep.subr.mxu0 0.0
        %1620 = vmatpush2.msra.mxu0 0.0
        %1621 = vmatprep.subr.mxu0 0.0
        %1622 = vmatpush2.msra.mxu0 0.0
        %1623 = vmatprep.subr.mxu0 0.0
        %1624 = vmatpush2.msra.mxu0 0.0
        %1625 = vmatprep.subr.mxu0 0.0
        %1626 = vmatpush2.msra.mxu0 0.0
        %1627 = vmatprep.subr.mxu0 0.0
        %1628 = vmatpush2.msra.mxu0 0.0
        %1629 = vmatprep.subr.mxu0 0.0
        %1630 = vmatpush2.msra.mxu0 0.0
        %1631 = vmatprep.subr.mxu0 0.0
        %1632 = vmatpush2.msra.mxu0 0.0
        %1633 = vmatprep.subr.mxu0 0.0
        %1634 = vmatpush2.msra.mxu0 0.0
        %1635 = vmatprep.subr.mxu0 0.0
        %1636 = vmatpush2.msra.mxu0 0.0
        %1637 = vmatprep.subr.mxu0 0.0
        %1638 = vmatpush2.msra.mxu0 0.0
        %1639 = vmatprep.subr.mxu0 0.0
        %1640 = vmatpush2.msra.mxu0 0.0
        %1641 = vmatprep.subr.mxu0 0.0
        %1642 = vmatpush2.msra.mxu0 0.0
        %1643 = vmatprep.subr.mxu0 0.0
        %1644 = vmatpush2.msra.mxu0 0.0
        %1645 = vmatprep.subr.mxu0 0.0
        %1646 = vmatpush2.msra.mxu0 0.0
        %1647 = vmatprep.mubr.f32.mxu0 0.0
        %1648 = vmatmul.mubr.f32.gmra.mxu0 %v990
        %v1649 = vpop.f32.mrf.mxu0
        %v1650 = vadd.f32 %v982, %v1649
        %v1651 = vpop.f32.mrf.mxu0
        %1652 = vmatprep.mubr.f32.mxu0 0.0
        %1653 = vmatmul.mubr.f32.gmra.mxu0 %v993
        %v1654 = vpop.f32.mrf.mxu0
        %v1655 = vadd.f32 %v987, %v1654
        %v1656 = vpop.f32.mrf.mxu0
        %1657 = vdwg.mxu0
        %v1658 = vadd.f32 %v675, %v1062
        %v1659 = vadd.f32 %v676, %v1067
        %v1660 = vadd.f32 %v677, %v1258
        %v1661 = vadd.f32 %v678, %v1263
        %v1662 = vadd.f32 %v679, %v1454
        %v1663 = vadd.f32 %v680, %v1459
        %v1664 = vadd.f32 %v681, %v1650
        %v1665 = vadd.f32 %v682, %v1655
        %v1666 = vsel %vm634, %v1658, 0.0
        %1667 = vadd.xlane.f32.xlu0 %v1666
        %v1668 = vpop.xlane.xlu0 %1667
        %v1669 = vsel %vm634, %v1659, 0.0
        %1670 = vadd.xlane.f32.xlu0 %v1669
        %v1671 = vpop.xlane.xlu0 %1670
        %v1672 = vsel %vm634, %v1660, 0.0
        %1673 = vadd.xlane.f32.xlu0 %v1672
        %v1674 = vpop.xlane.xlu0 %1673
        %v1675 = vsel %vm634, %v1661, 0.0
        %1676 = vadd.xlane.f32.xlu0 %v1675
        %v1677 = vpop.xlane.xlu0 %1676
        %v1678 = vsel %vm634, %v1662, 0.0
        %1679 = vadd.xlane.f32.xlu0 %v1678
        %v1680 = vpop.xlane.xlu0 %1679
        %v1681 = vsel %vm634, %v1663, 0.0
        %1682 = vadd.xlane.f32.xlu0 %v1681
        %v1683 = vpop.xlane.xlu0 %1682
        %v1684 = vsel %vm634, %v1664, 0.0
        %1685 = vadd.xlane.f32.xlu0 %v1684
        %v1686 = vpop.xlane.xlu0 %1685
        %v1687 = vsel %vm634, %v1665, 0.0
        %1688 = vadd.xlane.f32.xlu0 %v1687
        %v1689 = vpop.xlane.xlu0 %1688
        %v1690 = vmul.f32 %v1668, %v721
        %v1691 = vmul.f32 %v1671, %v721
        %v1692 = vmul.f32 %v1674, %v721
        %v1693 = vmul.f32 %v1677, %v721
        %v1694 = vmul.f32 %v1680, %v721
        %v1695 = vmul.f32 %v1683, %v721
        %v1696 = vmul.f32 %v1686, %v721
        %v1697 = vmul.f32 %v1689, %v721
        %v1698 = vsub.f32 %v1658, %v1690
        %v1699 = vsub.f32 %v1659, %v1691
        %v1700 = vsub.f32 %v1660, %v1692
        %v1701 = vsub.f32 %v1661, %v1693
        %v1702 = vsub.f32 %v1662, %v1694
        %v1703 = vsub.f32 %v1663, %v1695
        %v1704 = vsub.f32 %v1664, %v1696
        %v1705 = vsub.f32 %v1665, %v1697
        %v1706 = vmul.f32 %v1698, %v1698
        %v1707 = vmul.f32 %v1699, %v1699
        %v1708 = vmul.f32 %v1700, %v1700
        %v1709 = vmul.f32 %v1701, %v1701
        %v1710 = vmul.f32 %v1702, %v1702
        %v1711 = vmul.f32 %v1703, %v1703
        %v1712 = vmul.f32 %v1704, %v1704
        %v1713 = vmul.f32 %v1705, %v1705
        %v1714 = vsel %vm634, %v1706, 0.0
        %1715 = vadd.xlane.f32.xlu0 %v1714
        %v1716 = vpop.xlane.xlu0 %1715
        %v1717 = vsel %vm634, %v1707, 0.0
        %1718 = vadd.xlane.f32.xlu0 %v1717
        %v1719 = vpop.xlane.xlu0 %1718
        %v1720 = vsel %vm634, %v1708, 0.0
        %1721 = vadd.xlane.f32.xlu0 %v1720
        %v1722 = vpop.xlane.xlu0 %1721
        %v1723 = vsel %vm634, %v1709, 0.0
        %1724 = vadd.xlane.f32.xlu0 %v1723
        %v1725 = vpop.xlane.xlu0 %1724
        %v1726 = vsel %vm634, %v1710, 0.0
        %1727 = vadd.xlane.f32.xlu0 %v1726
        %v1728 = vpop.xlane.xlu0 %1727
        %v1729 = vsel %vm634, %v1711, 0.0
        %1730 = vadd.xlane.f32.xlu0 %v1729
        %v1731 = vpop.xlane.xlu0 %1730
        %v1732 = vsel %vm634, %v1712, 0.0
        %1733 = vadd.xlane.f32.xlu0 %v1732
        %v1734 = vpop.xlane.xlu0 %1733
        %v1735 = vsel %vm634, %v1713, 0.0
        %1736 = vadd.xlane.f32.xlu0 %v1735
        %v1737 = vpop.xlane.xlu0 %1736
        %v1738 = vmul.f32 %v1716, %v721
        %v1739 = vmul.f32 %v1719, %v721
        %v1740 = vmul.f32 %v1722, %v721
        %v1741 = vmul.f32 %v1725, %v721
        %v1742 = vmul.f32 %v1728, %v721
        %v1743 = vmul.f32 %v1731, %v721
        %v1744 = vmul.f32 %v1734, %v721
        %v1745 = vmul.f32 %v1737, %v721
        %v1746 = vadd.f32 %v1738, 1e-05
        %v1747 = vadd.f32 %v1739, 1e-05
        %v1748 = vadd.f32 %v1740, 1e-05
        %v1749 = vadd.f32 %v1741, 1e-05
        %v1750 = vadd.f32 %v1742, 1e-05
        %v1751 = vadd.f32 %v1743, 1e-05
        %v1752 = vadd.f32 %v1744, 1e-05
        %v1753 = vadd.f32 %v1745, 1e-05
        %v1754 = vrsqrt.pop %v1746
        %v1755 = vrsqrt.pop %v1747
        %v1756 = vrsqrt.pop %v1748
        %v1757 = vrsqrt.pop %v1749
        %v1758 = vrsqrt.pop %v1750
        %v1759 = vrsqrt.pop %v1751
        %v1760 = vrsqrt.pop %v1752
        %v1761 = vrsqrt.pop %v1753
        %v1762 = vmul.f32 %v1698, %v1754
        %v1763 = vmul.f32 %v1699, %v1755
        %v1764 = vmul.f32 %v1700, %v1756
        %v1765 = vmul.f32 %v1701, %v1757
        %v1766 = vmul.f32 %v1702, %v1758
        %v1767 = vmul.f32 %v1703, %v1759
        %v1768 = vmul.f32 %v1704, %v1760
        %v1769 = vmul.f32 %v1705, %v1761
        %v1770 = vlaneseq
        %v1771 = vshrl.u32 %v1770, 7
        %v1772 = vsub.s32 1, %v1771
        %v1773 = vrot.slane %v683, %v1772
        %v1774 = vmul.f32 %v1762, %v1773
        %v1775 = vmul.f32 %v1763, %v1773
        %v1776 = vmul.f32 %v1764, %v1773
        %v1777 = vmul.f32 %v1765, %v1773
        %v1778 = vmul.f32 %v1766, %v1773
        %v1779 = vmul.f32 %v1767, %v1773
        %v1780 = vmul.f32 %v1768, %v1773
        %v1781 = vmul.f32 %v1769, %v1773
        %v1782 = vlaneseq
        %v1783 = vshrl.u32 %v1782, 7
        %v1784 = vsub.s32 1, %v1783
        %v1785 = vrot.slane %v684, %v1784
        %v1786 = vadd.f32 %v1774, %v1785
        %v1787 = vadd.f32 %v1775, %v1785
        %v1788 = vadd.f32 %v1776, %v1785
        %v1789 = vadd.f32 %v1777, %v1785
        %v1790 = vadd.f32 %v1778, %v1785
        %v1791 = vadd.f32 %v1779, %v1785
        %v1792 = vadd.f32 %v1780, %v1785
        %v1793 = vadd.f32 %v1781, %v1785
        %v1794 = vld [vmem:[%s9] sm:$0xff]
        %v1795 = vld [vmem:[%s9 + $0x8] sm:$0xff]
        %v1796 = vld [vmem:[%s9 + $0x10] sm:$0xff]
        %v1797 = vld [vmem:[%s9 + $0x18] sm:$0xff]
        %v1798 = vld [vmem:[%s10] sm:$0x1]
        %v1800 = vlaneseq
        %v1801 = vshrl.u32 %v1800, 7
        %v1802 = vsub.s32 0, %v1801
        %v1803 = vrot.slane %v1798, %v1802
        %v1806 = vsel %vm634, %v1786, 0
        %v1809 = vsel %vm634, %v1787, 0
        %v1812 = vsel %vm634, %v1788, 0
        %v1815 = vsel %vm634, %v1789, 0
        %v1818 = vsel %vm634, %v1790, 0
        %v1821 = vsel %vm634, %v1791, 0
        %v1824 = vsel %vm634, %v1792, 0
        %v1827 = vsel %vm634, %v1793, 0
        %1829 = vmatprep.subr.mxu0 0.0
        %1830 = vmatpush1.msra.mxu0 0.0
        %1831 = vmatprep.subr.mxu0 0.0
        %1832 = vmatpush1.msra.mxu0 0.0
        %1833 = vmatprep.subr.mxu0 0.0
        %1834 = vmatpush1.msra.mxu0 0.0
        %1835 = vmatprep.subr.mxu0 0.0
        %1836 = vmatpush1.msra.mxu0 0.0
        %1837 = vmatprep.subr.mxu0 0.0
        %1838 = vmatpush1.msra.mxu0 0.0
        %1839 = vmatprep.subr.mxu0 0.0
        %1840 = vmatpush1.msra.mxu0 0.0
        %1841 = vmatprep.subr.mxu0 0.0
        %1842 = vmatpush1.msra.mxu0 0.0
        %1843 = vmatprep.subr.mxu0 0.0
        %1844 = vmatpush1.msra.mxu0 0.0
        %1845 = vmatprep.subr.mxu0 0.0
        %1846 = vmatpush1.msra.mxu0 0.0
        %1847 = vmatprep.subr.mxu0 0.0
        %1848 = vmatpush1.msra.mxu0 0.0
        %1849 = vmatprep.subr.mxu0 0.0
        %1850 = vmatpush1.msra.mxu0 0.0
        %1851 = vmatprep.subr.mxu0 0.0
        %1852 = vmatpush1.msra.mxu0 0.0
        %1853 = vmatprep.subr.mxu0 0.0
        %1854 = vmatpush1.msra.mxu0 %v1797
        %1855 = vmatprep.subr.mxu0 0.0
        %1856 = vmatpush1.msra.mxu0 %v1796
        %1857 = vmatprep.subr.mxu0 0.0
        %1858 = vmatpush1.msra.mxu0 %v1795
        %1859 = vmatprep.subr.mxu0 0.0
        %1860 = vmatpush1.msra.mxu0 %v1794
        %1861 = vmatprep.subr.mxu0 0.0
        %1862 = vmatpush2.msra.mxu0 0.0
        %1863 = vmatprep.subr.mxu0 0.0
        %1864 = vmatpush2.msra.mxu0 0.0
        %1865 = vmatprep.subr.mxu0 0.0
        %1866 = vmatpush2.msra.mxu0 0.0
        %1867 = vmatprep.subr.mxu0 0.0
        %1868 = vmatpush2.msra.mxu0 0.0
        %1869 = vmatprep.subr.mxu0 0.0
        %1870 = vmatpush2.msra.mxu0 0.0
        %1871 = vmatprep.subr.mxu0 0.0
        %1872 = vmatpush2.msra.mxu0 0.0
        %1873 = vmatprep.subr.mxu0 0.0
        %1874 = vmatpush2.msra.mxu0 0.0
        %1875 = vmatprep.subr.mxu0 0.0
        %1876 = vmatpush2.msra.mxu0 0.0
        %1877 = vmatprep.subr.mxu0 0.0
        %1878 = vmatpush2.msra.mxu0 0.0
        %1879 = vmatprep.subr.mxu0 0.0
        %1880 = vmatpush2.msra.mxu0 0.0
        %1881 = vmatprep.subr.mxu0 0.0
        %1882 = vmatpush2.msra.mxu0 0.0
        %1883 = vmatprep.subr.mxu0 0.0
        %1884 = vmatpush2.msra.mxu0 0.0
        %1885 = vmatprep.subr.mxu0 0.0
        %1886 = vmatpush2.msra.mxu0 0.0
        %1887 = vmatprep.subr.mxu0 0.0
        %1888 = vmatpush2.msra.mxu0 0.0
        %1889 = vmatprep.subr.mxu0 0.0
        %1890 = vmatpush2.msra.mxu0 0.0
        %1891 = vmatprep.subr.mxu0 0.0
        %1892 = vmatpush2.msra.mxu0 0.0
        %1893 = vmatprep.mubr.f32.mxu0 0.0
        %1894 = vmatmul.mubr.f32.gmra.mxu0 %v1806
        %v1895 = vpop.f32.mrf.mxu0
        %v1896 = vadd.f32 %v1803, %v1895
        %v1897 = vpop.f32.mrf.mxu0
        %1898 = vmatprep.mubr.f32.mxu0 0.0
        %1899 = vmatmul.mubr.f32.gmra.mxu0 %v1809
        %v1900 = vpop.f32.mrf.mxu0
        %v1901 = vadd.f32 %v1803, %v1900
        %v1902 = vpop.f32.mrf.mxu0
        %1903 = vmatprep.mubr.f32.mxu0 0.0
        %1904 = vmatmul.mubr.f32.gmra.mxu0 %v1812
        %v1905 = vpop.f32.mrf.mxu0
        %v1906 = vadd.f32 %v1803, %v1905
        %v1907 = vpop.f32.mrf.mxu0
        %1908 = vmatprep.mubr.f32.mxu0 0.0
        %1909 = vmatmul.mubr.f32.gmra.mxu0 %v1815
        %v1910 = vpop.f32.mrf.mxu0
        %v1911 = vadd.f32 %v1803, %v1910
        %v1912 = vpop.f32.mrf.mxu0
        %1913 = vmatprep.mubr.f32.mxu0 0.0
        %1914 = vmatmul.mubr.f32.gmra.mxu0 %v1818
        %v1915 = vpop.f32.mrf.mxu0
        %v1916 = vadd.f32 %v1803, %v1915
        %v1917 = vpop.f32.mrf.mxu0
        %1918 = vmatprep.mubr.f32.mxu0 0.0
        %1919 = vmatmul.mubr.f32.gmra.mxu0 %v1821
        %v1920 = vpop.f32.mrf.mxu0
        %v1921 = vadd.f32 %v1803, %v1920
        %v1922 = vpop.f32.mrf.mxu0
        %1923 = vmatprep.mubr.f32.mxu0 0.0
        %1924 = vmatmul.mubr.f32.gmra.mxu0 %v1824
        %v1925 = vpop.f32.mrf.mxu0
        %v1926 = vadd.f32 %v1803, %v1925
        %v1927 = vpop.f32.mrf.mxu0
        %1928 = vmatprep.mubr.f32.mxu0 0.0
        %1929 = vmatmul.mubr.f32.gmra.mxu0 %v1827
        %v1930 = vpop.f32.mrf.mxu0
        %v1931 = vadd.f32 %v1803, %v1930
        %v1932 = vpop.f32.mrf.mxu0
        %1933 = vdwg.mxu0
        %v1934 = vmul.f32 %v1896, 0.5
        %v1935 = vmul.f32 %v1901, 0.5
        %v1936 = vmul.f32 %v1906, 0.5
        %v1937 = vmul.f32 %v1911, 0.5
        %v1938 = vmul.f32 %v1916, 0.5
        %v1939 = vmul.f32 %v1921, 0.5
        %v1940 = vmul.f32 %v1926, 0.5
        %v1941 = vmul.f32 %v1931, 0.5
        %v1942 = vmul.f32 %v1896, 0.044715
        %v1943 = vmul.f32 %v1901, 0.044715
        %v1944 = vmul.f32 %v1906, 0.044715
        %v1945 = vmul.f32 %v1911, 0.044715
        %v1946 = vmul.f32 %v1916, 0.044715
        %v1947 = vmul.f32 %v1921, 0.044715
        %v1948 = vmul.f32 %v1926, 0.044715
        %v1949 = vmul.f32 %v1931, 0.044715
        %v1950 = vmul.f32 %v1942, %v1896
        %v1951 = vmul.f32 %v1943, %v1901
        %v1952 = vmul.f32 %v1944, %v1906
        %v1953 = vmul.f32 %v1945, %v1911
        %v1954 = vmul.f32 %v1946, %v1916
        %v1955 = vmul.f32 %v1947, %v1921
        %v1956 = vmul.f32 %v1948, %v1926
        %v1957 = vmul.f32 %v1949, %v1931
        %v1958 = vmul.f32 %v1950, %v1896
        %v1959 = vmul.f32 %v1951, %v1901
        %v1960 = vmul.f32 %v1952, %v1906
        %v1961 = vmul.f32 %v1953, %v1911
        %v1962 = vmul.f32 %v1954, %v1916
        %v1963 = vmul.f32 %v1955, %v1921
        %v1964 = vmul.f32 %v1956, %v1926
        %v1965 = vmul.f32 %v1957, %v1931
        %v1966 = vadd.f32 %v1896, %v1958
        %v1967 = vadd.f32 %v1901, %v1959
        %v1968 = vadd.f32 %v1906, %v1960
        %v1969 = vadd.f32 %v1911, %v1961
        %v1970 = vadd.f32 %v1916, %v1962
        %v1971 = vadd.f32 %v1921, %v1963
        %v1972 = vadd.f32 %v1926, %v1964
        %v1973 = vadd.f32 %v1931, %v1965
        %v1974 = vmul.f32 %v1966, 0.7978846
        %v1975 = vmul.f32 %v1967, 0.7978846
        %v1976 = vmul.f32 %v1968, 0.7978846
        %v1977 = vmul.f32 %v1969, 0.7978846
        %v1978 = vmul.f32 %v1970, 0.7978846
        %v1979 = vmul.f32 %v1971, 0.7978846
        %v1980 = vmul.f32 %v1972, 0.7978846
        %v1981 = vmul.f32 %v1973, 0.7978846
        %v1982 = vtanh.pop %v1974
        %v1983 = vtanh.pop %v1975
        %v1984 = vtanh.pop %v1976
        %v1985 = vtanh.pop %v1977
        %v1986 = vtanh.pop %v1978
        %v1987 = vtanh.pop %v1979
        %v1988 = vtanh.pop %v1980
        %v1989 = vtanh.pop %v1981
        %v1990 = vadd.f32 %v1982, 1.0
        %v1991 = vadd.f32 %v1983, 1.0
        %v1992 = vadd.f32 %v1984, 1.0
        %v1993 = vadd.f32 %v1985, 1.0
        %v1994 = vadd.f32 %v1986, 1.0
        %v1995 = vadd.f32 %v1987, 1.0
        %v1996 = vadd.f32 %v1988, 1.0
        %v1997 = vadd.f32 %v1989, 1.0
        %v1998 = vmul.f32 %v1934, %v1990
        %v1999 = vmul.f32 %v1935, %v1991
        %v2000 = vmul.f32 %v1936, %v1992
        %v2001 = vmul.f32 %v1937, %v1993
        %v2002 = vmul.f32 %v1938, %v1994
        %v2003 = vmul.f32 %v1939, %v1995
        %v2004 = vmul.f32 %v1940, %v1996
        %v2005 = vmul.f32 %v1941, %v1997
        %v2006 = vld [vmem:[%s11] sm:$0xff]
        %v2007 = vld [vmem:[%s11 + $0x8] sm:$0xff]
        %v2008 = vld [vmem:[%s11 + $0x10] sm:$0xff]
        %v2009 = vld [vmem:[%s11 + $0x18] sm:$0xff]
        %v2010 = vld [vmem:[%s11 + $0x20] sm:$0xff]
        %v2011 = vld [vmem:[%s11 + $0x28] sm:$0xff]
        %v2012 = vld [vmem:[%s11 + $0x30] sm:$0xff]
        %v2013 = vld [vmem:[%s11 + $0x38] sm:$0xff]
        %v2014 = vld [vmem:[%s12] sm:$0x1]
        %v2016 = vlaneseq
        %v2017 = vshrl.u32 %v2016, 7
        %v2018 = vsub.s32 0, %v2017
        %v2019 = vrot.slane %v2014, %v2018
        %vm2021 = vcmask 523264
        %v2023 = vsel %vm2021, %v1998, 0
        %v2026 = vsel %vm2021, %v1999, 0
        %v2029 = vsel %vm2021, %v2000, 0
        %v2032 = vsel %vm2021, %v2001, 0
        %v2035 = vsel %vm2021, %v2002, 0
        %v2038 = vsel %vm2021, %v2003, 0
        %v2041 = vsel %vm2021, %v2004, 0
        %v2044 = vsel %vm2021, %v2005, 0
        %2046 = vmatprep.subr.mxu0 0.0
        %2047 = vmatpush1.msra.mxu0 0.0
        %2048 = vmatprep.subr.mxu0 0.0
        %2049 = vmatpush1.msra.mxu0 0.0
        %2050 = vmatprep.subr.mxu0 0.0
        %2051 = vmatpush1.msra.mxu0 0.0
        %2052 = vmatprep.subr.mxu0 0.0
        %2053 = vmatpush1.msra.mxu0 0.0
        %2054 = vmatprep.subr.mxu0 0.0
        %2055 = vmatpush1.msra.mxu0 0.0
        %2056 = vmatprep.subr.mxu0 0.0
        %2057 = vmatpush1.msra.mxu0 0.0
        %2058 = vmatprep.subr.mxu0 0.0
        %2059 = vmatpush1.msra.mxu0 0.0
        %2060 = vmatprep.subr.mxu0 0.0
        %2061 = vmatpush1.msra.mxu0 0.0
        %2062 = vmatprep.subr.mxu0 0.0
        %2063 = vmatpush1.msra.mxu0 %v2013
        %2064 = vmatprep.subr.mxu0 0.0
        %2065 = vmatpush1.msra.mxu0 %v2012
        %2066 = vmatprep.subr.mxu0 0.0
        %2067 = vmatpush1.msra.mxu0 %v2011
        %2068 = vmatprep.subr.mxu0 0.0
        %2069 = vmatpush1.msra.mxu0 %v2010
        %2070 = vmatprep.subr.mxu0 0.0
        %2071 = vmatpush1.msra.mxu0 %v2009
        %2072 = vmatprep.subr.mxu0 0.0
        %2073 = vmatpush1.msra.mxu0 %v2008
        %2074 = vmatprep.subr.mxu0 0.0
        %2075 = vmatpush1.msra.mxu0 %v2007
        %2076 = vmatprep.subr.mxu0 0.0
        %2077 = vmatpush1.msra.mxu0 %v2006
        %2078 = vmatprep.subr.mxu0 0.0
        %2079 = vmatpush2.msra.mxu0 0.0
        %2080 = vmatprep.subr.mxu0 0.0
        %2081 = vmatpush2.msra.mxu0 0.0
        %2082 = vmatprep.subr.mxu0 0.0
        %2083 = vmatpush2.msra.mxu0 0.0
        %2084 = vmatprep.subr.mxu0 0.0
        %2085 = vmatpush2.msra.mxu0 0.0
        %2086 = vmatprep.subr.mxu0 0.0
        %2087 = vmatpush2.msra.mxu0 0.0
        %2088 = vmatprep.subr.mxu0 0.0
        %2089 = vmatpush2.msra.mxu0 0.0
        %2090 = vmatprep.subr.mxu0 0.0
        %2091 = vmatpush2.msra.mxu0 0.0
        %2092 = vmatprep.subr.mxu0 0.0
        %2093 = vmatpush2.msra.mxu0 0.0
        %2094 = vmatprep.subr.mxu0 0.0
        %2095 = vmatpush2.msra.mxu0 0.0
        %2096 = vmatprep.subr.mxu0 0.0
        %2097 = vmatpush2.msra.mxu0 0.0
        %2098 = vmatprep.subr.mxu0 0.0
        %2099 = vmatpush2.msra.mxu0 0.0
        %2100 = vmatprep.subr.mxu0 0.0
        %2101 = vmatpush2.msra.mxu0 0.0
        %2102 = vmatprep.subr.mxu0 0.0
        %2103 = vmatpush2.msra.mxu0 0.0
        %2104 = vmatprep.subr.mxu0 0.0
        %2105 = vmatpush2.msra.mxu0 0.0
        %2106 = vmatprep.subr.mxu0 0.0
        %2107 = vmatpush2.msra.mxu0 0.0
        %2108 = vmatprep.subr.mxu0 0.0
        %2109 = vmatpush2.msra.mxu0 0.0
        %2110 = vmatprep.mubr.f32.mxu0 0.0
        %2111 = vmatmul.mubr.f32.gmra.mxu0 %v2023
        %v2112 = vpop.f32.mrf.mxu0
        %v2113 = vadd.f32 %v2019, %v2112
        %v2114 = vpop.f32.mrf.mxu0
        %2115 = vmatprep.mubr.f32.mxu0 0.0
        %2116 = vmatmul.mubr.f32.gmra.mxu0 %v2026
        %v2117 = vpop.f32.mrf.mxu0
        %v2118 = vadd.f32 %v2019, %v2117
        %v2119 = vpop.f32.mrf.mxu0
        %2120 = vmatprep.mubr.f32.mxu0 0.0
        %2121 = vmatmul.mubr.f32.gmra.mxu0 %v2029
        %v2122 = vpop.f32.mrf.mxu0
        %v2123 = vadd.f32 %v2019, %v2122
        %v2124 = vpop.f32.mrf.mxu0
        %2125 = vmatprep.mubr.f32.mxu0 0.0
        %2126 = vmatmul.mubr.f32.gmra.mxu0 %v2032
        %v2127 = vpop.f32.mrf.mxu0
        %v2128 = vadd.f32 %v2019, %v2127
        %v2129 = vpop.f32.mrf.mxu0
        %2130 = vmatprep.mubr.f32.mxu0 0.0
        %2131 = vmatmul.mubr.f32.gmra.mxu0 %v2035
        %v2132 = vpop.f32.mrf.mxu0
        %v2133 = vadd.f32 %v2019, %v2132
        %v2134 = vpop.f32.mrf.mxu0
        %2135 = vmatprep.mubr.f32.mxu0 0.0
        %2136 = vmatmul.mubr.f32.gmra.mxu0 %v2038
        %v2137 = vpop.f32.mrf.mxu0
        %v2138 = vadd.f32 %v2019, %v2137
        %v2139 = vpop.f32.mrf.mxu0
        %2140 = vmatprep.mubr.f32.mxu0 0.0
        %2141 = vmatmul.mubr.f32.gmra.mxu0 %v2041
        %v2142 = vpop.f32.mrf.mxu0
        %v2143 = vadd.f32 %v2019, %v2142
        %v2144 = vpop.f32.mrf.mxu0
        %2145 = vmatprep.mubr.f32.mxu0 0.0
        %2146 = vmatmul.mubr.f32.gmra.mxu0 %v2044
        %v2147 = vpop.f32.mrf.mxu0
        %v2148 = vadd.f32 %v2019, %v2147
        %v2149 = vpop.f32.mrf.mxu0
        %2150 = vdwg.mxu0
        %v2151 = vadd.f32 %v1658, %v2113
        %v2152 = vadd.f32 %v1659, %v2118
        %v2153 = vadd.f32 %v1660, %v2123
        %v2154 = vadd.f32 %v1661, %v2128
        %v2155 = vadd.f32 %v1662, %v2133
        %v2156 = vadd.f32 %v1663, %v2138
        %v2157 = vadd.f32 %v1664, %v2143
        %v2158 = vadd.f32 %v1665, %v2148
        %v2159 = vmul.f32 %v2151, %v2151
        %v2160 = vmul.f32 %v2152, %v2152
        %v2161 = vmul.f32 %v2153, %v2153
        %v2162 = vmul.f32 %v2154, %v2154
        %v2163 = vmul.f32 %v2155, %v2155
        %v2164 = vmul.f32 %v2156, %v2156
        %v2165 = vmul.f32 %v2157, %v2157
        %v2166 = vmul.f32 %v2158, %v2158
        %v2167 = vsel %vm634, %v2159, 0.0
        %2168 = vadd.xlane.f32.xlu0 %v2167
        %v2169 = vpop.xlane.xlu0 %2168
        %v2170 = vsel %vm634, %v2160, 0.0
        %2171 = vadd.xlane.f32.xlu0 %v2170
        %v2172 = vpop.xlane.xlu0 %2171
        %v2173 = vsel %vm634, %v2161, 0.0
        %2174 = vadd.xlane.f32.xlu0 %v2173
        %v2175 = vpop.xlane.xlu0 %2174
        %v2176 = vsel %vm634, %v2162, 0.0
        %2177 = vadd.xlane.f32.xlu0 %v2176
        %v2178 = vpop.xlane.xlu0 %2177
        %v2179 = vsel %vm634, %v2163, 0.0
        %2180 = vadd.xlane.f32.xlu0 %v2179
        %v2181 = vpop.xlane.xlu0 %2180
        %v2182 = vsel %vm634, %v2164, 0.0
        %2183 = vadd.xlane.f32.xlu0 %v2182
        %v2184 = vpop.xlane.xlu0 %2183
        %v2185 = vsel %vm634, %v2165, 0.0
        %2186 = vadd.xlane.f32.xlu0 %v2185
        %v2187 = vpop.xlane.xlu0 %2186
        %v2188 = vsel %vm634, %v2166, 0.0
        %2189 = vadd.xlane.f32.xlu0 %v2188
        %v2190 = vpop.xlane.xlu0 %2189
        %v2191 = vadd.f32 %v2169, 0.0001
        %v2192 = vadd.f32 %v2172, 0.0001
        %v2193 = vadd.f32 %v2175, 0.0001
        %v2194 = vadd.f32 %v2178, 0.0001
        %v2195 = vadd.f32 %v2181, 0.0001
        %v2196 = vadd.f32 %v2184, 0.0001
        %v2197 = vadd.f32 %v2187, 0.0001
        %v2198 = vadd.f32 %v2190, 0.0001
        %v2199 = vrsqrt.pop %v2191
        %v2200 = vrsqrt.pop %v2192
        %v2201 = vrsqrt.pop %v2193
        %v2202 = vrsqrt.pop %v2194
        %v2203 = vrsqrt.pop %v2195
        %v2204 = vrsqrt.pop %v2196
        %v2205 = vrsqrt.pop %v2197
        %v2206 = vrsqrt.pop %v2198
        %v2207 = vmul.f32 %v2151, %v2199
        %v2208 = vmul.f32 %v2152, %v2200
        %v2209 = vmul.f32 %v2153, %v2201
        %v2210 = vmul.f32 %v2154, %v2202
        %v2211 = vmul.f32 %v2155, %v2203
        %v2212 = vmul.f32 %v2156, %v2204
        %v2213 = vmul.f32 %v2157, %v2205
        %v2214 = vmul.f32 %v2158, %v2206
        %2215 = vst.msk [vmem:[%s458] sm:$0xff] %vm634, %v2207
        %2216 = vst.msk [vmem:[%s458 + $0x8] sm:$0xff] %vm634, %v2208
        %2217 = vst.msk [vmem:[%s458 + $0x10] sm:$0xff] %vm634, %v2209
        %2218 = vst.msk [vmem:[%s458 + $0x18] sm:$0xff] %vm634, %v2210
        %2219 = vst.msk [vmem:[%s458 + $0x20] sm:$0xff] %vm634, %v2211
        %2220 = vst.msk [vmem:[%s458 + $0x28] sm:$0xff] %vm634, %v2212
        %2221 = vst.msk [vmem:[%s458 + $0x30] sm:$0xff] %vm634, %v2213
        %2222 = vst.msk [vmem:[%s458 + $0x38] sm:$0xff] %vm634, %v2214
        %s2223 = scalar_lea.vmem %s3, 2
        %v2224 = vld [vmem:[%s2223] sm:$0x3]
        %s2225 = scalar_lea.vmem %s4, 2
        %v2226 = vld [vmem:[%s2225] sm:$0x3]
        %s2227 = scalar_lea.vmem %s5, 32
        %v2228 = vld [vmem:[%s2227] sm:$0xff]
        %v2229 = vld [vmem:[%s2227 + $0x8] sm:$0xff]
        %v2230 = vld [vmem:[%s2227 + $0x10] sm:$0xff]
        %v2231 = vld [vmem:[%s2227 + $0x18] sm:$0xff]
        %s2232 = scalar_lea.vmem %s6, 32
        %v2233 = vld [vmem:[%s2232] sm:$0xff]
        %v2234 = vld [vmem:[%s2232 + $0x8] sm:$0xff]
        %v2235 = vld [vmem:[%s2232 + $0x10] sm:$0xff]
        %v2236 = vld [vmem:[%s2232 + $0x18] sm:$0xff]
        %s2237 = scalar_lea.vmem %s7, 16
        %v2238 = vld [vmem:[%s2237] sm:$0xff]
        %v2239 = vld [vmem:[%s2237 + $0x8] sm:$0xff]
        %s2240 = scalar_lea.vmem %s8, 16
        %v2241 = vld [vmem:[%s2240] sm:$0xff]
        %v2242 = vld [vmem:[%s2240 + $0x8] sm:$0xff]
        %v2243 = vsel %vm634, %v2207, 0.0
        %2244 = vadd.xlane.f32.xlu0 %v2243
        %v2245 = vpop.xlane.xlu0 %2244
        %v2246 = vsel %vm634, %v2208, 0.0
        %2247 = vadd.xlane.f32.xlu0 %v2246
        %v2248 = vpop.xlane.xlu0 %2247
        %v2249 = vsel %vm634, %v2209, 0.0
        %2250 = vadd.xlane.f32.xlu0 %v2249
        %v2251 = vpop.xlane.xlu0 %2250
        %v2252 = vsel %vm634, %v2210, 0.0
        %2253 = vadd.xlane.f32.xlu0 %v2252
        %v2254 = vpop.xlane.xlu0 %2253
        %v2255 = vsel %vm634, %v2211, 0.0
        %2256 = vadd.xlane.f32.xlu0 %v2255
        %v2257 = vpop.xlane.xlu0 %2256
        %v2258 = vsel %vm634, %v2212, 0.0
        %2259 = vadd.xlane.f32.xlu0 %v2258
        %v2260 = vpop.xlane.xlu0 %2259
        %v2261 = vsel %vm634, %v2213, 0.0
        %2262 = vadd.xlane.f32.xlu0 %v2261
        %v2263 = vpop.xlane.xlu0 %2262
        %v2264 = vsel %vm634, %v2214, 0.0
        %2265 = vadd.xlane.f32.xlu0 %v2264
        %v2266 = vpop.xlane.xlu0 %2265
        %v2267 = vmul.f32 %v2245, %v721
        %v2268 = vmul.f32 %v2248, %v721
        %v2269 = vmul.f32 %v2251, %v721
        %v2270 = vmul.f32 %v2254, %v721
        %v2271 = vmul.f32 %v2257, %v721
        %v2272 = vmul.f32 %v2260, %v721
        %v2273 = vmul.f32 %v2263, %v721
        %v2274 = vmul.f32 %v2266, %v721
        %v2275 = vsub.f32 %v2207, %v2267
        %v2276 = vsub.f32 %v2208, %v2268
        %v2277 = vsub.f32 %v2209, %v2269
        %v2278 = vsub.f32 %v2210, %v2270
        %v2279 = vsub.f32 %v2211, %v2271
        %v2280 = vsub.f32 %v2212, %v2272
        %v2281 = vsub.f32 %v2213, %v2273
        %v2282 = vsub.f32 %v2214, %v2274
        %v2283 = vmul.f32 %v2275, %v2275
        %v2284 = vmul.f32 %v2276, %v2276
        %v2285 = vmul.f32 %v2277, %v2277
        %v2286 = vmul.f32 %v2278, %v2278
        %v2287 = vmul.f32 %v2279, %v2279
        %v2288 = vmul.f32 %v2280, %v2280
        %v2289 = vmul.f32 %v2281, %v2281
        %v2290 = vmul.f32 %v2282, %v2282
        %v2291 = vsel %vm634, %v2283, 0.0
        %2292 = vadd.xlane.f32.xlu0 %v2291
        %v2293 = vpop.xlane.xlu0 %2292
        %v2294 = vsel %vm634, %v2284, 0.0
        %2295 = vadd.xlane.f32.xlu0 %v2294
        %v2296 = vpop.xlane.xlu0 %2295
        %v2297 = vsel %vm634, %v2285, 0.0
        %2298 = vadd.xlane.f32.xlu0 %v2297
        %v2299 = vpop.xlane.xlu0 %2298
        %v2300 = vsel %vm634, %v2286, 0.0
        %2301 = vadd.xlane.f32.xlu0 %v2300
        %v2302 = vpop.xlane.xlu0 %2301
        %v2303 = vsel %vm634, %v2287, 0.0
        %2304 = vadd.xlane.f32.xlu0 %v2303
        %v2305 = vpop.xlane.xlu0 %2304
        %v2306 = vsel %vm634, %v2288, 0.0
        %2307 = vadd.xlane.f32.xlu0 %v2306
        %v2308 = vpop.xlane.xlu0 %2307
        %v2309 = vsel %vm634, %v2289, 0.0
        %2310 = vadd.xlane.f32.xlu0 %v2309
        %v2311 = vpop.xlane.xlu0 %2310
        %v2312 = vsel %vm634, %v2290, 0.0
        %2313 = vadd.xlane.f32.xlu0 %v2312
        %v2314 = vpop.xlane.xlu0 %2313
        %v2315 = vmul.f32 %v2293, %v721
        %v2316 = vmul.f32 %v2296, %v721
        %v2317 = vmul.f32 %v2299, %v721
        %v2318 = vmul.f32 %v2302, %v721
        %v2319 = vmul.f32 %v2305, %v721
        %v2320 = vmul.f32 %v2308, %v721
        %v2321 = vmul.f32 %v2311, %v721
        %v2322 = vmul.f32 %v2314, %v721
        %v2323 = vadd.f32 %v2315, 1e-05
        %v2324 = vadd.f32 %v2316, 1e-05
        %v2325 = vadd.f32 %v2317, 1e-05
        %v2326 = vadd.f32 %v2318, 1e-05
        %v2327 = vadd.f32 %v2319, 1e-05
        %v2328 = vadd.f32 %v2320, 1e-05
        %v2329 = vadd.f32 %v2321, 1e-05
        %v2330 = vadd.f32 %v2322, 1e-05
        %v2331 = vrsqrt.pop %v2323
        %v2332 = vrsqrt.pop %v2324
        %v2333 = vrsqrt.pop %v2325
        %v2334 = vrsqrt.pop %v2326
        %v2335 = vrsqrt.pop %v2327
        %v2336 = vrsqrt.pop %v2328
        %v2337 = vrsqrt.pop %v2329
        %v2338 = vrsqrt.pop %v2330
        %v2339 = vmul.f32 %v2275, %v2331
        %v2340 = vmul.f32 %v2276, %v2332
        %v2341 = vmul.f32 %v2277, %v2333
        %v2342 = vmul.f32 %v2278, %v2334
        %v2343 = vmul.f32 %v2279, %v2335
        %v2344 = vmul.f32 %v2280, %v2336
        %v2345 = vmul.f32 %v2281, %v2337
        %v2346 = vmul.f32 %v2282, %v2338
        %v2347 = vlaneseq
        %v2348 = vshrl.u32 %v2347, 7
        %v2349 = vsub.s32 0, %v2348
        %v2350 = vrot.slane %v2224, %v2349
        %v2351 = vmul.f32 %v2339, %v2350
        %v2352 = vmul.f32 %v2340, %v2350
        %v2353 = vmul.f32 %v2341, %v2350
        %v2354 = vmul.f32 %v2342, %v2350
        %v2355 = vmul.f32 %v2343, %v2350
        %v2356 = vmul.f32 %v2344, %v2350
        %v2357 = vmul.f32 %v2345, %v2350
        %v2358 = vmul.f32 %v2346, %v2350
        %v2359 = vlaneseq
        %v2360 = vshrl.u32 %v2359, 7
        %v2361 = vsub.s32 0, %v2360
        %v2362 = vrot.slane %v2226, %v2361
        %v2363 = vadd.f32 %v2351, %v2362
        %v2364 = vadd.f32 %v2352, %v2362
        %v2365 = vadd.f32 %v2353, %v2362
        %v2366 = vadd.f32 %v2354, %v2362
        %v2367 = vadd.f32 %v2355, %v2362
        %v2368 = vadd.f32 %v2356, %v2362
        %v2369 = vadd.f32 %v2357, %v2362
        %v2370 = vadd.f32 %v2358, %v2362
        %2372 = vset.pattern.permute.xlu0 0
        %2373 = vperm.xlu0 %2372, %v2233
        %v2374 = vpop.permute.xlu0 %2373
        %2377 = vset.pattern.permute.xlu0 0
        %2378 = vperm.xlu0 %2377, %v2234
        %v2379 = vpop.permute.xlu0 %2378
        %2382 = vset.pattern.permute.xlu0 0
        %2383 = vperm.xlu0 %2382, %v2235
        %v2384 = vpop.permute.xlu0 %2383
        %2387 = vset.pattern.permute.xlu0 0
        %2388 = vperm.xlu0 %2387, %v2236
        %v2389 = vpop.permute.xlu0 %2388
        %v2392 = vsel %vm496, %v2228, 0
        %v2395 = vsel %vm496, %v2229, 0
        %v2398 = vsel %vm496, %v2230, 0
        %v2401 = vsel %vm496, %v2231, 0
        %2403 = vmatprep.subr.mxu0 0.0
        %2404 = vmatpush1.msra.mxu0 0.0
        %2405 = vmatprep.subr.mxu0 0.0
        %2406 = vmatpush1.msra.mxu0 0.0
        %2407 = vmatprep.subr.mxu0 0.0
        %2408 = vmatpush1.msra.mxu0 0.0
        %2409 = vmatprep.subr.mxu0 0.0
        %2410 = vmatpush1.msra.mxu0 0.0
        %2411 = vmatprep.subr.mxu0 0.0
        %2412 = vmatpush1.msra.mxu0 0.0
        %2413 = vmatprep.subr.mxu0 0.0
        %2414 = vmatpush1.msra.mxu0 0.0
        %2415 = vmatprep.subr.mxu0 0.0
        %2416 = vmatpush1.msra.mxu0 0.0
        %2417 = vmatprep.subr.mxu0 0.0
        %2418 = vmatpush1.msra.mxu0 0.0
        %2419 = vmatprep.subr.mxu0 0.0
        %2420 = vmatpush1.msra.mxu0 0.0
        %2421 = vmatprep.subr.mxu0 0.0
        %2422 = vmatpush1.msra.mxu0 0.0
        %2423 = vmatprep.subr.mxu0 0.0
        %2424 = vmatpush1.msra.mxu0 0.0
        %2425 = vmatprep.subr.mxu0 0.0
        %2426 = vmatpush1.msra.mxu0 0.0
        %2427 = vmatprep.subr.mxu0 0.0
        %2428 = vmatpush1.msra.mxu0 0.0
        %2429 = vmatprep.subr.mxu0 0.0
        %2430 = vmatpush1.msra.mxu0 0.0
        %2431 = vmatprep.subr.mxu0 0.0
        %2432 = vmatpush1.msra.mxu0 %v2364
        %2433 = vmatprep.subr.mxu0 0.0
        %2434 = vmatpush1.msra.mxu0 %v2363
        %2435 = vmatprep.subr.mxu0 0.0
        %2436 = vmatpush2.msra.mxu0 0.0
        %2437 = vmatprep.subr.mxu0 0.0
        %2438 = vmatpush2.msra.mxu0 0.0
        %2439 = vmatprep.subr.mxu0 0.0
        %2440 = vmatpush2.msra.mxu0 0.0
        %2441 = vmatprep.subr.mxu0 0.0
        %2442 = vmatpush2.msra.mxu0 0.0
        %2443 = vmatprep.subr.mxu0 0.0
        %2444 = vmatpush2.msra.mxu0 0.0
        %2445 = vmatprep.subr.mxu0 0.0
        %2446 = vmatpush2.msra.mxu0 0.0
        %2447 = vmatprep.subr.mxu0 0.0
        %2448 = vmatpush2.msra.mxu0 0.0
        %2449 = vmatprep.subr.mxu0 0.0
        %2450 = vmatpush2.msra.mxu0 0.0
        %2451 = vmatprep.subr.mxu0 0.0
        %2452 = vmatpush2.msra.mxu0 0.0
        %2453 = vmatprep.subr.mxu0 0.0
        %2454 = vmatpush2.msra.mxu0 0.0
        %2455 = vmatprep.subr.mxu0 0.0
        %2456 = vmatpush2.msra.mxu0 0.0
        %2457 = vmatprep.subr.mxu0 0.0
        %2458 = vmatpush2.msra.mxu0 0.0
        %2459 = vmatprep.subr.mxu0 0.0
        %2460 = vmatpush2.msra.mxu0 0.0
        %2461 = vmatprep.subr.mxu0 0.0
        %2462 = vmatpush2.msra.mxu0 0.0
        %2463 = vmatprep.subr.mxu0 0.0
        %2464 = vmatpush2.msra.mxu0 0.0
        %2465 = vmatprep.subr.mxu0 0.0
        %2466 = vmatpush2.msra.mxu0 0.0
        %2467 = vmatprep.mubr.f32.mxu0 0.0
        %2468 = vmatmul.mubr.f32.gmra.mxu0 %v2392
        %v2469 = vpop.f32.mrf.mxu0
        %v2470 = vadd.f32 %v2374, %v2469
        %v2471 = vpop.f32.mrf.mxu0
        %2472 = vmatprep.mubr.f32.mxu0 0.0
        %2473 = vmatmul.mubr.f32.gmra.mxu0 %v2395
        %v2474 = vpop.f32.mrf.mxu0
        %v2475 = vadd.f32 %v2379, %v2474
        %v2476 = vpop.f32.mrf.mxu0
        %2477 = vmatprep.mubr.f32.mxu0 0.0
        %2478 = vmatmul.mubr.f32.gmra.mxu0 %v2398
        %v2479 = vpop.f32.mrf.mxu0
        %v2480 = vadd.f32 %v2384, %v2479
        %v2481 = vpop.f32.mrf.mxu0
        %2482 = vmatprep.mubr.f32.mxu0 0.0
        %2483 = vmatmul.mubr.f32.gmra.mxu0 %v2401
        %v2484 = vpop.f32.mrf.mxu0
        %v2485 = vadd.f32 %v2389, %v2484
        %v2486 = vpop.f32.mrf.mxu0
        %2487 = vdwg.mxu0
        %v2488 = vmul.f32 %v2470, 0.5
        %v2489 = vmul.f32 %v2475, 0.5
        %v2490 = vmul.f32 %v2480, 0.5
        %v2491 = vmul.f32 %v2485, 0.5
        %v2492 = vmul.f32 %v2470, 0.044715
        %v2493 = vmul.f32 %v2475, 0.044715
        %v2494 = vmul.f32 %v2480, 0.044715
        %v2495 = vmul.f32 %v2485, 0.044715
        %v2496 = vmul.f32 %v2492, %v2470
        %v2497 = vmul.f32 %v2493, %v2475
        %v2498 = vmul.f32 %v2494, %v2480
        %v2499 = vmul.f32 %v2495, %v2485
        %v2500 = vmul.f32 %v2496, %v2470
        %v2501 = vmul.f32 %v2497, %v2475
        %v2502 = vmul.f32 %v2498, %v2480
        %v2503 = vmul.f32 %v2499, %v2485
        %v2504 = vadd.f32 %v2470, %v2500
        %v2505 = vadd.f32 %v2475, %v2501
        %v2506 = vadd.f32 %v2480, %v2502
        %v2507 = vadd.f32 %v2485, %v2503
        %v2508 = vmul.f32 %v2504, 0.7978846
        %v2509 = vmul.f32 %v2505, 0.7978846
        %v2510 = vmul.f32 %v2506, 0.7978846
        %v2511 = vmul.f32 %v2507, 0.7978846
        %v2512 = vtanh.pop %v2508
        %v2513 = vtanh.pop %v2509
        %v2514 = vtanh.pop %v2510
        %v2515 = vtanh.pop %v2511
        %v2516 = vadd.f32 %v2512, 1.0
        %v2517 = vadd.f32 %v2513, 1.0
        %v2518 = vadd.f32 %v2514, 1.0
        %v2519 = vadd.f32 %v2515, 1.0
        %v2520 = vmul.f32 %v2488, %v2516
        %v2521 = vmul.f32 %v2489, %v2517
        %v2522 = vmul.f32 %v2490, %v2518
        %v2523 = vmul.f32 %v2491, %v2519
        %2525 = vset.pattern.permute.xlu0 0
        %2526 = vperm.xlu0 %2525, %v2241
        %v2527 = vpop.permute.xlu0 %2526
        %2530 = vset.pattern.permute.xlu0 0
        %2531 = vperm.xlu0 %2530, %v2242
        %v2532 = vpop.permute.xlu0 %2531
        %v2535 = vsel %vm634, %v2238, 0
        %v2538 = vsel %vm634, %v2239, 0
        %2540 = vmatprep.subr.mxu0 0.0
        %2541 = vmatpush1.msra.mxu0 0.0
        %2542 = vmatprep.subr.mxu0 0.0
        %2543 = vmatpush1.msra.mxu0 0.0
        %2544 = vmatprep.subr.mxu0 0.0
        %2545 = vmatpush1.msra.mxu0 0.0
        %2546 = vmatprep.subr.mxu0 0.0
        %2547 = vmatpush1.msra.mxu0 0.0
        %2548 = vmatprep.subr.mxu0 0.0
        %2549 = vmatpush1.msra.mxu0 0.0
        %2550 = vmatprep.subr.mxu0 0.0
        %2551 = vmatpush1.msra.mxu0 0.0
        %2552 = vmatprep.subr.mxu0 0.0
        %2553 = vmatpush1.msra.mxu0 0.0
        %2554 = vmatprep.subr.mxu0 0.0
        %2555 = vmatpush1.msra.mxu0 0.0
        %2556 = vmatprep.subr.mxu0 0.0
        %2557 = vmatpush1.msra.mxu0 0.0
        %2558 = vmatprep.subr.mxu0 0.0
        %2559 = vmatpush1.msra.mxu0 0.0
        %2560 = vmatprep.subr.mxu0 0.0
        %2561 = vmatpush1.msra.mxu0 0.0
        %2562 = vmatprep.subr.mxu0 0.0
        %2563 = vmatpush1.msra.mxu0 0.0
        %2564 = vmatprep.subr.mxu0 0.0
        %2565 = vmatpush1.msra.mxu0 %v2523
        %2566 = vmatprep.subr.mxu0 0.0
        %2567 = vmatpush1.msra.mxu0 %v2522
        %2568 = vmatprep.subr.mxu0 0.0
        %2569 = vmatpush1.msra.mxu0 %v2521
        %2570 = vmatprep.subr.mxu0 0.0
        %2571 = vmatpush1.msra.mxu0 %v2520
        %2572 = vmatprep.subr.mxu0 0.0
        %2573 = vmatpush2.msra.mxu0 0.0
        %2574 = vmatprep.subr.mxu0 0.0
        %2575 = vmatpush2.msra.mxu0 0.0
        %2576 = vmatprep.subr.mxu0 0.0
        %2577 = vmatpush2.msra.mxu0 0.0
        %2578 = vmatprep.subr.mxu0 0.0
        %2579 = vmatpush2.msra.mxu0 0.0
        %2580 = vmatprep.subr.mxu0 0.0
        %2581 = vmatpush2.msra.mxu0 0.0
        %2582 = vmatprep.subr.mxu0 0.0
        %2583 = vmatpush2.msra.mxu0 0.0
        %2584 = vmatprep.subr.mxu0 0.0
        %2585 = vmatpush2.msra.mxu0 0.0
        %2586 = vmatprep.subr.mxu0 0.0
        %2587 = vmatpush2.msra.mxu0 0.0
        %2588 = vmatprep.subr.mxu0 0.0
        %2589 = vmatpush2.msra.mxu0 0.0
        %2590 = vmatprep.subr.mxu0 0.0
        %2591 = vmatpush2.msra.mxu0 0.0
        %2592 = vmatprep.subr.mxu0 0.0
        %2593 = vmatpush2.msra.mxu0 0.0
        %2594 = vmatprep.subr.mxu0 0.0
        %2595 = vmatpush2.msra.mxu0 0.0
        %2596 = vmatprep.subr.mxu0 0.0
        %2597 = vmatpush2.msra.mxu0 0.0
        %2598 = vmatprep.subr.mxu0 0.0
        %2599 = vmatpush2.msra.mxu0 0.0
        %2600 = vmatprep.subr.mxu0 0.0
        %2601 = vmatpush2.msra.mxu0 0.0
        %2602 = vmatprep.subr.mxu0 0.0
        %2603 = vmatpush2.msra.mxu0 0.0
        %2604 = vmatprep.mubr.f32.mxu0 0.0
        %2605 = vmatmul.mubr.f32.gmra.mxu0 %v2535
        %v2606 = vpop.f32.mrf.mxu0
        %v2607 = vadd.f32 %v2527, %v2606
        %v2608 = vpop.f32.mrf.mxu0
        %2609 = vmatprep.mubr.f32.mxu0 0.0
        %2610 = vmatmul.mubr.f32.gmra.mxu0 %v2538
        %v2611 = vpop.f32.mrf.mxu0
        %v2612 = vadd.f32 %v2532, %v2611
        %v2613 = vpop.f32.mrf.mxu0
        %2614 = vdwg.mxu0
        %2615 = vmatprep.subr.mxu0 0.0
        %2616 = vmatpush1.msra.mxu0 0.0
        %2617 = vmatprep.subr.mxu0 0.0
        %2618 = vmatpush1.msra.mxu0 0.0
        %2619 = vmatprep.subr.mxu0 0.0
        %2620 = vmatpush1.msra.mxu0 0.0
        %2621 = vmatprep.subr.mxu0 0.0
        %2622 = vmatpush1.msra.mxu0 0.0
        %2623 = vmatprep.subr.mxu0 0.0
        %2624 = vmatpush1.msra.mxu0 0.0
        %2625 = vmatprep.subr.mxu0 0.0
        %2626 = vmatpush1.msra.mxu0 0.0
        %2627 = vmatprep.subr.mxu0 0.0
        %2628 = vmatpush1.msra.mxu0 0.0
        %2629 = vmatprep.subr.mxu0 0.0
        %2630 = vmatpush1.msra.mxu0 0.0
        %2631 = vmatprep.subr.mxu0 0.0
        %2632 = vmatpush1.msra.mxu0 0.0
        %2633 = vmatprep.subr.mxu0 0.0
        %2634 = vmatpush1.msra.mxu0 0.0
        %2635 = vmatprep.subr.mxu0 0.0
        %2636 = vmatpush1.msra.mxu0 0.0
        %2637 = vmatprep.subr.mxu0 0.0
        %2638 = vmatpush1.msra.mxu0 0.0
        %2639 = vmatprep.subr.mxu0 0.0
        %2640 = vmatpush1.msra.mxu0 0.0
        %2641 = vmatprep.subr.mxu0 0.0
        %2642 = vmatpush1.msra.mxu0 0.0
        %2643 = vmatprep.subr.mxu0 0.0
        %2644 = vmatpush1.msra.mxu0 %v2366
        %2645 = vmatprep.subr.mxu0 0.0
        %2646 = vmatpush1.msra.mxu0 %v2365
        %2647 = vmatprep.subr.mxu0 0.0
        %2648 = vmatpush2.msra.mxu0 0.0
        %2649 = vmatprep.subr.mxu0 0.0
        %2650 = vmatpush2.msra.mxu0 0.0
        %2651 = vmatprep.subr.mxu0 0.0
        %2652 = vmatpush2.msra.mxu0 0.0
        %2653 = vmatprep.subr.mxu0 0.0
        %2654 = vmatpush2.msra.mxu0 0.0
        %2655 = vmatprep.subr.mxu0 0.0
        %2656 = vmatpush2.msra.mxu0 0.0
        %2657 = vmatprep.subr.mxu0 0.0
        %2658 = vmatpush2.msra.mxu0 0.0
        %2659 = vmatprep.subr.mxu0 0.0
        %2660 = vmatpush2.msra.mxu0 0.0
        %2661 = vmatprep.subr.mxu0 0.0
        %2662 = vmatpush2.msra.mxu0 0.0
        %2663 = vmatprep.subr.mxu0 0.0
        %2664 = vmatpush2.msra.mxu0 0.0
        %2665 = vmatprep.subr.mxu0 0.0
        %2666 = vmatpush2.msra.mxu0 0.0
        %2667 = vmatprep.subr.mxu0 0.0
        %2668 = vmatpush2.msra.mxu0 0.0
        %2669 = vmatprep.subr.mxu0 0.0
        %2670 = vmatpush2.msra.mxu0 0.0
        %2671 = vmatprep.subr.mxu0 0.0
        %2672 = vmatpush2.msra.mxu0 0.0
        %2673 = vmatprep.subr.mxu0 0.0
        %2674 = vmatpush2.msra.mxu0 0.0
        %2675 = vmatprep.subr.mxu0 0.0
        %2676 = vmatpush2.msra.mxu0 0.0
        %2677 = vmatprep.subr.mxu0 0.0
        %2678 = vmatpush2.msra.mxu0 0.0
        %2679 = vmatprep.mubr.f32.mxu0 0.0
        %2680 = vmatmul.mubr.f32.gmra.mxu0 %v2392
        %v2681 = vpop.f32.mrf.mxu0
        %v2682 = vadd.f32 %v2374, %v2681
        %v2683 = vpop.f32.mrf.mxu0
        %2684 = vmatprep.mubr.f32.mxu0 0.0
        %2685 = vmatmul.mubr.f32.gmra.mxu0 %v2395
        %v2686 = vpop.f32.mrf.mxu0
        %v2687 = vadd.f32 %v2379, %v2686
        %v2688 = vpop.f32.mrf.mxu0
        %2689 = vmatprep.mubr.f32.mxu0 0.0
        %2690 = vmatmul.mubr.f32.gmra.mxu0 %v2398
        %v2691 = vpop.f32.mrf.mxu0
        %v2692 = vadd.f32 %v2384, %v2691
        %v2693 = vpop.f32.mrf.mxu0
        %2694 = vmatprep.mubr.f32.mxu0 0.0
        %2695 = vmatmul.mubr.f32.gmra.mxu0 %v2401
        %v2696 = vpop.f32.mrf.mxu0
        %v2697 = vadd.f32 %v2389, %v2696
        %v2698 = vpop.f32.mrf.mxu0
        %2699 = vdwg.mxu0
        %v2700 = vmul.f32 %v2682, 0.5
        %v2701 = vmul.f32 %v2687, 0.5
        %v2702 = vmul.f32 %v2692, 0.5
        %v2703 = vmul.f32 %v2697, 0.5
        %v2704 = vmul.f32 %v2682, 0.044715
        %v2705 = vmul.f32 %v2687, 0.044715
        %v2706 = vmul.f32 %v2692, 0.044715
        %v2707 = vmul.f32 %v2697, 0.044715
        %v2708 = vmul.f32 %v2704, %v2682
        %v2709 = vmul.f32 %v2705, %v2687
        %v2710 = vmul.f32 %v2706, %v2692
        %v2711 = vmul.f32 %v2707, %v2697
        %v2712 = vmul.f32 %v2708, %v2682
        %v2713 = vmul.f32 %v2709, %v2687
        %v2714 = vmul.f32 %v2710, %v2692
        %v2715 = vmul.f32 %v2711, %v2697
        %v2716 = vadd.f32 %v2682, %v2712
        %v2717 = vadd.f32 %v2687, %v2713
        %v2718 = vadd.f32 %v2692, %v2714
        %v2719 = vadd.f32 %v2697, %v2715
        %v2720 = vmul.f32 %v2716, 0.7978846
        %v2721 = vmul.f32 %v2717, 0.7978846
        %v2722 = vmul.f32 %v2718, 0.7978846
        %v2723 = vmul.f32 %v2719, 0.7978846
        %v2724 = vtanh.pop %v2720
        %v2725 = vtanh.pop %v2721
        %v2726 = vtanh.pop %v2722
        %v2727 = vtanh.pop %v2723
        %v2728 = vadd.f32 %v2724, 1.0
        %v2729 = vadd.f32 %v2725, 1.0
        %v2730 = vadd.f32 %v2726, 1.0
        %v2731 = vadd.f32 %v2727, 1.0
        %v2732 = vmul.f32 %v2700, %v2728
        %v2733 = vmul.f32 %v2701, %v2729
        %v2734 = vmul.f32 %v2702, %v2730
        %v2735 = vmul.f32 %v2703, %v2731
        %2736 = vmatprep.subr.mxu0 0.0
        %2737 = vmatpush1.msra.mxu0 0.0
        %2738 = vmatprep.subr.mxu0 0.0
        %2739 = vmatpush1.msra.mxu0 0.0
        %2740 = vmatprep.subr.mxu0 0.0
        %2741 = vmatpush1.msra.mxu0 0.0
        %2742 = vmatprep.subr.mxu0 0.0
        %2743 = vmatpush1.msra.mxu0 0.0
        %2744 = vmatprep.subr.mxu0 0.0
        %2745 = vmatpush1.msra.mxu0 0.0
        %2746 = vmatprep.subr.mxu0 0.0
        %2747 = vmatpush1.msra.mxu0 0.0
        %2748 = vmatprep.subr.mxu0 0.0
        %2749 = vmatpush1.msra.mxu0 0.0
        %2750 = vmatprep.subr.mxu0 0.0
        %2751 = vmatpush1.msra.mxu0 0.0
        %2752 = vmatprep.subr.mxu0 0.0
        %2753 = vmatpush1.msra.mxu0 0.0
        %2754 = vmatprep.subr.mxu0 0.0
        %2755 = vmatpush1.msra.mxu0 0.0
        %2756 = vmatprep.subr.mxu0 0.0
        %2757 = vmatpush1.msra.mxu0 0.0
        %2758 = vmatprep.subr.mxu0 0.0
        %2759 = vmatpush1.msra.mxu0 0.0
        %2760 = vmatprep.subr.mxu0 0.0
        %2761 = vmatpush1.msra.mxu0 %v2735
        %2762 = vmatprep.subr.mxu0 0.0
        %2763 = vmatpush1.msra.mxu0 %v2734
        %2764 = vmatprep.subr.mxu0 0.0
        %2765 = vmatpush1.msra.mxu0 %v2733
        %2766 = vmatprep.subr.mxu0 0.0
        %2767 = vmatpush1.msra.mxu0 %v2732
        %2768 = vmatprep.subr.mxu0 0.0
        %2769 = vmatpush2.msra.mxu0 0.0
        %2770 = vmatprep.subr.mxu0 0.0
        %2771 = vmatpush2.msra.mxu0 0.0
        %2772 = vmatprep.subr.mxu0 0.0
        %2773 = vmatpush2.msra.mxu0 0.0
        %2774 = vmatprep.subr.mxu0 0.0
        %2775 = vmatpush2.msra.mxu0 0.0
        %2776 = vmatprep.subr.mxu0 0.0
        %2777 = vmatpush2.msra.mxu0 0.0
        %2778 = vmatprep.subr.mxu0 0.0
        %2779 = vmatpush2.msra.mxu0 0.0
        %2780 = vmatprep.subr.mxu0 0.0
        %2781 = vmatpush2.msra.mxu0 0.0
        %2782 = vmatprep.subr.mxu0 0.0
        %2783 = vmatpush2.msra.mxu0 0.0
        %2784 = vmatprep.subr.mxu0 0.0
        %2785 = vmatpush2.msra.mxu0 0.0
        %2786 = vmatprep.subr.mxu0 0.0
        %2787 = vmatpush2.msra.mxu0 0.0
        %2788 = vmatprep.subr.mxu0 0.0
        %2789 = vmatpush2.msra.mxu0 0.0
        %2790 = vmatprep.subr.mxu0 0.0
        %2791 = vmatpush2.msra.mxu0 0.0
        %2792 = vmatprep.subr.mxu0 0.0
        %2793 = vmatpush2.msra.mxu0 0.0
        %2794 = vmatprep.subr.mxu0 0.0
        %2795 = vmatpush2.msra.mxu0 0.0
        %2796 = vmatprep.subr.mxu0 0.0
        %2797 = vmatpush2.msra.mxu0 0.0
        %2798 = vmatprep.subr.mxu0 0.0
        %2799 = vmatpush2.msra.mxu0 0.0
        %2800 = vmatprep.mubr.f32.mxu0 0.0
        %2801 = vmatmul.mubr.f32.gmra.mxu0 %v2535
        %v2802 = vpop.f32.mrf.mxu0
        %v2803 = vadd.f32 %v2527, %v2802
        %v2804 = vpop.f32.mrf.mxu0
        %2805 = vmatprep.mubr.f32.mxu0 0.0
        %2806 = vmatmul.mubr.f32.gmra.mxu0 %v2538
        %v2807 = vpop.f32.mrf.mxu0
        %v2808 = vadd.f32 %v2532, %v2807
        %v2809 = vpop.f32.mrf.mxu0
        %2810 = vdwg.mxu0
        %2811 = vmatprep.subr.mxu0 0.0
        %2812 = vmatpush1.msra.mxu0 0.0
        %2813 = vmatprep.subr.mxu0 0.0
        %2814 = vmatpush1.msra.mxu0 0.0
        %2815 = vmatprep.subr.mxu0 0.0
        %2816 = vmatpush1.msra.mxu0 0.0
        %2817 = vmatprep.subr.mxu0 0.0
        %2818 = vmatpush1.msra.mxu0 0.0
        %2819 = vmatprep.subr.mxu0 0.0
        %2820 = vmatpush1.msra.mxu0 0.0
        %2821 = vmatprep.subr.mxu0 0.0
        %2822 = vmatpush1.msra.mxu0 0.0
        %2823 = vmatprep.subr.mxu0 0.0
        %2824 = vmatpush1.msra.mxu0 0.0
        %2825 = vmatprep.subr.mxu0 0.0
        %2826 = vmatpush1.msra.mxu0 0.0
        %2827 = vmatprep.subr.mxu0 0.0
        %2828 = vmatpush1.msra.mxu0 0.0
        %2829 = vmatprep.subr.mxu0 0.0
        %2830 = vmatpush1.msra.mxu0 0.0
        %2831 = vmatprep.subr.mxu0 0.0
        %2832 = vmatpush1.msra.mxu0 0.0
        %2833 = vmatprep.subr.mxu0 0.0
        %2834 = vmatpush1.msra.mxu0 0.0
        %2835 = vmatprep.subr.mxu0 0.0
        %2836 = vmatpush1.msra.mxu0 0.0
        %2837 = vmatprep.subr.mxu0 0.0
        %2838 = vmatpush1.msra.mxu0 0.0
        %2839 = vmatprep.subr.mxu0 0.0
        %2840 = vmatpush1.msra.mxu0 %v2368
        %2841 = vmatprep.subr.mxu0 0.0
        %2842 = vmatpush1.msra.mxu0 %v2367
        %2843 = vmatprep.subr.mxu0 0.0
        %2844 = vmatpush2.msra.mxu0 0.0
        %2845 = vmatprep.subr.mxu0 0.0
        %2846 = vmatpush2.msra.mxu0 0.0
        %2847 = vmatprep.subr.mxu0 0.0
        %2848 = vmatpush2.msra.mxu0 0.0
        %2849 = vmatprep.subr.mxu0 0.0
        %2850 = vmatpush2.msra.mxu0 0.0
        %2851 = vmatprep.subr.mxu0 0.0
        %2852 = vmatpush2.msra.mxu0 0.0
        %2853 = vmatprep.subr.mxu0 0.0
        %2854 = vmatpush2.msra.mxu0 0.0
        %2855 = vmatprep.subr.mxu0 0.0
        %2856 = vmatpush2.msra.mxu0 0.0
        %2857 = vmatprep.subr.mxu0 0.0
        %2858 = vmatpush2.msra.mxu0 0.0
        %2859 = vmatprep.subr.mxu0 0.0
        %2860 = vmatpush2.msra.mxu0 0.0
        %2861 = vmatprep.subr.mxu0 0.0
        %2862 = vmatpush2.msra.mxu0 0.0
        %2863 = vmatprep.subr.mxu0 0.0
        %2864 = vmatpush2.msra.mxu0 0.0
        %2865 = vmatprep.subr.mxu0 0.0
        %2866 = vmatpush2.msra.mxu0 0.0
        %2867 = vmatprep.subr.mxu0 0.0
        %2868 = vmatpush2.msra.mxu0 0.0
        %2869 = vmatprep.subr.mxu0 0.0
        %2870 = vmatpush2.msra.mxu0 0.0
        %2871 = vmatprep.subr.mxu0 0.0
        %2872 = vmatpush2.msra.mxu0 0.0
        %2873 = vmatprep.subr.mxu0 0.0
        %2874 = vmatpush2.msra.mxu0 0.0
        %2875 = vmatprep.mubr.f32.mxu0 0.0
        %2876 = vmatmul.mubr.f32.gmra.mxu0 %v2392
        %v2877 = vpop.f32.mrf.mxu0
        %v2878 = vadd.f32 %v2374, %v2877
        %v2879 = vpop.f32.mrf.mxu0
        %2880 = vmatprep.mubr.f32.mxu0 0.0
        %2881 = vmatmul.mubr.f32.gmra.mxu0 %v2395
        %v2882 = vpop.f32.mrf.mxu0
        %v2883 = vadd.f32 %v2379, %v2882
        %v2884 = vpop.f32.mrf.mxu0
        %2885 = vmatprep.mubr.f32.mxu0 0.0
        %2886 = vmatmul.mubr.f32.gmra.mxu0 %v2398
        %v2887 = vpop.f32.mrf.mxu0
        %v2888 = vadd.f32 %v2384, %v2887
        %v2889 = vpop.f32.mrf.mxu0
        %2890 = vmatprep.mubr.f32.mxu0 0.0
        %2891 = vmatmul.mubr.f32.gmra.mxu0 %v2401
        %v2892 = vpop.f32.mrf.mxu0
        %v2893 = vadd.f32 %v2389, %v2892
        %v2894 = vpop.f32.mrf.mxu0
        %2895 = vdwg.mxu0
        %v2896 = vmul.f32 %v2878, 0.5
        %v2897 = vmul.f32 %v2883, 0.5
        %v2898 = vmul.f32 %v2888, 0.5
        %v2899 = vmul.f32 %v2893, 0.5
        %v2900 = vmul.f32 %v2878, 0.044715
        %v2901 = vmul.f32 %v2883, 0.044715
        %v2902 = vmul.f32 %v2888, 0.044715
        %v2903 = vmul.f32 %v2893, 0.044715
        %v2904 = vmul.f32 %v2900, %v2878
        %v2905 = vmul.f32 %v2901, %v2883
        %v2906 = vmul.f32 %v2902, %v2888
        %v2907 = vmul.f32 %v2903, %v2893
        %v2908 = vmul.f32 %v2904, %v2878
        %v2909 = vmul.f32 %v2905, %v2883
        %v2910 = vmul.f32 %v2906, %v2888
        %v2911 = vmul.f32 %v2907, %v2893
        %v2912 = vadd.f32 %v2878, %v2908
        %v2913 = vadd.f32 %v2883, %v2909
        %v2914 = vadd.f32 %v2888, %v2910
        %v2915 = vadd.f32 %v2893, %v2911
        %v2916 = vmul.f32 %v2912, 0.7978846
        %v2917 = vmul.f32 %v2913, 0.7978846
        %v2918 = vmul.f32 %v2914, 0.7978846
        %v2919 = vmul.f32 %v2915, 0.7978846
        %v2920 = vtanh.pop %v2916
        %v2921 = vtanh.pop %v2917
        %v2922 = vtanh.pop %v2918
        %v2923 = vtanh.pop %v2919
        %v2924 = vadd.f32 %v2920, 1.0
        %v2925 = vadd.f32 %v2921, 1.0
        %v2926 = vadd.f32 %v2922, 1.0
        %v2927 = vadd.f32 %v2923, 1.0
        %v2928 = vmul.f32 %v2896, %v2924
        %v2929 = vmul.f32 %v2897, %v2925
        %v2930 = vmul.f32 %v2898, %v2926
        %v2931 = vmul.f32 %v2899, %v2927
        %2932 = vmatprep.subr.mxu0 0.0
        %2933 = vmatpush1.msra.mxu0 0.0
        %2934 = vmatprep.subr.mxu0 0.0
        %2935 = vmatpush1.msra.mxu0 0.0
        %2936 = vmatprep.subr.mxu0 0.0
        %2937 = vmatpush1.msra.mxu0 0.0
        %2938 = vmatprep.subr.mxu0 0.0
        %2939 = vmatpush1.msra.mxu0 0.0
        %2940 = vmatprep.subr.mxu0 0.0
        %2941 = vmatpush1.msra.mxu0 0.0
        %2942 = vmatprep.subr.mxu0 0.0
        %2943 = vmatpush1.msra.mxu0 0.0
        %2944 = vmatprep.subr.mxu0 0.0
        %2945 = vmatpush1.msra.mxu0 0.0
        %2946 = vmatprep.subr.mxu0 0.0
        %2947 = vmatpush1.msra.mxu0 0.0
        %2948 = vmatprep.subr.mxu0 0.0
        %2949 = vmatpush1.msra.mxu0 0.0
        %2950 = vmatprep.subr.mxu0 0.0
        %2951 = vmatpush1.msra.mxu0 0.0
        %2952 = vmatprep.subr.mxu0 0.0
        %2953 = vmatpush1.msra.mxu0 0.0
        %2954 = vmatprep.subr.mxu0 0.0
        %2955 = vmatpush1.msra.mxu0 0.0
        %2956 = vmatprep.subr.mxu0 0.0
        %2957 = vmatpush1.msra.mxu0 %v2931
        %2958 = vmatprep.subr.mxu0 0.0
        %2959 = vmatpush1.msra.mxu0 %v2930
        %2960 = vmatprep.subr.mxu0 0.0
        %2961 = vmatpush1.msra.mxu0 %v2929
        %2962 = vmatprep.subr.mxu0 0.0
        %2963 = vmatpush1.msra.mxu0 %v2928
        %2964 = vmatprep.subr.mxu0 0.0
        %2965 = vmatpush2.msra.mxu0 0.0
        %2966 = vmatprep.subr.mxu0 0.0
        %2967 = vmatpush2.msra.mxu0 0.0
        %2968 = vmatprep.subr.mxu0 0.0
        %2969 = vmatpush2.msra.mxu0 0.0
        %2970 = vmatprep.subr.mxu0 0.0
        %2971 = vmatpush2.msra.mxu0 0.0
        %2972 = vmatprep.subr.mxu0 0.0
        %2973 = vmatpush2.msra.mxu0 0.0
        %2974 = vmatprep.subr.mxu0 0.0
        %2975 = vmatpush2.msra.mxu0 0.0
        %2976 = vmatprep.subr.mxu0 0.0
        %2977 = vmatpush2.msra.mxu0 0.0
        %2978 = vmatprep.subr.mxu0 0.0
        %2979 = vmatpush2.msra.mxu0 0.0
        %2980 = vmatprep.subr.mxu0 0.0
        %2981 = vmatpush2.msra.mxu0 0.0
        %2982 = vmatprep.subr.mxu0 0.0
        %2983 = vmatpush2.msra.mxu0 0.0
        %2984 = vmatprep.subr.mxu0 0.0
        %2985 = vmatpush2.msra.mxu0 0.0
        %2986 = vmatprep.subr.mxu0 0.0
        %2987 = vmatpush2.msra.mxu0 0.0
        %2988 = vmatprep.subr.mxu0 0.0
        %2989 = vmatpush2.msra.mxu0 0.0
        %2990 = vmatprep.subr.mxu0 0.0
        %2991 = vmatpush2.msra.mxu0 0.0
        %2992 = vmatprep.subr.mxu0 0.0
        %2993 = vmatpush2.msra.mxu0 0.0
        %2994 = vmatprep.subr.mxu0 0.0
        %2995 = vmatpush2.msra.mxu0 0.0
        %2996 = vmatprep.mubr.f32.mxu0 0.0
        %2997 = vmatmul.mubr.f32.gmra.mxu0 %v2535
        %v2998 = vpop.f32.mrf.mxu0
        %v2999 = vadd.f32 %v2527, %v2998
        %v3000 = vpop.f32.mrf.mxu0
        %3001 = vmatprep.mubr.f32.mxu0 0.0
        %3002 = vmatmul.mubr.f32.gmra.mxu0 %v2538
        %v3003 = vpop.f32.mrf.mxu0
        %v3004 = vadd.f32 %v2532, %v3003
        %v3005 = vpop.f32.mrf.mxu0
        %3006 = vdwg.mxu0
        %3007 = vmatprep.subr.mxu0 0.0
        %3008 = vmatpush1.msra.mxu0 0.0
        %3009 = vmatprep.subr.mxu0 0.0
        %3010 = vmatpush1.msra.mxu0 0.0
        %3011 = vmatprep.subr.mxu0 0.0
        %3012 = vmatpush1.msra.mxu0 0.0
        %3013 = vmatprep.subr.mxu0 0.0
        %3014 = vmatpush1.msra.mxu0 0.0
        %3015 = vmatprep.subr.mxu0 0.0
        %3016 = vmatpush1.msra.mxu0 0.0
        %3017 = vmatprep.subr.mxu0 0.0
        %3018 = vmatpush1.msra.mxu0 0.0
        %3019 = vmatprep.subr.mxu0 0.0
        %3020 = vmatpush1.msra.mxu0 0.0
        %3021 = vmatprep.subr.mxu0 0.0
        %3022 = vmatpush1.msra.mxu0 0.0
        %3023 = vmatprep.subr.mxu0 0.0
        %3024 = vmatpush1.msra.mxu0 0.0
        %3025 = vmatprep.subr.mxu0 0.0
        %3026 = vmatpush1.msra.mxu0 0.0
        %3027 = vmatprep.subr.mxu0 0.0
        %3028 = vmatpush1.msra.mxu0 0.0
        %3029 = vmatprep.subr.mxu0 0.0
        %3030 = vmatpush1.msra.mxu0 0.0
        %3031 = vmatprep.subr.mxu0 0.0
        %3032 = vmatpush1.msra.mxu0 0.0
        %3033 = vmatprep.subr.mxu0 0.0
        %3034 = vmatpush1.msra.mxu0 0.0
        %3035 = vmatprep.subr.mxu0 0.0
        %3036 = vmatpush1.msra.mxu0 %v2370
        %3037 = vmatprep.subr.mxu0 0.0
        %3038 = vmatpush1.msra.mxu0 %v2369
        %3039 = vmatprep.subr.mxu0 0.0
        %3040 = vmatpush2.msra.mxu0 0.0
        %3041 = vmatprep.subr.mxu0 0.0
        %3042 = vmatpush2.msra.mxu0 0.0
        %3043 = vmatprep.subr.mxu0 0.0
        %3044 = vmatpush2.msra.mxu0 0.0
        %3045 = vmatprep.subr.mxu0 0.0
        %3046 = vmatpush2.msra.mxu0 0.0
        %3047 = vmatprep.subr.mxu0 0.0
        %3048 = vmatpush2.msra.mxu0 0.0
        %3049 = vmatprep.subr.mxu0 0.0
        %3050 = vmatpush2.msra.mxu0 0.0
        %3051 = vmatprep.subr.mxu0 0.0
        %3052 = vmatpush2.msra.mxu0 0.0
        %3053 = vmatprep.subr.mxu0 0.0
        %3054 = vmatpush2.msra.mxu0 0.0
        %3055 = vmatprep.subr.mxu0 0.0
        %3056 = vmatpush2.msra.mxu0 0.0
        %3057 = vmatprep.subr.mxu0 0.0
        %3058 = vmatpush2.msra.mxu0 0.0
        %3059 = vmatprep.subr.mxu0 0.0
        %3060 = vmatpush2.msra.mxu0 0.0
        %3061 = vmatprep.subr.mxu0 0.0
        %3062 = vmatpush2.msra.mxu0 0.0
        %3063 = vmatprep.subr.mxu0 0.0
        %3064 = vmatpush2.msra.mxu0 0.0
        %3065 = vmatprep.subr.mxu0 0.0
        %3066 = vmatpush2.msra.mxu0 0.0
        %3067 = vmatprep.subr.mxu0 0.0
        %3068 = vmatpush2.msra.mxu0 0.0
        %3069 = vmatprep.subr.mxu0 0.0
        %3070 = vmatpush2.msra.mxu0 0.0
        %3071 = vmatprep.mubr.f32.mxu0 0.0
        %3072 = vmatmul.mubr.f32.gmra.mxu0 %v2392
        %v3073 = vpop.f32.mrf.mxu0
        %v3074 = vadd.f32 %v2374, %v3073
        %v3075 = vpop.f32.mrf.mxu0
        %3076 = vmatprep.mubr.f32.mxu0 0.0
        %3077 = vmatmul.mubr.f32.gmra.mxu0 %v2395
        %v3078 = vpop.f32.mrf.mxu0
        %v3079 = vadd.f32 %v2379, %v3078
        %v3080 = vpop.f32.mrf.mxu0
        %3081 = vmatprep.mubr.f32.mxu0 0.0
        %3082 = vmatmul.mubr.f32.gmra.mxu0 %v2398
        %v3083 = vpop.f32.mrf.mxu0
        %v3084 = vadd.f32 %v2384, %v3083
        %v3085 = vpop.f32.mrf.mxu0
        %3086 = vmatprep.mubr.f32.mxu0 0.0
        %3087 = vmatmul.mubr.f32.gmra.mxu0 %v2401
        %v3088 = vpop.f32.mrf.mxu0
        %v3089 = vadd.f32 %v2389, %v3088
        %v3090 = vpop.f32.mrf.mxu0
        %3091 = vdwg.mxu0
        %v3092 = vmul.f32 %v3074, 0.5
        %v3093 = vmul.f32 %v3079, 0.5
        %v3094 = vmul.f32 %v3084, 0.5
        %v3095 = vmul.f32 %v3089, 0.5
        %v3096 = vmul.f32 %v3074, 0.044715
        %v3097 = vmul.f32 %v3079, 0.044715
        %v3098 = vmul.f32 %v3084, 0.044715
        %v3099 = vmul.f32 %v3089, 0.044715
        %v3100 = vmul.f32 %v3096, %v3074
        %v3101 = vmul.f32 %v3097, %v3079
        %v3102 = vmul.f32 %v3098, %v3084
        %v3103 = vmul.f32 %v3099, %v3089
        %v3104 = vmul.f32 %v3100, %v3074
        %v3105 = vmul.f32 %v3101, %v3079
        %v3106 = vmul.f32 %v3102, %v3084
        %v3107 = vmul.f32 %v3103, %v3089
        %v3108 = vadd.f32 %v3074, %v3104
        %v3109 = vadd.f32 %v3079, %v3105
        %v3110 = vadd.f32 %v3084, %v3106
        %v3111 = vadd.f32 %v3089, %v3107
        %v3112 = vmul.f32 %v3108, 0.7978846
        %v3113 = vmul.f32 %v3109, 0.7978846
        %v3114 = vmul.f32 %v3110, 0.7978846
        %v3115 = vmul.f32 %v3111, 0.7978846
        %v3116 = vtanh.pop %v3112
        %v3117 = vtanh.pop %v3113
        %v3118 = vtanh.pop %v3114
        %v3119 = vtanh.pop %v3115
        %v3120 = vadd.f32 %v3116, 1.0
        %v3121 = vadd.f32 %v3117, 1.0
        %v3122 = vadd.f32 %v3118, 1.0
        %v3123 = vadd.f32 %v3119, 1.0
        %v3124 = vmul.f32 %v3092, %v3120
        %v3125 = vmul.f32 %v3093, %v3121
        %v3126 = vmul.f32 %v3094, %v3122
        %v3127 = vmul.f32 %v3095, %v3123
        %3128 = vmatprep.subr.mxu0 0.0
        %3129 = vmatpush1.msra.mxu0 0.0
        %3130 = vmatprep.subr.mxu0 0.0
        %3131 = vmatpush1.msra.mxu0 0.0
        %3132 = vmatprep.subr.mxu0 0.0
        %3133 = vmatpush1.msra.mxu0 0.0
        %3134 = vmatprep.subr.mxu0 0.0
        %3135 = vmatpush1.msra.mxu0 0.0
        %3136 = vmatprep.subr.mxu0 0.0
        %3137 = vmatpush1.msra.mxu0 0.0
        %3138 = vmatprep.subr.mxu0 0.0
        %3139 = vmatpush1.msra.mxu0 0.0
        %3140 = vmatprep.subr.mxu0 0.0
        %3141 = vmatpush1.msra.mxu0 0.0
        %3142 = vmatprep.subr.mxu0 0.0
        %3143 = vmatpush1.msra.mxu0 0.0
        %3144 = vmatprep.subr.mxu0 0.0
        %3145 = vmatpush1.msra.mxu0 0.0
        %3146 = vmatprep.subr.mxu0 0.0
        %3147 = vmatpush1.msra.mxu0 0.0
        %3148 = vmatprep.subr.mxu0 0.0
        %3149 = vmatpush1.msra.mxu0 0.0
        %3150 = vmatprep.subr.mxu0 0.0
        %3151 = vmatpush1.msra.mxu0 0.0
        %3152 = vmatprep.subr.mxu0 0.0
        %3153 = vmatpush1.msra.mxu0 %v3127
        %3154 = vmatprep.subr.mxu0 0.0
        %3155 = vmatpush1.msra.mxu0 %v3126
        %3156 = vmatprep.subr.mxu0 0.0
        %3157 = vmatpush1.msra.mxu0 %v3125
        %3158 = vmatprep.subr.mxu0 0.0
        %3159 = vmatpush1.msra.mxu0 %v3124
        %3160 = vmatprep.subr.mxu0 0.0
        %3161 = vmatpush2.msra.mxu0 0.0
        %3162 = vmatprep.subr.mxu0 0.0
        %3163 = vmatpush2.msra.mxu0 0.0
        %3164 = vmatprep.subr.mxu0 0.0
        %3165 = vmatpush2.msra.mxu0 0.0
        %3166 = vmatprep.subr.mxu0 0.0
        %3167 = vmatpush2.msra.mxu0 0.0
        %3168 = vmatprep.subr.mxu0 0.0
        %3169 = vmatpush2.msra.mxu0 0.0
        %3170 = vmatprep.subr.mxu0 0.0
        %3171 = vmatpush2.msra.mxu0 0.0
        %3172 = vmatprep.subr.mxu0 0.0
        %3173 = vmatpush2.msra.mxu0 0.0
        %3174 = vmatprep.subr.mxu0 0.0
        %3175 = vmatpush2.msra.mxu0 0.0
        %3176 = vmatprep.subr.mxu0 0.0
        %3177 = vmatpush2.msra.mxu0 0.0
        %3178 = vmatprep.subr.mxu0 0.0
        %3179 = vmatpush2.msra.mxu0 0.0
        %3180 = vmatprep.subr.mxu0 0.0
        %3181 = vmatpush2.msra.mxu0 0.0
        %3182 = vmatprep.subr.mxu0 0.0
        %3183 = vmatpush2.msra.mxu0 0.0
        %3184 = vmatprep.subr.mxu0 0.0
        %3185 = vmatpush2.msra.mxu0 0.0
        %3186 = vmatprep.subr.mxu0 0.0
        %3187 = vmatpush2.msra.mxu0 0.0
        %3188 = vmatprep.subr.mxu0 0.0
        %3189 = vmatpush2.msra.mxu0 0.0
        %3190 = vmatprep.subr.mxu0 0.0
        %3191 = vmatpush2.msra.mxu0 0.0
        %3192 = vmatprep.mubr.f32.mxu0 0.0
        %3193 = vmatmul.mubr.f32.gmra.mxu0 %v2535
        %v3194 = vpop.f32.mrf.mxu0
        %v3195 = vadd.f32 %v2527, %v3194
        %v3196 = vpop.f32.mrf.mxu0
        %3197 = vmatprep.mubr.f32.mxu0 0.0
        %3198 = vmatmul.mubr.f32.gmra.mxu0 %v2538
        %v3199 = vpop.f32.mrf.mxu0
        %v3200 = vadd.f32 %v2532, %v3199
        %v3201 = vpop.f32.mrf.mxu0
        %3202 = vdwg.mxu0
        %v3203 = vadd.f32 %v2207, %v2607
        %v3204 = vadd.f32 %v2208, %v2612
        %v3205 = vadd.f32 %v2209, %v2803
        %v3206 = vadd.f32 %v2210, %v2808
        %v3207 = vadd.f32 %v2211, %v2999
        %v3208 = vadd.f32 %v2212, %v3004
        %v3209 = vadd.f32 %v2213, %v3195
        %v3210 = vadd.f32 %v2214, %v3200
        %v3211 = vsel %vm634, %v3203, 0.0
        %3212 = vadd.xlane.f32.xlu0 %v3211
        %v3213 = vpop.xlane.xlu0 %3212
        %v3214 = vsel %vm634, %v3204, 0.0
        %3215 = vadd.xlane.f32.xlu0 %v3214
        %v3216 = vpop.xlane.xlu0 %3215
        %v3217 = vsel %vm634, %v3205, 0.0
        %3218 = vadd.xlane.f32.xlu0 %v3217
        %v3219 = vpop.xlane.xlu0 %3218
        %v3220 = vsel %vm634, %v3206, 0.0
        %3221 = vadd.xlane.f32.xlu0 %v3220
        %v3222 = vpop.xlane.xlu0 %3221
        %v3223 = vsel %vm634, %v3207, 0.0
        %3224 = vadd.xlane.f32.xlu0 %v3223
        %v3225 = vpop.xlane.xlu0 %3224
        %v3226 = vsel %vm634, %v3208, 0.0
        %3227 = vadd.xlane.f32.xlu0 %v3226
        %v3228 = vpop.xlane.xlu0 %3227
        %v3229 = vsel %vm634, %v3209, 0.0
        %3230 = vadd.xlane.f32.xlu0 %v3229
        %v3231 = vpop.xlane.xlu0 %3230
        %v3232 = vsel %vm634, %v3210, 0.0
        %3233 = vadd.xlane.f32.xlu0 %v3232
        %v3234 = vpop.xlane.xlu0 %3233
        %v3235 = vmul.f32 %v3213, %v721
        %v3236 = vmul.f32 %v3216, %v721
        %v3237 = vmul.f32 %v3219, %v721
        %v3238 = vmul.f32 %v3222, %v721
        %v3239 = vmul.f32 %v3225, %v721
        %v3240 = vmul.f32 %v3228, %v721
        %v3241 = vmul.f32 %v3231, %v721
        %v3242 = vmul.f32 %v3234, %v721
        %v3243 = vsub.f32 %v3203, %v3235
        %v3244 = vsub.f32 %v3204, %v3236
        %v3245 = vsub.f32 %v3205, %v3237
        %v3246 = vsub.f32 %v3206, %v3238
        %v3247 = vsub.f32 %v3207, %v3239
        %v3248 = vsub.f32 %v3208, %v3240
        %v3249 = vsub.f32 %v3209, %v3241
        %v3250 = vsub.f32 %v3210, %v3242
        %v3251 = vmul.f32 %v3243, %v3243
        %v3252 = vmul.f32 %v3244, %v3244
        %v3253 = vmul.f32 %v3245, %v3245
        %v3254 = vmul.f32 %v3246, %v3246
        %v3255 = vmul.f32 %v3247, %v3247
        %v3256 = vmul.f32 %v3248, %v3248
        %v3257 = vmul.f32 %v3249, %v3249
        %v3258 = vmul.f32 %v3250, %v3250
        %v3259 = vsel %vm634, %v3251, 0.0
        %3260 = vadd.xlane.f32.xlu0 %v3259
        %v3261 = vpop.xlane.xlu0 %3260
        %v3262 = vsel %vm634, %v3252, 0.0
        %3263 = vadd.xlane.f32.xlu0 %v3262
        %v3264 = vpop.xlane.xlu0 %3263
        %v3265 = vsel %vm634, %v3253, 0.0
        %3266 = vadd.xlane.f32.xlu0 %v3265
        %v3267 = vpop.xlane.xlu0 %3266
        %v3268 = vsel %vm634, %v3254, 0.0
        %3269 = vadd.xlane.f32.xlu0 %v3268
        %v3270 = vpop.xlane.xlu0 %3269
        %v3271 = vsel %vm634, %v3255, 0.0
        %3272 = vadd.xlane.f32.xlu0 %v3271
        %v3273 = vpop.xlane.xlu0 %3272
        %v3274 = vsel %vm634, %v3256, 0.0
        %3275 = vadd.xlane.f32.xlu0 %v3274
        %v3276 = vpop.xlane.xlu0 %3275
        %v3277 = vsel %vm634, %v3257, 0.0
        %3278 = vadd.xlane.f32.xlu0 %v3277
        %v3279 = vpop.xlane.xlu0 %3278
        %v3280 = vsel %vm634, %v3258, 0.0
        %3281 = vadd.xlane.f32.xlu0 %v3280
        %v3282 = vpop.xlane.xlu0 %3281
        %v3283 = vmul.f32 %v3261, %v721
        %v3284 = vmul.f32 %v3264, %v721
        %v3285 = vmul.f32 %v3267, %v721
        %v3286 = vmul.f32 %v3270, %v721
        %v3287 = vmul.f32 %v3273, %v721
        %v3288 = vmul.f32 %v3276, %v721
        %v3289 = vmul.f32 %v3279, %v721
        %v3290 = vmul.f32 %v3282, %v721
        %v3291 = vadd.f32 %v3283, 1e-05
        %v3292 = vadd.f32 %v3284, 1e-05
        %v3293 = vadd.f32 %v3285, 1e-05
        %v3294 = vadd.f32 %v3286, 1e-05
        %v3295 = vadd.f32 %v3287, 1e-05
        %v3296 = vadd.f32 %v3288, 1e-05
        %v3297 = vadd.f32 %v3289, 1e-05
        %v3298 = vadd.f32 %v3290, 1e-05
        %v3299 = vrsqrt.pop %v3291
        %v3300 = vrsqrt.pop %v3292
        %v3301 = vrsqrt.pop %v3293
        %v3302 = vrsqrt.pop %v3294
        %v3303 = vrsqrt.pop %v3295
        %v3304 = vrsqrt.pop %v3296
        %v3305 = vrsqrt.pop %v3297
        %v3306 = vrsqrt.pop %v3298
        %v3307 = vmul.f32 %v3243, %v3299
        %v3308 = vmul.f32 %v3244, %v3300
        %v3309 = vmul.f32 %v3245, %v3301
        %v3310 = vmul.f32 %v3246, %v3302
        %v3311 = vmul.f32 %v3247, %v3303
        %v3312 = vmul.f32 %v3248, %v3304
        %v3313 = vmul.f32 %v3249, %v3305
        %v3314 = vmul.f32 %v3250, %v3306
        %v3315 = vlaneseq
        %v3316 = vshrl.u32 %v3315, 7
        %v3317 = vsub.s32 1, %v3316
        %v3318 = vrot.slane %v2224, %v3317
        %v3319 = vmul.f32 %v3307, %v3318
        %v3320 = vmul.f32 %v3308, %v3318
        %v3321 = vmul.f32 %v3309, %v3318
        %v3322 = vmul.f32 %v3310, %v3318
        %v3323 = vmul.f32 %v3311, %v3318
        %v3324 = vmul.f32 %v3312, %v3318
        %v3325 = vmul.f32 %v3313, %v3318
        %v3326 = vmul.f32 %v3314, %v3318
        %v3327 = vlaneseq
        %v3328 = vshrl.u32 %v3327, 7
        %v3329 = vsub.s32 1, %v3328
        %v3330 = vrot.slane %v2226, %v3329
        %v3331 = vadd.f32 %v3319, %v3330
        %v3332 = vadd.f32 %v3320, %v3330
        %v3333 = vadd.f32 %v3321, %v3330
        %v3334 = vadd.f32 %v3322, %v3330
        %v3335 = vadd.f32 %v3323, %v3330
        %v3336 = vadd.f32 %v3324, %v3330
        %v3337 = vadd.f32 %v3325, %v3330
        %v3338 = vadd.f32 %v3326, %v3330
        %s3339 = scalar_lea.vmem %s9, 32
        %v3340 = vld [vmem:[%s3339] sm:$0xff]
        %v3341 = vld [vmem:[%s3339 + $0x8] sm:$0xff]
        %v3342 = vld [vmem:[%s3339 + $0x10] sm:$0xff]
        %v3343 = vld [vmem:[%s3339 + $0x18] sm:$0xff]
        %s3344 = scalar_lea.vmem %s10, 1
        %v3345 = vld [vmem:[%s3344] sm:$0x1]
        %v3347 = vlaneseq
        %v3348 = vshrl.u32 %v3347, 7
        %v3349 = vsub.s32 0, %v3348
        %v3350 = vrot.slane %v3345, %v3349
        %v3353 = vsel %vm634, %v3331, 0
        %v3356 = vsel %vm634, %v3332, 0
        %v3359 = vsel %vm634, %v3333, 0
        %v3362 = vsel %vm634, %v3334, 0
        %v3365 = vsel %vm634, %v3335, 0
        %v3368 = vsel %vm634, %v3336, 0
        %v3371 = vsel %vm634, %v3337, 0
        %v3374 = vsel %vm634, %v3338, 0
        %3376 = vmatprep.subr.mxu0 0.0
        %3377 = vmatpush1.msra.mxu0 0.0
        %3378 = vmatprep.subr.mxu0 0.0
        %3379 = vmatpush1.msra.mxu0 0.0
        %3380 = vmatprep.subr.mxu0 0.0
        %3381 = vmatpush1.msra.mxu0 0.0
        %3382 = vmatprep.subr.mxu0 0.0
        %3383 = vmatpush1.msra.mxu0 0.0
        %3384 = vmatprep.subr.mxu0 0.0
        %3385 = vmatpush1.msra.mxu0 0.0
        %3386 = vmatprep.subr.mxu0 0.0
        %3387 = vmatpush1.msra.mxu0 0.0
        %3388 = vmatprep.subr.mxu0 0.0
        %3389 = vmatpush1.msra.mxu0 0.0
        %3390 = vmatprep.subr.mxu0 0.0
        %3391 = vmatpush1.msra.mxu0 0.0
        %3392 = vmatprep.subr.mxu0 0.0
        %3393 = vmatpush1.msra.mxu0 0.0
        %3394 = vmatprep.subr.mxu0 0.0
        %3395 = vmatpush1.msra.mxu0 0.0
        %3396 = vmatprep.subr.mxu0 0.0
        %3397 = vmatpush1.msra.mxu0 0.0
        %3398 = vmatprep.subr.mxu0 0.0
        %3399 = vmatpush1.msra.mxu0 0.0
        %3400 = vmatprep.subr.mxu0 0.0
        %3401 = vmatpush1.msra.mxu0 %v3343
        %3402 = vmatprep.subr.mxu0 0.0
        %3403 = vmatpush1.msra.mxu0 %v3342
        %3404 = vmatprep.subr.mxu0 0.0
        %3405 = vmatpush1.msra.mxu0 %v3341
        %3406 = vmatprep.subr.mxu0 0.0
        %3407 = vmatpush1.msra.mxu0 %v3340
        %3408 = vmatprep.subr.mxu0 0.0
        %3409 = vmatpush2.msra.mxu0 0.0
        %3410 = vmatprep.subr.mxu0 0.0
        %3411 = vmatpush2.msra.mxu0 0.0
        %3412 = vmatprep.subr.mxu0 0.0
        %3413 = vmatpush2.msra.mxu0 0.0
        %3414 = vmatprep.subr.mxu0 0.0
        %3415 = vmatpush2.msra.mxu0 0.0
        %3416 = vmatprep.subr.mxu0 0.0
        %3417 = vmatpush2.msra.mxu0 0.0
        %3418 = vmatprep.subr.mxu0 0.0
        %3419 = vmatpush2.msra.mxu0 0.0
        %3420 = vmatprep.subr.mxu0 0.0
        %3421 = vmatpush2.msra.mxu0 0.0
        %3422 = vmatprep.subr.mxu0 0.0
        %3423 = vmatpush2.msra.mxu0 0.0
        %3424 = vmatprep.subr.mxu0 0.0
        %3425 = vmatpush2.msra.mxu0 0.0
        %3426 = vmatprep.subr.mxu0 0.0
        %3427 = vmatpush2.msra.mxu0 0.0
        %3428 = vmatprep.subr.mxu0 0.0
        %3429 = vmatpush2.msra.mxu0 0.0
        %3430 = vmatprep.subr.mxu0 0.0
        %3431 = vmatpush2.msra.mxu0 0.0
        %3432 = vmatprep.subr.mxu0 0.0
        %3433 = vmatpush2.msra.mxu0 0.0
        %3434 = vmatprep.subr.mxu0 0.0
        %3435 = vmatpush2.msra.mxu0 0.0
        %3436 = vmatprep.subr.mxu0 0.0
        %3437 = vmatpush2.msra.mxu0 0.0
        %3438 = vmatprep.subr.mxu0 0.0
        %3439 = vmatpush2.msra.mxu0 0.0
        %3440 = vmatprep.mubr.f32.mxu0 0.0
        %3441 = vmatmul.mubr.f32.gmra.mxu0 %v3353
        %v3442 = vpop.f32.mrf.mxu0
        %v3443 = vadd.f32 %v3350, %v3442
        %v3444 = vpop.f32.mrf.mxu0
        %3445 = vmatprep.mubr.f32.mxu0 0.0
        %3446 = vmatmul.mubr.f32.gmra.mxu0 %v3356
        %v3447 = vpop.f32.mrf.mxu0
        %v3448 = vadd.f32 %v3350, %v3447
        %v3449 = vpop.f32.mrf.mxu0
        %3450 = vmatprep.mubr.f32.mxu0 0.0
        %3451 = vmatmul.mubr.f32.gmra.mxu0 %v3359
        %v3452 = vpop.f32.mrf.mxu0
        %v3453 = vadd.f32 %v3350, %v3452
        %v3454 = vpop.f32.mrf.mxu0
        %3455 = vmatprep.mubr.f32.mxu0 0.0
        %3456 = vmatmul.mubr.f32.gmra.mxu0 %v3362
        %v3457 = vpop.f32.mrf.mxu0
        %v3458 = vadd.f32 %v3350, %v3457
        %v3459 = vpop.f32.mrf.mxu0
        %3460 = vmatprep.mubr.f32.mxu0 0.0
        %3461 = vmatmul.mubr.f32.gmra.mxu0 %v3365
        %v3462 = vpop.f32.mrf.mxu0
        %v3463 = vadd.f32 %v3350, %v3462
        %v3464 = vpop.f32.mrf.mxu0
        %3465 = vmatprep.mubr.f32.mxu0 0.0
        %3466 = vmatmul.mubr.f32.gmra.mxu0 %v3368
        %v3467 = vpop.f32.mrf.mxu0
        %v3468 = vadd.f32 %v3350, %v3467
        %v3469 = vpop.f32.mrf.mxu0
        %3470 = vmatprep.mubr.f32.mxu0 0.0
        %3471 = vmatmul.mubr.f32.gmra.mxu0 %v3371
        %v3472 = vpop.f32.mrf.mxu0
        %v3473 = vadd.f32 %v3350, %v3472
        %v3474 = vpop.f32.mrf.mxu0
        %3475 = vmatprep.mubr.f32.mxu0 0.0
        %3476 = vmatmul.mubr.f32.gmra.mxu0 %v3374
        %v3477 = vpop.f32.mrf.mxu0
        %v3478 = vadd.f32 %v3350, %v3477
        %v3479 = vpop.f32.mrf.mxu0
        %3480 = vdwg.mxu0
        %v3481 = vmul.f32 %v3443, 0.5
        %v3482 = vmul.f32 %v3448, 0.5
        %v3483 = vmul.f32 %v3453, 0.5
        %v3484 = vmul.f32 %v3458, 0.5
        %v3485 = vmul.f32 %v3463, 0.5
        %v3486 = vmul.f32 %v3468, 0.5
        %v3487 = vmul.f32 %v3473, 0.5
        %v3488 = vmul.f32 %v3478, 0.5
        %v3489 = vmul.f32 %v3443, 0.044715
        %v3490 = vmul.f32 %v3448, 0.044715
        %v3491 = vmul.f32 %v3453, 0.044715
        %v3492 = vmul.f32 %v3458, 0.044715
        %v3493 = vmul.f32 %v3463, 0.044715
        %v3494 = vmul.f32 %v3468, 0.044715
        %v3495 = vmul.f32 %v3473, 0.044715
        %v3496 = vmul.f32 %v3478, 0.044715
        %v3497 = vmul.f32 %v3489, %v3443
        %v3498 = vmul.f32 %v3490, %v3448
        %v3499 = vmul.f32 %v3491, %v3453
        %v3500 = vmul.f32 %v3492, %v3458
        %v3501 = vmul.f32 %v3493, %v3463
        %v3502 = vmul.f32 %v3494, %v3468
        %v3503 = vmul.f32 %v3495, %v3473
        %v3504 = vmul.f32 %v3496, %v3478
        %v3505 = vmul.f32 %v3497, %v3443
        %v3506 = vmul.f32 %v3498, %v3448
        %v3507 = vmul.f32 %v3499, %v3453
        %v3508 = vmul.f32 %v3500, %v3458
        %v3509 = vmul.f32 %v3501, %v3463
        %v3510 = vmul.f32 %v3502, %v3468
        %v3511 = vmul.f32 %v3503, %v3473
        %v3512 = vmul.f32 %v3504, %v3478
        %v3513 = vadd.f32 %v3443, %v3505
        %v3514 = vadd.f32 %v3448, %v3506
        %v3515 = vadd.f32 %v3453, %v3507
        %v3516 = vadd.f32 %v3458, %v3508
        %v3517 = vadd.f32 %v3463, %v3509
        %v3518 = vadd.f32 %v3468, %v3510
        %v3519 = vadd.f32 %v3473, %v3511
        %v3520 = vadd.f32 %v3478, %v3512
        %v3521 = vmul.f32 %v3513, 0.7978846
        %v3522 = vmul.f32 %v3514, 0.7978846
        %v3523 = vmul.f32 %v3515, 0.7978846
        %v3524 = vmul.f32 %v3516, 0.7978846
        %v3525 = vmul.f32 %v3517, 0.7978846
        %v3526 = vmul.f32 %v3518, 0.7978846
        %v3527 = vmul.f32 %v3519, 0.7978846
        %v3528 = vmul.f32 %v3520, 0.7978846
        %v3529 = vtanh.pop %v3521
        %v3530 = vtanh.pop %v3522
        %v3531 = vtanh.pop %v3523
        %v3532 = vtanh.pop %v3524
        %v3533 = vtanh.pop %v3525
        %v3534 = vtanh.pop %v3526
        %v3535 = vtanh.pop %v3527
        %v3536 = vtanh.pop %v3528
        %v3537 = vadd.f32 %v3529, 1.0
        %v3538 = vadd.f32 %v3530, 1.0
        %v3539 = vadd.f32 %v3531, 1.0
        %v3540 = vadd.f32 %v3532, 1.0
        %v3541 = vadd.f32 %v3533, 1.0
        %v3542 = vadd.f32 %v3534, 1.0
        %v3543 = vadd.f32 %v3535, 1.0
        %v3544 = vadd.f32 %v3536, 1.0
        %v3545 = vmul.f32 %v3481, %v3537
        %v3546 = vmul.f32 %v3482, %v3538
        %v3547 = vmul.f32 %v3483, %v3539
        %v3548 = vmul.f32 %v3484, %v3540
        %v3549 = vmul.f32 %v3485, %v3541
        %v3550 = vmul.f32 %v3486, %v3542
        %v3551 = vmul.f32 %v3487, %v3543
        %v3552 = vmul.f32 %v3488, %v3544
        %s3553 = scalar_lea.vmem %s11, 64
        %v3554 = vld [vmem:[%s3553] sm:$0xff]
        %v3555 = vld [vmem:[%s3553 + $0x8] sm:$0xff]
        %v3556 = vld [vmem:[%s3553 + $0x10] sm:$0xff]
        %v3557 = vld [vmem:[%s3553 + $0x18] sm:$0xff]
        %v3558 = vld [vmem:[%s3553 + $0x20] sm:$0xff]
        %v3559 = vld [vmem:[%s3553 + $0x28] sm:$0xff]
        %v3560 = vld [vmem:[%s3553 + $0x30] sm:$0xff]
        %v3561 = vld [vmem:[%s3553 + $0x38] sm:$0xff]
        %s3562 = scalar_lea.vmem %s12, 1
        %v3563 = vld [vmem:[%s3562] sm:$0x1]
        %v3565 = vlaneseq
        %v3566 = vshrl.u32 %v3565, 7
        %v3567 = vsub.s32 0, %v3566
        %v3568 = vrot.slane %v3563, %v3567
        %v3571 = vsel %vm2021, %v3545, 0
        %v3574 = vsel %vm2021, %v3546, 0
        %v3577 = vsel %vm2021, %v3547, 0
        %v3580 = vsel %vm2021, %v3548, 0
        %v3583 = vsel %vm2021, %v3549, 0
        %v3586 = vsel %vm2021, %v3550, 0
        %v3589 = vsel %vm2021, %v3551, 0
        %v3592 = vsel %vm2021, %v3552, 0
        %3594 = vmatprep.subr.mxu0 0.0
        %3595 = vmatpush1.msra.mxu0 0.0
        %3596 = vmatprep.subr.mxu0 0.0
        %3597 = vmatpush1.msra.mxu0 0.0
        %3598 = vmatprep.subr.mxu0 0.0
        %3599 = vmatpush1.msra.mxu0 0.0
        %3600 = vmatprep.subr.mxu0 0.0
        %3601 = vmatpush1.msra.mxu0 0.0
        %3602 = vmatprep.subr.mxu0 0.0
        %3603 = vmatpush1.msra.mxu0 0.0
        %3604 = vmatprep.subr.mxu0 0.0
        %3605 = vmatpush1.msra.mxu0 0.0
        %3606 = vmatprep.subr.mxu0 0.0
        %3607 = vmatpush1.msra.mxu0 0.0
        %3608 = vmatprep.subr.mxu0 0.0
        %3609 = vmatpush1.msra.mxu0 0.0
        %3610 = vmatprep.subr.mxu0 0.0
        %3611 = vmatpush1.msra.mxu0 %v3561
        %3612 = vmatprep.subr.mxu0 0.0
        %3613 = vmatpush1.msra.mxu0 %v3560
        %3614 = vmatprep.subr.mxu0 0.0
        %3615 = vmatpush1.msra.mxu0 %v3559
        %3616 = vmatprep.subr.mxu0 0.0
        %3617 = vmatpush1.msra.mxu0 %v3558
        %3618 = vmatprep.subr.mxu0 0.0
        %3619 = vmatpush1.msra.mxu0 %v3557
        %3620 = vmatprep.subr.mxu0 0.0
        %3621 = vmatpush1.msra.mxu0 %v3556
        %3622 = vmatprep.subr.mxu0 0.0
        %3623 = vmatpush1.msra.mxu0 %v3555
        %3624 = vmatprep.subr.mxu0 0.0
        %3625 = vmatpush1.msra.mxu0 %v3554
        %3626 = vmatprep.subr.mxu0 0.0
        %3627 = vmatpush2.msra.mxu0 0.0
        %3628 = vmatprep.subr.mxu0 0.0
        %3629 = vmatpush2.msra.mxu0 0.0
        %3630 = vmatprep.subr.mxu0 0.0
        %3631 = vmatpush2.msra.mxu0 0.0
        %3632 = vmatprep.subr.mxu0 0.0
        %3633 = vmatpush2.msra.mxu0 0.0
        %3634 = vmatprep.subr.mxu0 0.0
        %3635 = vmatpush2.msra.mxu0 0.0
        %3636 = vmatprep.subr.mxu0 0.0
        %3637 = vmatpush2.msra.mxu0 0.0
        %3638 = vmatprep.subr.mxu0 0.0
        %3639 = vmatpush2.msra.mxu0 0.0
        %3640 = vmatprep.subr.mxu0 0.0
        %3641 = vmatpush2.msra.mxu0 0.0
        %3642 = vmatprep.subr.mxu0 0.0
        %3643 = vmatpush2.msra.mxu0 0.0
        %3644 = vmatprep.subr.mxu0 0.0
        %3645 = vmatpush2.msra.mxu0 0.0
        %3646 = vmatprep.subr.mxu0 0.0
        %3647 = vmatpush2.msra.mxu0 0.0
        %3648 = vmatprep.subr.mxu0 0.0
        %3649 = vmatpush2.msra.mxu0 0.0
        %3650 = vmatprep.subr.mxu0 0.0
        %3651 = vmatpush2.msra.mxu0 0.0
        %3652 = vmatprep.subr.mxu0 0.0
        %3653 = vmatpush2.msra.mxu0 0.0
        %3654 = vmatprep.subr.mxu0 0.0
        %3655 = vmatpush2.msra.mxu0 0.0
        %3656 = vmatprep.subr.mxu0 0.0
        %3657 = vmatpush2.msra.mxu0 0.0
        %3658 = vmatprep.mubr.f32.mxu0 0.0
        %3659 = vmatmul.mubr.f32.gmra.mxu0 %v3571
        %v3660 = vpop.f32.mrf.mxu0
        %v3661 = vadd.f32 %v3568, %v3660
        %v3662 = vpop.f32.mrf.mxu0
        %3663 = vmatprep.mubr.f32.mxu0 0.0
        %3664 = vmatmul.mubr.f32.gmra.mxu0 %v3574
        %v3665 = vpop.f32.mrf.mxu0
        %v3666 = vadd.f32 %v3568, %v3665
        %v3667 = vpop.f32.mrf.mxu0
        %3668 = vmatprep.mubr.f32.mxu0 0.0
        %3669 = vmatmul.mubr.f32.gmra.mxu0 %v3577
        %v3670 = vpop.f32.mrf.mxu0
        %v3671 = vadd.f32 %v3568, %v3670
        %v3672 = vpop.f32.mrf.mxu0
        %3673 = vmatprep.mubr.f32.mxu0 0.0
        %3674 = vmatmul.mubr.f32.gmra.mxu0 %v3580
        %v3675 = vpop.f32.mrf.mxu0
        %v3676 = vadd.f32 %v3568, %v3675
        %v3677 = vpop.f32.mrf.mxu0
        %3678 = vmatprep.mubr.f32.mxu0 0.0
        %3679 = vmatmul.mubr.f32.gmra.mxu0 %v3583
        %v3680 = vpop.f32.mrf.mxu0
        %v3681 = vadd.f32 %v3568, %v3680
        %v3682 = vpop.f32.mrf.mxu0
        %3683 = vmatprep.mubr.f32.mxu0 0.0
        %3684 = vmatmul.mubr.f32.gmra.mxu0 %v3586
        %v3685 = vpop.f32.mrf.mxu0
        %v3686 = vadd.f32 %v3568, %v3685
        %v3687 = vpop.f32.mrf.mxu0
        %3688 = vmatprep.mubr.f32.mxu0 0.0
        %3689 = vmatmul.mubr.f32.gmra.mxu0 %v3589
        %v3690 = vpop.f32.mrf.mxu0
        %v3691 = vadd.f32 %v3568, %v3690
        %v3692 = vpop.f32.mrf.mxu0
        %3693 = vmatprep.mubr.f32.mxu0 0.0
        %3694 = vmatmul.mubr.f32.gmra.mxu0 %v3592
        %v3695 = vpop.f32.mrf.mxu0
        %v3696 = vadd.f32 %v3568, %v3695
        %v3697 = vpop.f32.mrf.mxu0
        %3698 = vdwg.mxu0
        %v3699 = vadd.f32 %v3203, %v3661
        %v3700 = vadd.f32 %v3204, %v3666
        %v3701 = vadd.f32 %v3205, %v3671
        %v3702 = vadd.f32 %v3206, %v3676
        %v3703 = vadd.f32 %v3207, %v3681
        %v3704 = vadd.f32 %v3208, %v3686
        %v3705 = vadd.f32 %v3209, %v3691
        %v3706 = vadd.f32 %v3210, %v3696
        %v3707 = vmul.f32 %v3699, %v3699
        %v3708 = vmul.f32 %v3700, %v3700
        %v3709 = vmul.f32 %v3701, %v3701
        %v3710 = vmul.f32 %v3702, %v3702
        %v3711 = vmul.f32 %v3703, %v3703
        %v3712 = vmul.f32 %v3704, %v3704
        %v3713 = vmul.f32 %v3705, %v3705
        %v3714 = vmul.f32 %v3706, %v3706
        %v3715 = vsel %vm634, %v3707, 0.0
        %3716 = vadd.xlane.f32.xlu0 %v3715
        %v3717 = vpop.xlane.xlu0 %3716
        %v3718 = vsel %vm634, %v3708, 0.0
        %3719 = vadd.xlane.f32.xlu0 %v3718
        %v3720 = vpop.xlane.xlu0 %3719
        %v3721 = vsel %vm634, %v3709, 0.0
        %3722 = vadd.xlane.f32.xlu0 %v3721
        %v3723 = vpop.xlane.xlu0 %3722
        %v3724 = vsel %vm634, %v3710, 0.0
        %3725 = vadd.xlane.f32.xlu0 %v3724
        %v3726 = vpop.xlane.xlu0 %3725
        %v3727 = vsel %vm634, %v3711, 0.0
        %3728 = vadd.xlane.f32.xlu0 %v3727
        %v3729 = vpop.xlane.xlu0 %3728
        %v3730 = vsel %vm634, %v3712, 0.0
        %3731 = vadd.xlane.f32.xlu0 %v3730
        %v3732 = vpop.xlane.xlu0 %3731
        %v3733 = vsel %vm634, %v3713, 0.0
        %3734 = vadd.xlane.f32.xlu0 %v3733
        %v3735 = vpop.xlane.xlu0 %3734
        %v3736 = vsel %vm634, %v3714, 0.0
        %3737 = vadd.xlane.f32.xlu0 %v3736
        %v3738 = vpop.xlane.xlu0 %3737
        %v3739 = vadd.f32 %v3717, 0.0001
        %v3740 = vadd.f32 %v3720, 0.0001
        %v3741 = vadd.f32 %v3723, 0.0001
        %v3742 = vadd.f32 %v3726, 0.0001
        %v3743 = vadd.f32 %v3729, 0.0001
        %v3744 = vadd.f32 %v3732, 0.0001
        %v3745 = vadd.f32 %v3735, 0.0001
        %v3746 = vadd.f32 %v3738, 0.0001
        %v3747 = vrsqrt.pop %v3739
        %v3748 = vrsqrt.pop %v3740
        %v3749 = vrsqrt.pop %v3741
        %v3750 = vrsqrt.pop %v3742
        %v3751 = vrsqrt.pop %v3743
        %v3752 = vrsqrt.pop %v3744
        %v3753 = vrsqrt.pop %v3745
        %v3754 = vrsqrt.pop %v3746
        %v3755 = vmul.f32 %v3699, %v3747
        %v3756 = vmul.f32 %v3700, %v3748
        %v3757 = vmul.f32 %v3701, %v3749
        %v3758 = vmul.f32 %v3702, %v3750
        %v3759 = vmul.f32 %v3703, %v3751
        %v3760 = vmul.f32 %v3704, %v3752
        %v3761 = vmul.f32 %v3705, %v3753
        %v3762 = vmul.f32 %v3706, %v3754
        %s3763 = scalar_lea.vmem %s458, 64 [#allocation2]
        %3764 = vst.msk [vmem:[%s3763] sm:$0xff] %vm634, %v3755
        %3765 = vst.msk [vmem:[%s3763 + $0x8] sm:$0xff] %vm634, %v3756
        %3766 = vst.msk [vmem:[%s3763 + $0x10] sm:$0xff] %vm634, %v3757
        %3767 = vst.msk [vmem:[%s3763 + $0x18] sm:$0xff] %vm634, %v3758
        %3768 = vst.msk [vmem:[%s3763 + $0x20] sm:$0xff] %vm634, %v3759
        %3769 = vst.msk [vmem:[%s3763 + $0x28] sm:$0xff] %vm634, %v3760
        %3770 = vst.msk [vmem:[%s3763 + $0x30] sm:$0xff] %vm634, %v3761
        %3771 = vst.msk [vmem:[%s3763 + $0x38] sm:$0xff] %vm634, %v3762
        %3772 = vst.msk [vmem:[%s477] sm:$0xff] %vm634, %v3755
        %3773 = vst.msk [vmem:[%s477 + $0x8] sm:$0xff] %vm634, %v3756
        %3774 = vst.msk [vmem:[%s477 + $0x10] sm:$0xff] %vm634, %v3757
        %3775 = vst.msk [vmem:[%s477 + $0x18] sm:$0xff] %vm634, %v3758
        %3776 = vst.msk [vmem:[%s477 + $0x20] sm:$0xff] %vm634, %v3759
        %3777 = vst.msk [vmem:[%s477 + $0x28] sm:$0xff] %vm634, %v3760
        %3778 = vst.msk [vmem:[%s477 + $0x30] sm:$0xff] %vm634, %v3761
        %3779 = vst.msk [vmem:[%s477 + $0x38] sm:$0xff] %vm634, %v3762
        %s3780 = sand.u32 %s312, 1
        %s3781 = sand.u32 %s312, 1
        %s3782 = smul.addr %s3781, 128
        %s3783 = scalar_lea.vmem [#allocation2], %s3782
        %s3784 = smul.u32 8, %s26
        %p3785 = scmp.lt.s32.totalorder %s3784, 15
        %s3786 = scalar_select %p3785, %s3784, 15
        %s3787 = smul.addr %s3786, 8
        %s3788 = scalar_lea.vmem %s14, %s3787
        // Predicated region
        $region73: #{tpu_custom_call.1} parent=71 // pred_check
          %p3789 = pneg %p322
        $region74: #{tpu_custom_call.1} parent=71 // pred_check_branch
          %3791 = sbr.rel (%p3789) target = $region76
        $region75: #{tpu_custom_call.1} parent=71 // pred_region
          %s3792 = smul.u32 8, %s26
          %s3793 = smul.addr %s3792, 8
          %s3794 = scalar_lea.vmem %s13, %s3793
          // Predicated region
          $region77: #{tpu_custom_call.1} parent=75 // pred_check
            _
          $region78: #{tpu_custom_call.1} parent=75 // pred_check_branch
            %3796 = sbr.rel (0) target = $region80
          $region79: #{tpu_custom_call.1} parent=75 // pred_region
            // Predicated region
            $region81: #{tpu_custom_call.1} parent=79 // pred_check
              _
            $region82: #{tpu_custom_call.1} parent=79 // pred_check_branch
              %3798 = sbr.rel (0) target = $region84
            $region83: #{tpu_custom_call.1} parent=79 // pred_region
              // Predicated region
              $region96: #{tpu_custom_call.1} parent=83 // pred_check
                _
              $region97: #{tpu_custom_call.1} parent=83 // pred_check_branch
                %3844 = sbr.rel (0) target = $region99
              $region98: #{tpu_custom_call.1} parent=83 // pred_region
                loop: start=0, step=1, limit=1
                $region100: #{tpu_custom_call.1} parent=98 // loop_pre_header
                  _
                $region101: #{tpu_custom_call.1} parent=98 // loop_header
                  %s3846 = sphi 0, %s3850
                  %p3847 = scmp.ge.s32.totalorder %s3846, 1
                  %s3851 = sphi %s3783, %s3783
                  %s3852 = sphi %s3794, %s3794
                $region102: #{tpu_custom_call.1} parent=98 // loop_header_branch
                  %3849 = sbr.rel (%p3847) target = $region106
                $region103: #{tpu_custom_call.1} parent=98 // loop_body
                  %v3853 = vld [vmem:[%s3851] sm:$0xff]
                  %3854 = vst [vmem:[%s3852] sm:$0xff] %v3853
                  %v3855 = vld [vmem:[%s3851 + $0x8] sm:$0xff]
                  %3856 = vst [vmem:[%s3852 + $0x8] sm:$0xff] %v3855
                  %v3857 = vld [vmem:[%s3851 + $0x10] sm:$0xff]
                  %3858 = vst [vmem:[%s3852 + $0x10] sm:$0xff] %v3857
                  %v3859 = vld [vmem:[%s3851 + $0x18] sm:$0xff]
                  %3860 = vst [vmem:[%s3852 + $0x18] sm:$0xff] %v3859
                  %v3861 = vld [vmem:[%s3851 + $0x20] sm:$0xff]
                  %3862 = vst [vmem:[%s3852 + $0x20] sm:$0xff] %v3861
                  %v3863 = vld [vmem:[%s3851 + $0x28] sm:$0xff]
                  %3864 = vst [vmem:[%s3852 + $0x28] sm:$0xff] %v3863
                  %v3865 = vld [vmem:[%s3851 + $0x30] sm:$0xff]
                  %3866 = vst [vmem:[%s3852 + $0x30] sm:$0xff] %v3865
                  %v3867 = vld [vmem:[%s3851 + $0x38] sm:$0xff]
                  %3868 = vst [vmem:[%s3852 + $0x38] sm:$0xff] %v3867
                  %v3869 = vld [vmem:[%s3851 + $0x40] sm:$0xff]
                  %3870 = vst [vmem:[%s3852 + $0x80] sm:$0xff] %v3869
                  %v3871 = vld [vmem:[%s3851 + $0x48] sm:$0xff]
                  %3872 = vst [vmem:[%s3852 + $0x88] sm:$0xff] %v3871
                  %v3873 = vld [vmem:[%s3851 + $0x50] sm:$0xff]
                  %3874 = vst [vmem:[%s3852 + $0x90] sm:$0xff] %v3873
                  %v3875 = vld [vmem:[%s3851 + $0x58] sm:$0xff]
                  %3876 = vst [vmem:[%s3852 + $0x98] sm:$0xff] %v3875
                  %v3877 = vld [vmem:[%s3851 + $0x60] sm:$0xff]
                  %3878 = vst [vmem:[%s3852 + $0xa0] sm:$0xff] %v3877
                  %v3879 = vld [vmem:[%s3851 + $0x68] sm:$0xff]
                  %3880 = vst [vmem:[%s3852 + $0xa8] sm:$0xff] %v3879
                  %v3881 = vld [vmem:[%s3851 + $0x70] sm:$0xff]
                  %3882 = vst [vmem:[%s3852 + $0xb0] sm:$0xff] %v3881
                  %v3883 = vld [vmem:[%s3851 + $0x78] sm:$0xff]
                  %3884 = vst [vmem:[%s3852 + $0xb8] sm:$0xff] %v3883
                $region104: #{tpu_custom_call.1} parent=98 // loop_footer
                  %s3850 = sadd.s32 1, %s3846
                $region105: #{tpu_custom_call.1} parent=98 // loop_footer_branch
                  %3845 = sbr.rel target = $region101
                $region106: #{tpu_custom_call.1} parent=98 // loop_exit
                  _
              $region99: #{tpu_custom_call.1} parent=83 // pred_fallthru
                _
              // Predicated region
              $region107: #{tpu_custom_call.1} parent=83 // pred_check
                _
              $region108: #{tpu_custom_call.1} parent=83 // pred_check_branch
                %3886 = sbr.rel target = $region110
              $region109: #{tpu_custom_call.1} parent=83 // pred_region
                _
              $region110: #{tpu_custom_call.1} parent=83 // pred_fallthru
                _
            $region84: #{tpu_custom_call.1} parent=79 // pred_fallthru
              _
            // Predicated region
            $region85: #{tpu_custom_call.1} parent=79 // pred_check
              _
            $region86: #{tpu_custom_call.1} parent=79 // pred_check_branch
              %3800 = sbr.rel target = $region88
            $region87: #{tpu_custom_call.1} parent=79 // pred_region
              %s3802 = ssub.s32 256, 1
              loop: start=0, step=1, limit=1
              $region89: #{tpu_custom_call.1} parent=87 // loop_pre_header
                _
              $region90: #{tpu_custom_call.1} parent=87 // loop_header
                %s3804 = sphi 0, %s3808
                %p3805 = scmp.ge.s32.totalorder %s3804, 1
                %s3809 = sphi %s3783, %s3783
                %s3810 = sphi %s3794, %s3794
              $region91: #{tpu_custom_call.1} parent=87 // loop_header_branch
                %3807 = sbr.rel (%p3805) target = $region95
              $region92: #{tpu_custom_call.1} parent=87 // loop_body
                %v3811 = vld [vmem:[%s3809] sm:%s3802]
                %3812 = vst [vmem:[%s3810] sm:%s3802] %v3811
                %v3813 = vld [vmem:[%s3809 + $0x8] sm:%s3802]
                %3814 = vst [vmem:[%s3810 + $0x8] sm:%s3802] %v3813
                %v3815 = vld [vmem:[%s3809 + $0x10] sm:%s3802]
                %3816 = vst [vmem:[%s3810 + $0x10] sm:%s3802] %v3815
                %v3817 = vld [vmem:[%s3809 + $0x18] sm:%s3802]
                %3818 = vst [vmem:[%s3810 + $0x18] sm:%s3802] %v3817
                %v3819 = vld [vmem:[%s3809 + $0x20] sm:%s3802]
                %3820 = vst [vmem:[%s3810 + $0x20] sm:%s3802] %v3819
                %v3821 = vld [vmem:[%s3809 + $0x28] sm:%s3802]
                %3822 = vst [vmem:[%s3810 + $0x28] sm:%s3802] %v3821
                %v3823 = vld [vmem:[%s3809 + $0x30] sm:%s3802]
                %3824 = vst [vmem:[%s3810 + $0x30] sm:%s3802] %v3823
                %v3825 = vld [vmem:[%s3809 + $0x38] sm:%s3802]
                %3826 = vst [vmem:[%s3810 + $0x38] sm:%s3802] %v3825
                %v3827 = vld [vmem:[%s3809 + $0x40] sm:%s3802]
                %3828 = vst [vmem:[%s3810 + $0x80] sm:%s3802] %v3827
                %v3829 = vld [vmem:[%s3809 + $0x48] sm:%s3802]
                %3830 = vst [vmem:[%s3810 + $0x88] sm:%s3802] %v3829
                %v3831 = vld [vmem:[%s3809 + $0x50] sm:%s3802]
                %3832 = vst [vmem:[%s3810 + $0x90] sm:%s3802] %v3831
                %v3833 = vld [vmem:[%s3809 + $0x58] sm:%s3802]
                %3834 = vst [vmem:[%s3810 + $0x98] sm:%s3802] %v3833
                %v3835 = vld [vmem:[%s3809 + $0x60] sm:%s3802]
                %3836 = vst [vmem:[%s3810 + $0xa0] sm:%s3802] %v3835
                %v3837 = vld [vmem:[%s3809 + $0x68] sm:%s3802]
                %3838 = vst [vmem:[%s3810 + $0xa8] sm:%s3802] %v3837
                %v3839 = vld [vmem:[%s3809 + $0x70] sm:%s3802]
                %3840 = vst [vmem:[%s3810 + $0xb0] sm:%s3802] %v3839
                %v3841 = vld [vmem:[%s3809 + $0x78] sm:%s3802]
                %3842 = vst [vmem:[%s3810 + $0xb8] sm:%s3802] %v3841
              $region93: #{tpu_custom_call.1} parent=87 // loop_footer
                %s3808 = sadd.s32 1, %s3804
              $region94: #{tpu_custom_call.1} parent=87 // loop_footer_branch
                %3803 = sbr.rel target = $region90
              $region95: #{tpu_custom_call.1} parent=87 // loop_exit
                _
            $region88: #{tpu_custom_call.1} parent=79 // pred_fallthru
              _
          $region80: #{tpu_custom_call.1} parent=75 // pred_fallthru
            _
          %3887 = vnop
        $region76: #{tpu_custom_call.1} parent=71 // pred_fallthru
          _
        // Predicated region
        $region111: #{tpu_custom_call.1} parent=71 // pred_check
          %p3888 = pneg %p348
        $region112: #{tpu_custom_call.1} parent=71 // pred_check_branch
          %3890 = sbr.rel (%p3888) target = $region114
        $region113: #{tpu_custom_call.1} parent=71 // pred_region
          %s3891 = smul.u32 8, %s26
        $region114: #{tpu_custom_call.1} parent=71 // pred_fallthru
          _
      $region72: #{tpu_custom_call.1} parent=5 // pred_fallthru
        _
      %p3892 = scmp.le.s32.totalorder 2, %s21
      // Predicated region
      $region115: #{tpu_custom_call.1} parent=5 // pred_check
        %p3893 = pneg %p3892
      $region116: #{tpu_custom_call.1} parent=5 // pred_check_branch
        %3895 = sbr.rel (%p3893) target = $region118
      $region117: #{tpu_custom_call.1} parent=5 // pred_region
        %s3896 = ssub.s32 %s21, 2
        // Predicated region
        $region119: #{tpu_custom_call.1} parent=117 // pred_check
          %p3897 = pneg %p328
        $region120: #{tpu_custom_call.1} parent=117 // pred_check_branch
          %3899 = sbr.rel (%p3897) target = $region122
        $region121: #{tpu_custom_call.1} parent=117 // pred_region
          %s3900 = sand.u32 %s313, 1
          %s3901 = sand.u32 %s313, 1
          %s3902 = smul.addr %s3901, 128
          %s3903 = scalar_lea.vmem [#allocation2], %s3902
        $region122: #{tpu_custom_call.1} parent=117 // pred_fallthru
          _
        // Predicated region
        $region123: #{tpu_custom_call.1} parent=117 // pred_check
          %p3904 = pneg %p354
        $region124: #{tpu_custom_call.1} parent=117 // pred_check_branch
          %3906 = sbr.rel (%p3904) target = $region126
        $region125: #{tpu_custom_call.1} parent=117 // pred_region
          %s3907 = smul.u32 8, %s27
          %p3908 = scmp.lt.s32.totalorder %s3907, 15
          %s3909 = scalar_select %p3908, %s3907, 15
          %s3910 = smul.addr %s3909, 8
          %s3911 = scalar_lea.vmem %s14, %s3910
        $region126: #{tpu_custom_call.1} parent=117 // pred_fallthru
          _
      $region118: #{tpu_custom_call.1} parent=5 // pred_fallthru
        _
    $region6: #{tpu_custom_call.1} parent=1 // loop_footer
      %s25 = sadd.s32 1, %s21
    $region7: #{tpu_custom_call.1} parent=1 // loop_footer_branch
      %20 = sbr.rel target = $region3
    $region8: #{tpu_custom_call.1} parent=1 // loop_exit
      _

</llo_original>
